<compile_context>
chip_gen: v5e
topology: v5e:2x2
jax: 0.10.0
libtpu: 0.0.40
codegen_flags: <defaults>
</compile_context>

<pallas_src>
import functools

import jax
import jax.numpy as jnp
from jax import lax
from jax.experimental import pallas as pl
from jax.experimental.pallas import tpu as pltpu


# ------------------------------ fused kernel --------------------------------

def _row_select(h_out, h_in, stride, ky):
    """(h_out, h_in) 0/1 matrix: sel[yo, yin] = 1 iff yin == stride*yo + ky - 1.

    Out-of-range targets never match -> zero rows == 'same' vertical padding.
    """
    r = lax.broadcasted_iota(jnp.int32, (h_out, h_in), 0)
    c = lax.broadcasted_iota(jnp.int32, (h_out, h_in), 1)
    return (c == stride * r + (ky - 1)).astype(jnp.float32)


def _conv_gn_relu(act, wb_ref, bgb_ref, stride):
    """One ConvGnReLU stage on a lane-dense (H_in, W_in*Cin) activation.

    wb_ref : (3, W_in*Cin, W_out*Cout) banded conv weights (one per kernel row)
    bgb_ref: (3, W_out*Cout) rows = [bias, gamma, beta], each tiled over W_out.
    """
    h_in = act.shape[0]
    h_out = (h_in - 1) // stride + 1
    l_out = wb_ref.shape[-1]

    acc = jnp.zeros((h_out, l_out), jnp.float32)
    for ky in range(3):                                   # 3 MXU dots, K=48..256
        sel = _row_select(h_out, h_in, stride, ky)
        rows = jnp.dot(sel, act, preferred_element_type=jnp.float32)
        acc = acc + jnp.dot(rows, wb_ref[ky],
                            preferred_element_type=jnp.float32)

    y = acc + bgb_ref[0:1, :]                             # conv bias
    mean = jnp.mean(y)                                    # GroupNorm(1,C): stats over C,H,W
    var = jnp.mean(jnp.square(y - mean))                  # biased variance
    y = (y - mean) * lax.rsqrt(var + 1e-5)
    y = y * bgb_ref[1:2, :] + bgb_ref[2:3, :]             # per-channel affine (tiled)
    return jnp.maximum(y, 0.0)                            # ReLU


def fused_forward_kernel(x_ref,
                         wb0, bgb0, wb1, bgb1, wb2, bgb2, wb3, bgb3, wb4, bgb4,
                         mh1, mc1, mh2, mc2,
                         o_ref):
    x = x_ref[0]                                          # (H, W*3)

    a = _conv_gn_relu(x, wb0, bgb0, stride=1)             # init_conv[0]
    a = _conv_gn_relu(a, wb1, bgb1, stride=1)             # init_conv[1]
    x0 = _conv_gn_relu(a, wb2, bgb2, stride=1)            # conv0  (H,   W  *4bf)
    x1 = _conv_gn_relu(x0, wb3, bgb3, stride=2)           # conv1  (H/2, W/2*4bf)
    x2 = _conv_gn_relu(x1, wb4, bgb4, stride=2)           # conv2  (H/4, W/4*4bf)

    # intraAA: x0 + bilinear_up(x1) + bilinear_up(x2)  (separable: rows, cols)
    up1 = jnp.dot(jnp.dot(mh1[...], x1, preferred_element_type=jnp.float32),
                  mc1[...], preferred_element_type=jnp.float32)
    up2 = jnp.dot(jnp.dot(mh2[...], x2, preferred_element_type=jnp.float32),
                  mc2[...], preferred_element_type=jnp.float32)
    o_ref[0] = x0 + up1 + up2


# --------------------------- host-side param prep ---------------------------

def _banded_conv_weights(w_oihw, w_in, stride):
    """Fold horizontal taps + zero padding + column stride into 3 banded mats.

    w_oihw: (Cout, Cin, 3, 3) PyTorch layout.  Returns (3, W_in*Cin, W_out*Cout)
    with  mat[ky, xin*Cin+ci, xo*Cout+co] = w[co, ci, ky, xin - stride*xo + 1]
    (zero outside the 3-tap band -> 'same' padding in x).
    """
    cout, cin = w_oihw.shape[0], w_oihw.shape[1]
    w_out = (w_in - 1) // stride + 1
    xin = jnp.arange(w_in)
    xo = jnp.arange(w_out)
    kx = xin[:, None] - stride * xo[None, :] + 1          # (w_in, w_out)
    valid = ((kx >= 0) & (kx <= 2)).astype(jnp.float32)
    kxc = jnp.clip(kx, 0, 2)
    mats = []
    for ky in range(3):
        wk = jnp.transpose(w_oihw[:, :, ky, :], (2, 1, 0))  # (kx, Cin, Cout)
        m = wk[kxc] * valid[:, :, None, None]               # (w_in, w_out, Cin, Cout)
        m = jnp.transpose(m, (0, 2, 1, 3)).reshape(w_in * cin, w_out * cout)
        mats.append(m)
    return jnp.stack(mats, axis=0)


def _tiled_affine(b, gamma, beta, w_out):
    """Rows [bias, gamma, beta] tiled to the flattened (W_out*Cout) lane layout."""
    return jnp.stack(
        [jnp.tile(b, w_out), jnp.tile(gamma, w_out), jnp.tile(beta, w_out)])


def _bilinear_matrix(out_size, in_size):
    """1-D bilinear interpolation matrix, PyTorch align_corners=False semantics."""
    scale = in_size / out_size
    dst = jnp.arange(out_size, dtype=jnp.float32)
    src = jnp.maximum((dst + 0.5) * scale - 0.5, 0.0)
    i0 = jnp.clip(jnp.floor(src).astype(jnp.int32), 0, in_size - 1)
    i1 = jnp.minimum(i0 + 1, in_size - 1)
    frac = src - i0.astype(jnp.float32)
    rows = jnp.arange(out_size)
    m = jnp.zeros((out_size, in_size), jnp.float32)
    m = m.at[rows, i0].add(1.0 - frac)
    m = m.at[rows, i1].add(frac)
    return m


def _const_index_map(rank):
    zeros = (0,) * rank
    return lambda n: zeros


# ------------------------------- forward pass --------------------------------

@functools.partial(jax.jit, static_argnums=(2,))
def custom_model_forward(x_nhwc, params, base_filter):
    """x_nhwc: (N, H, W, 3) -> (N, H, W, 4*base_filter)."""
    N, H, W, cin0 = x_nhwc.shape
    c4 = base_filter * 4
    H1, W1 = (H - 1) // 2 + 1, (W - 1) // 2 + 1
    H2, W2 = (H1 - 1) // 2 + 1, (W1 - 1) // 2 + 1

    widths = (W, W, W, W, W1)
    strides = (1, 1, 1, 2, 2)
    kernel_ops = [x_nhwc.reshape(N, H, W * cin0)]
    for (w, b, g, be), w_in, s in zip(params, widths, strides):
        w_out = (w_in - 1) // s + 1
        kernel_ops.append(_banded_conv_weights(w, w_in, s))
        kernel_ops.append(_tiled_affine(b, g, be, w_out))

    eye = jnp.eye(c4, dtype=jnp.float32)
    kernel_ops += [
        _bilinear_matrix(H, H1),                       # Mh1: (H, H1)
        jnp.kron(_bilinear_matrix(W, W1).T, eye),      # Mc1: (W1*C4, W*C4)
        _bilinear_matrix(H, H2),                       # Mh2: (H, H2)
        jnp.kron(_bilinear_matrix(W, W2).T, eye),      # Mc2: (W2*C4, W*C4)
    ]

    in_specs = [pl.BlockSpec((1, H, W * cin0), lambda n: (n, 0, 0))]
    for op in kernel_ops[1:]:
        in_specs.append(pl.BlockSpec(op.shape, _const_index_map(op.ndim)))

    out_flat = pl.pallas_call(
        fused_forward_kernel,
        out_shape=jax.ShapeDtypeStruct((N, H, W * c4), jnp.float32),
        grid=(N,),
        in_specs=in_specs,
        out_specs=pl.BlockSpec((1, H, W * c4), lambda n: (n, 0, 0)),
        compiler_params=pltpu.CompilerParams(
            dimension_semantics=("parallel",)),
    )(*kernel_ops)
    return out_flat.reshape(N, H, W, c4)


# ------------------------------ model params ---------------------------------

def init_conv_gn_params(key, cin, cout):
    kw, kb = jax.random.split(key)
    w = jax.random.normal(kw, (cout, cin, 3, 3), jnp.float32) / jnp.sqrt(9.0 * cin)
    b = 0.01 * jax.random.normal(kb, (cout,), jnp.float32)
    gamma = jnp.ones((cout,), jnp.float32)    # GroupNorm default affine
    beta = jnp.zeros((cout,), jnp.float32)
    return (w, b, gamma, beta)


if __name__ == "__main__":
    base_filter = 4
    N, H, W = 2, 16, 16

    key = jax.random.PRNGKey(0)
    kx, k0, k1, k2, k3, k4 = jax.random.split(key, 6)

    # input: PyTorch reference is (N, 3, H, W); we use NHWC (N, H, W, 3)
    x = jax.random.normal(kx, (N, H, W, 3), jnp.float32)

    params = (
        init_conv_gn_params(k0, 3, base_filter),                    # init_conv[0]
        init_conv_gn_params(k1, base_filter, base_filter * 2),      # init_conv[1]
        init_conv_gn_params(k2, base_filter * 2, base_filter * 4),  # conv0
        init_conv_gn_params(k3, base_filter * 4, base_filter * 4),  # conv1 (s=2)
        init_conv_gn_params(k4, base_filter * 4, base_filter * 4),  # conv2 (s=2)
    )

    out = custom_model_forward(x, params, base_filter)
    out = jax.block_until_ready(out)
    assert out.shape == (N, H, W, base_filter * 4), out.shape
    print("KERNEL_OK")
</pallas_src>

<mosaic_0001>
module attributes {stable_mosaic.version = 11 : i64} {
  func.func @fused_forward_kernel(%arg0: i32, %arg1: memref<1x16x48xf32, #tpu.memory_space<vmem>>, %arg2: memref<3x48x64xf32, #tpu.memory_space<vmem>>, %arg3: memref<3x64xf32, #tpu.memory_space<vmem>>, %arg4: memref<3x64x128xf32, #tpu.memory_space<vmem>>, %arg5: memref<3x128xf32, #tpu.memory_space<vmem>>, %arg6: memref<3x128x256xf32, #tpu.memory_space<vmem>>, %arg7: memref<3x256xf32, #tpu.memory_space<vmem>>, %arg8: memref<3x256x128xf32, #tpu.memory_space<vmem>>, %arg9: memref<3x128xf32, #tpu.memory_space<vmem>>, %arg10: memref<3x128x64xf32, #tpu.memory_space<vmem>>, %arg11: memref<3x64xf32, #tpu.memory_space<vmem>>, %arg12: memref<16x8xf32, #tpu.memory_space<vmem>>, %arg13: memref<128x256xf32, #tpu.memory_space<vmem>>, %arg14: memref<16x4xf32, #tpu.memory_space<vmem>>, %arg15: memref<64x256xf32, #tpu.memory_space<vmem>>, %arg16: memref<1x16x256xf32, #tpu.memory_space<vmem>>) attributes {dimension_semantics = [#tpu.dimension_semantics<parallel>], iteration_bounds = array<i64: 2>, scalar_prefetch = 0 : i64, scratch_operands = 0 : i64, tpu.core_type = #tpu.core_type<tc>, window_params = [{transform_indices = @transform_0, window_bounds = array<i64: 1, 16, 48>}, {pipeline_mode = #tpu.pipeline_mode<synchronous>, transform_indices = @transform_1, window_bounds = array<i64: 3, 48, 64>}, {pipeline_mode = #tpu.pipeline_mode<synchronous>, transform_indices = @transform_2, window_bounds = array<i64: 3, 64>}, {pipeline_mode = #tpu.pipeline_mode<synchronous>, transform_indices = @transform_3, window_bounds = array<i64: 3, 64, 128>}, {pipeline_mode = #tpu.pipeline_mode<synchronous>, transform_indices = @transform_4, window_bounds = array<i64: 3, 128>}, {pipeline_mode = #tpu.pipeline_mode<synchronous>, transform_indices = @transform_5, window_bounds = array<i64: 3, 128, 256>}, {pipeline_mode = #tpu.pipeline_mode<synchronous>, transform_indices = @transform_6, window_bounds = array<i64: 3, 256>}, {pipeline_mode = #tpu.pipeline_mode<synchronous>, transform_indices = @transform_7, window_bounds = array<i64: 3, 256, 128>}, {pipeline_mode = #tpu.pipeline_mode<synchronous>, transform_indices = @transform_8, window_bounds = array<i64: 3, 128>}, {pipeline_mode = #tpu.pipeline_mode<synchronous>, transform_indices = @transform_9, window_bounds = array<i64: 3, 128, 64>}, {pipeline_mode = #tpu.pipeline_mode<synchronous>, transform_indices = @transform_10, window_bounds = array<i64: 3, 64>}, {pipeline_mode = #tpu.pipeline_mode<synchronous>, transform_indices = @transform_11, window_bounds = array<i64: 16, 8>}, {pipeline_mode = #tpu.pipeline_mode<synchronous>, transform_indices = @transform_12, window_bounds = array<i64: 128, 256>}, {pipeline_mode = #tpu.pipeline_mode<synchronous>, transform_indices = @transform_13, window_bounds = array<i64: 16, 4>}, {pipeline_mode = #tpu.pipeline_mode<synchronous>, transform_indices = @transform_14, window_bounds = array<i64: 64, 256>}, {transform_indices = @transform_15, window_bounds = array<i64: 1, 16, 256>}]} {
    %c0 = arith.constant 0 : index
    %c0_0 = arith.constant 0 : index
    %c0_1 = arith.constant 0 : index
    %0 = vector.load %arg1[%c0, %c0_0, %c0_1] : memref<1x16x48xf32, #tpu.memory_space<vmem>>, vector<1x16x48xf32>
    %1 = vector.shape_cast %0 : vector<1x16x48xf32> to vector<16x48xf32>
    %cst = arith.constant 0.000000e+00 : f32
    %2 = vector.broadcast %cst : f32 to vector<16x64xf32>
    %3 = tpu.iota {dimensions = array<i32: 0>} : vector<16x16xi32>
    %4 = tpu.iota {dimensions = array<i32: 1>} : vector<16x16xi32>
    %c1_i32 = arith.constant 1 : i32
    %5 = vector.broadcast %c1_i32 : i32 to vector<16x16xi32>
    %6 = arith.muli %5, %3 : vector<16x16xi32>
    %c-1_i32 = arith.constant -1 : i32
    %7 = vector.broadcast %c-1_i32 : i32 to vector<16x16xi32>
    %8 = arith.addi %6, %7 : vector<16x16xi32>
    %9 = arith.cmpi eq, %4, %8 : vector<16x16xi32>
    %10 = arith.extui %9 : vector<16x16xi1> to vector<16x16xi32>
    %11 = arith.sitofp %10 : vector<16x16xi32> to vector<16x16xf32>
    %cst_2 = arith.constant dense<0.000000e+00> : vector<16x48xf32>
    %12 = tpu.matmul %11, %1, %cst_2 {dimension_numbers = #tpu.dot_dimension_numbers<[1], [0], [0], [1], [0, 0, 1, 1], [], []>} : vector<16x16xf32>, vector<16x48xf32>, vector<16x48xf32> -> vector<16x48xf32>
    %c0_3 = arith.constant 0 : index
    %c0_4 = arith.constant 0 : index
    %c0_5 = arith.constant 0 : index
    %13 = vector.load %arg2[%c0_3, %c0_4, %c0_5] : memref<3x48x64xf32, #tpu.memory_space<vmem>>, vector<1x48x64xf32>
    %14 = vector.shape_cast %13 : vector<1x48x64xf32> to vector<48x64xf32>
    %cst_6 = arith.constant dense<0.000000e+00> : vector<16x64xf32>
    %15 = tpu.matmul %12, %14, %cst_6 {dimension_numbers = #tpu.dot_dimension_numbers<[1], [0], [0], [1], [0, 0, 1, 1], [], []>} : vector<16x48xf32>, vector<48x64xf32>, vector<16x64xf32> -> vector<16x64xf32>
    %16 = arith.addf %2, %15 : vector<16x64xf32>
    %17 = tpu.iota {dimensions = array<i32: 0>} : vector<16x16xi32>
    %18 = tpu.iota {dimensions = array<i32: 1>} : vector<16x16xi32>
    %c1_i32_7 = arith.constant 1 : i32
    %19 = vector.broadcast %c1_i32_7 : i32 to vector<16x16xi32>
    %20 = arith.muli %19, %17 : vector<16x16xi32>
    %c0_i32 = arith.constant 0 : i32
    %21 = vector.broadcast %c0_i32 : i32 to vector<16x16xi32>
    %22 = arith.addi %20, %21 : vector<16x16xi32>
    %23 = arith.cmpi eq, %18, %22 : vector<16x16xi32>
    %24 = arith.extui %23 : vector<16x16xi1> to vector<16x16xi32>
    %25 = arith.sitofp %24 : vector<16x16xi32> to vector<16x16xf32>
    %cst_8 = arith.constant dense<0.000000e+00> : vector<16x48xf32>
    %26 = tpu.matmul %25, %1, %cst_8 {dimension_numbers = #tpu.dot_dimension_numbers<[1], [0], [0], [1], [0, 0, 1, 1], [], []>} : vector<16x16xf32>, vector<16x48xf32>, vector<16x48xf32> -> vector<16x48xf32>
    %c1 = arith.constant 1 : index
    %c0_9 = arith.constant 0 : index
    %c0_10 = arith.constant 0 : index
    %27 = vector.load %arg2[%c1, %c0_9, %c0_10] : memref<3x48x64xf32, #tpu.memory_space<vmem>>, vector<1x48x64xf32>
    %28 = vector.shape_cast %27 : vector<1x48x64xf32> to vector<48x64xf32>
    %cst_11 = arith.constant dense<0.000000e+00> : vector<16x64xf32>
    %29 = tpu.matmul %26, %28, %cst_11 {dimension_numbers = #tpu.dot_dimension_numbers<[1], [0], [0], [1], [0, 0, 1, 1], [], []>} : vector<16x48xf32>, vector<48x64xf32>, vector<16x64xf32> -> vector<16x64xf32>
    %30 = arith.addf %16, %29 : vector<16x64xf32>
    %31 = tpu.iota {dimensions = array<i32: 0>} : vector<16x16xi32>
    %32 = tpu.iota {dimensions = array<i32: 1>} : vector<16x16xi32>
    %c1_i32_12 = arith.constant 1 : i32
    %33 = vector.broadcast %c1_i32_12 : i32 to vector<16x16xi32>
    %34 = arith.muli %33, %31 : vector<16x16xi32>
    %c1_i32_13 = arith.constant 1 : i32
    %35 = vector.broadcast %c1_i32_13 : i32 to vector<16x16xi32>
    %36 = arith.addi %34, %35 : vector<16x16xi32>
    %37 = arith.cmpi eq, %32, %36 : vector<16x16xi32>
    %38 = arith.extui %37 : vector<16x16xi1> to vector<16x16xi32>
    %39 = arith.sitofp %38 : vector<16x16xi32> to vector<16x16xf32>
    %cst_14 = arith.constant dense<0.000000e+00> : vector<16x48xf32>
    %40 = tpu.matmul %39, %1, %cst_14 {dimension_numbers = #tpu.dot_dimension_numbers<[1], [0], [0], [1], [0, 0, 1, 1], [], []>} : vector<16x16xf32>, vector<16x48xf32>, vector<16x48xf32> -> vector<16x48xf32>
    %c2 = arith.constant 2 : index
    %c0_15 = arith.constant 0 : index
    %c0_16 = arith.constant 0 : index
    %41 = vector.load %arg2[%c2, %c0_15, %c0_16] : memref<3x48x64xf32, #tpu.memory_space<vmem>>, vector<1x48x64xf32>
    %42 = vector.shape_cast %41 : vector<1x48x64xf32> to vector<48x64xf32>
    %cst_17 = arith.constant dense<0.000000e+00> : vector<16x64xf32>
    %43 = tpu.matmul %40, %42, %cst_17 {dimension_numbers = #tpu.dot_dimension_numbers<[1], [0], [0], [1], [0, 0, 1, 1], [], []>} : vector<16x48xf32>, vector<48x64xf32>, vector<16x64xf32> -> vector<16x64xf32>
    %44 = arith.addf %30, %43 : vector<16x64xf32>
    %c0_18 = arith.constant 0 : index
    %c0_19 = arith.constant 0 : index
    %45 = vector.load %arg3[%c0_18, %c0_19] : memref<3x64xf32, #tpu.memory_space<vmem>>, vector<1x64xf32>
    %46 = vector.broadcast %45 : vector<1x64xf32> to vector<16x64xf32>
    %47 = arith.addf %44, %46 : vector<16x64xf32>
    %48 = vector.shape_cast %47 : vector<16x64xf32> to vector<1x16x64xf32>
    %cst_20 = arith.constant dense<0.000000e+00> : vector<1xf32>
    %49 = vector.multi_reduction <add>, %48, %cst_20 [1, 2] : vector<1x16x64xf32> to vector<1xf32>
    %50 = vector.shape_cast %49 : vector<1xf32> to vector<1x1x1xf32>
    %51 = vector.extract %50[0, 0, 0] : f32 from vector<1x1x1xf32>
    %cst_21 = arith.constant 1.024000e+03 : f32
    %52 = arith.divf %51, %cst_21 : f32
    %53 = vector.broadcast %52 : f32 to vector<16x64xf32>
    %54 = arith.subf %47, %53 : vector<16x64xf32>
    %55 = arith.mulf %54, %54 : vector<16x64xf32>
    %56 = vector.shape_cast %55 : vector<16x64xf32> to vector<1x16x64xf32>
    %cst_22 = arith.constant dense<0.000000e+00> : vector<1xf32>
    %57 = vector.multi_reduction <add>, %56, %cst_22 [1, 2] : vector<1x16x64xf32> to vector<1xf32>
    %58 = vector.shape_cast %57 : vector<1xf32> to vector<1x1x1xf32>
    %59 = vector.extract %58[0, 0, 0] : f32 from vector<1x1x1xf32>
    %cst_23 = arith.constant 1.024000e+03 : f32
    %60 = arith.divf %59, %cst_23 : f32
    %61 = vector.broadcast %52 : f32 to vector<16x64xf32>
    %62 = arith.subf %47, %61 : vector<16x64xf32>
    %cst_24 = arith.constant 9.99999974E-6 : f32
    %63 = arith.addf %60, %cst_24 : f32
    %64 = math.rsqrt %63 : f32
    %65 = vector.broadcast %64 : f32 to vector<16x64xf32>
    %66 = arith.mulf %62, %65 : vector<16x64xf32>
    %c1_25 = arith.constant 1 : index
    %c0_26 = arith.constant 0 : index
    %67 = vector.load %arg3[%c1_25, %c0_26] : memref<3x64xf32, #tpu.memory_space<vmem>>, vector<1x64xf32>
    %68 = vector.broadcast %67 : vector<1x64xf32> to vector<16x64xf32>
    %69 = arith.mulf %66, %68 : vector<16x64xf32>
    %c2_27 = arith.constant 2 : index
    %c0_28 = arith.constant 0 : index
    %70 = vector.load %arg3[%c2_27, %c0_28] : memref<3x64xf32, #tpu.memory_space<vmem>>, vector<1x64xf32>
    %71 = vector.broadcast %70 : vector<1x64xf32> to vector<16x64xf32>
    %72 = arith.addf %69, %71 : vector<16x64xf32>
    %cst_29 = arith.constant 0.000000e+00 : f32
    %73 = vector.broadcast %cst_29 : f32 to vector<16x64xf32>
    %74 = arith.maximumf %72, %73 : vector<16x64xf32>
    %cst_30 = arith.constant 0.000000e+00 : f32
    %75 = vector.broadcast %cst_30 : f32 to vector<16x128xf32>
    %76 = tpu.iota {dimensions = array<i32: 0>} : vector<16x16xi32>
    %77 = tpu.iota {dimensions = array<i32: 1>} : vector<16x16xi32>
    %c1_i32_31 = arith.constant 1 : i32
    %78 = vector.broadcast %c1_i32_31 : i32 to vector<16x16xi32>
    %79 = arith.muli %78, %76 : vector<16x16xi32>
    %c-1_i32_32 = arith.constant -1 : i32
    %80 = vector.broadcast %c-1_i32_32 : i32 to vector<16x16xi32>
    %81 = arith.addi %79, %80 : vector<16x16xi32>
    %82 = arith.cmpi eq, %77, %81 : vector<16x16xi32>
    %83 = arith.extui %82 : vector<16x16xi1> to vector<16x16xi32>
    %84 = arith.sitofp %83 : vector<16x16xi32> to vector<16x16xf32>
    %cst_33 = arith.constant dense<0.000000e+00> : vector<16x64xf32>
    %85 = tpu.matmul %84, %74, %cst_33 {dimension_numbers = #tpu.dot_dimension_numbers<[1], [0], [0], [1], [0, 0, 1, 1], [], []>} : vector<16x16xf32>, vector<16x64xf32>, vector<16x64xf32> -> vector<16x64xf32>
    %c0_34 = arith.constant 0 : index
    %c0_35 = arith.constant 0 : index
    %c0_36 = arith.constant 0 : index
    %86 = vector.load %arg4[%c0_34, %c0_35, %c0_36] : memref<3x64x128xf32, #tpu.memory_space<vmem>>, vector<1x64x128xf32>
    %87 = vector.shape_cast %86 : vector<1x64x128xf32> to vector<64x128xf32>
    %cst_37 = arith.constant dense<0.000000e+00> : vector<16x128xf32>
    %88 = tpu.matmul %85, %87, %cst_37 {dimension_numbers = #tpu.dot_dimension_numbers<[1], [0], [0], [1], [0, 0, 1, 1], [], []>} : vector<16x64xf32>, vector<64x128xf32>, vector<16x128xf32> -> vector<16x128xf32>
    %89 = arith.addf %75, %88 : vector<16x128xf32>
    %90 = tpu.iota {dimensions = array<i32: 0>} : vector<16x16xi32>
    %91 = tpu.iota {dimensions = array<i32: 1>} : vector<16x16xi32>
    %c1_i32_38 = arith.constant 1 : i32
    %92 = vector.broadcast %c1_i32_38 : i32 to vector<16x16xi32>
    %93 = arith.muli %92, %90 : vector<16x16xi32>
    %c0_i32_39 = arith.constant 0 : i32
    %94 = vector.broadcast %c0_i32_39 : i32 to vector<16x16xi32>
    %95 = arith.addi %93, %94 : vector<16x16xi32>
    %96 = arith.cmpi eq, %91, %95 : vector<16x16xi32>
    %97 = arith.extui %96 : vector<16x16xi1> to vector<16x16xi32>
    %98 = arith.sitofp %97 : vector<16x16xi32> to vector<16x16xf32>
    %cst_40 = arith.constant dense<0.000000e+00> : vector<16x64xf32>
    %99 = tpu.matmul %98, %74, %cst_40 {dimension_numbers = #tpu.dot_dimension_numbers<[1], [0], [0], [1], [0, 0, 1, 1], [], []>} : vector<16x16xf32>, vector<16x64xf32>, vector<16x64xf32> -> vector<16x64xf32>
    %c1_41 = arith.constant 1 : index
    %c0_42 = arith.constant 0 : index
    %c0_43 = arith.constant 0 : index
    %100 = vector.load %arg4[%c1_41, %c0_42, %c0_43] : memref<3x64x128xf32, #tpu.memory_space<vmem>>, vector<1x64x128xf32>
    %101 = vector.shape_cast %100 : vector<1x64x128xf32> to vector<64x128xf32>
    %cst_44 = arith.constant dense<0.000000e+00> : vector<16x128xf32>
    %102 = tpu.matmul %99, %101, %cst_44 {dimension_numbers = #tpu.dot_dimension_numbers<[1], [0], [0], [1], [0, 0, 1, 1], [], []>} : vector<16x64xf32>, vector<64x128xf32>, vector<16x128xf32> -> vector<16x128xf32>
    %103 = arith.addf %89, %102 : vector<16x128xf32>
    %104 = tpu.iota {dimensions = array<i32: 0>} : vector<16x16xi32>
    %105 = tpu.iota {dimensions = array<i32: 1>} : vector<16x16xi32>
    %c1_i32_45 = arith.constant 1 : i32
    %106 = vector.broadcast %c1_i32_45 : i32 to vector<16x16xi32>
    %107 = arith.muli %106, %104 : vector<16x16xi32>
    %c1_i32_46 = arith.constant 1 : i32
    %108 = vector.broadcast %c1_i32_46 : i32 to vector<16x16xi32>
    %109 = arith.addi %107, %108 : vector<16x16xi32>
    %110 = arith.cmpi eq, %105, %109 : vector<16x16xi32>
    %111 = arith.extui %110 : vector<16x16xi1> to vector<16x16xi32>
    %112 = arith.sitofp %111 : vector<16x16xi32> to vector<16x16xf32>
    %cst_47 = arith.constant dense<0.000000e+00> : vector<16x64xf32>
    %113 = tpu.matmul %112, %74, %cst_47 {dimension_numbers = #tpu.dot_dimension_numbers<[1], [0], [0], [1], [0, 0, 1, 1], [], []>} : vector<16x16xf32>, vector<16x64xf32>, vector<16x64xf32> -> vector<16x64xf32>
    %c2_48 = arith.constant 2 : index
    %c0_49 = arith.constant 0 : index
    %c0_50 = arith.constant 0 : index
    %114 = vector.load %arg4[%c2_48, %c0_49, %c0_50] : memref<3x64x128xf32, #tpu.memory_space<vmem>>, vector<1x64x128xf32>
    %115 = vector.shape_cast %114 : vector<1x64x128xf32> to vector<64x128xf32>
    %cst_51 = arith.constant dense<0.000000e+00> : vector<16x128xf32>
    %116 = tpu.matmul %113, %115, %cst_51 {dimension_numbers = #tpu.dot_dimension_numbers<[1], [0], [0], [1], [0, 0, 1, 1], [], []>} : vector<16x64xf32>, vector<64x128xf32>, vector<16x128xf32> -> vector<16x128xf32>
    %117 = arith.addf %103, %116 : vector<16x128xf32>
    %c0_52 = arith.constant 0 : index
    %c0_53 = arith.constant 0 : index
    %118 = vector.load %arg5[%c0_52, %c0_53] : memref<3x128xf32, #tpu.memory_space<vmem>>, vector<1x128xf32>
    %119 = vector.broadcast %118 : vector<1x128xf32> to vector<16x128xf32>
    %120 = arith.addf %117, %119 : vector<16x128xf32>
    %121 = vector.shape_cast %120 : vector<16x128xf32> to vector<1x16x128xf32>
    %cst_54 = arith.constant dense<0.000000e+00> : vector<1xf32>
    %122 = vector.multi_reduction <add>, %121, %cst_54 [1, 2] : vector<1x16x128xf32> to vector<1xf32>
    %123 = vector.shape_cast %122 : vector<1xf32> to vector<1x1x1xf32>
    %124 = vector.extract %123[0, 0, 0] : f32 from vector<1x1x1xf32>
    %cst_55 = arith.constant 2.048000e+03 : f32
    %125 = arith.divf %124, %cst_55 : f32
    %126 = vector.broadcast %125 : f32 to vector<16x128xf32>
    %127 = arith.subf %120, %126 : vector<16x128xf32>
    %128 = arith.mulf %127, %127 : vector<16x128xf32>
    %129 = vector.shape_cast %128 : vector<16x128xf32> to vector<1x16x128xf32>
    %cst_56 = arith.constant dense<0.000000e+00> : vector<1xf32>
    %130 = vector.multi_reduction <add>, %129, %cst_56 [1, 2] : vector<1x16x128xf32> to vector<1xf32>
    %131 = vector.shape_cast %130 : vector<1xf32> to vector<1x1x1xf32>
    %132 = vector.extract %131[0, 0, 0] : f32 from vector<1x1x1xf32>
    %cst_57 = arith.constant 2.048000e+03 : f32
    %133 = arith.divf %132, %cst_57 : f32
    %134 = vector.broadcast %125 : f32 to vector<16x128xf32>
    %135 = arith.subf %120, %134 : vector<16x128xf32>
    %cst_58 = arith.constant 9.99999974E-6 : f32
    %136 = arith.addf %133, %cst_58 : f32
    %137 = math.rsqrt %136 : f32
    %138 = vector.broadcast %137 : f32 to vector<16x128xf32>
    %139 = arith.mulf %135, %138 : vector<16x128xf32>
    %c1_59 = arith.constant 1 : index
    %c0_60 = arith.constant 0 : index
    %140 = vector.load %arg5[%c1_59, %c0_60] : memref<3x128xf32, #tpu.memory_space<vmem>>, vector<1x128xf32>
    %141 = vector.broadcast %140 : vector<1x128xf32> to vector<16x128xf32>
    %142 = arith.mulf %139, %141 : vector<16x128xf32>
    %c2_61 = arith.constant 2 : index
    %c0_62 = arith.constant 0 : index
    %143 = vector.load %arg5[%c2_61, %c0_62] : memref<3x128xf32, #tpu.memory_space<vmem>>, vector<1x128xf32>
    %144 = vector.broadcast %143 : vector<1x128xf32> to vector<16x128xf32>
    %145 = arith.addf %142, %144 : vector<16x128xf32>
    %cst_63 = arith.constant 0.000000e+00 : f32
    %146 = vector.broadcast %cst_63 : f32 to vector<16x128xf32>
    %147 = arith.maximumf %145, %146 : vector<16x128xf32>
    %cst_64 = arith.constant 0.000000e+00 : f32
    %148 = vector.broadcast %cst_64 : f32 to vector<16x256xf32>
    %149 = tpu.iota {dimensions = array<i32: 0>} : vector<16x16xi32>
    %150 = tpu.iota {dimensions = array<i32: 1>} : vector<16x16xi32>
    %c1_i32_65 = arith.constant 1 : i32
    %151 = vector.broadcast %c1_i32_65 : i32 to vector<16x16xi32>
    %152 = arith.muli %151, %149 : vector<16x16xi32>
    %c-1_i32_66 = arith.constant -1 : i32
    %153 = vector.broadcast %c-1_i32_66 : i32 to vector<16x16xi32>
    %154 = arith.addi %152, %153 : vector<16x16xi32>
    %155 = arith.cmpi eq, %150, %154 : vector<16x16xi32>
    %156 = arith.extui %155 : vector<16x16xi1> to vector<16x16xi32>
    %157 = arith.sitofp %156 : vector<16x16xi32> to vector<16x16xf32>
    %cst_67 = arith.constant dense<0.000000e+00> : vector<16x128xf32>
    %158 = tpu.matmul %157, %147, %cst_67 {dimension_numbers = #tpu.dot_dimension_numbers<[1], [0], [0], [1], [0, 0, 1, 1], [], []>} : vector<16x16xf32>, vector<16x128xf32>, vector<16x128xf32> -> vector<16x128xf32>
    %c0_68 = arith.constant 0 : index
    %c0_69 = arith.constant 0 : index
    %c0_70 = arith.constant 0 : index
    %159 = vector.load %arg6[%c0_68, %c0_69, %c0_70] : memref<3x128x256xf32, #tpu.memory_space<vmem>>, vector<1x128x256xf32>
    %160 = vector.shape_cast %159 : vector<1x128x256xf32> to vector<128x256xf32>
    %cst_71 = arith.constant dense<0.000000e+00> : vector<16x256xf32>
    %161 = tpu.matmul %158, %160, %cst_71 {dimension_numbers = #tpu.dot_dimension_numbers<[1], [0], [0], [1], [0, 0, 1, 1], [], []>} : vector<16x128xf32>, vector<128x256xf32>, vector<16x256xf32> -> vector<16x256xf32>
    %162 = arith.addf %148, %161 : vector<16x256xf32>
    %163 = tpu.iota {dimensions = array<i32: 0>} : vector<16x16xi32>
    %164 = tpu.iota {dimensions = array<i32: 1>} : vector<16x16xi32>
    %c1_i32_72 = arith.constant 1 : i32
    %165 = vector.broadcast %c1_i32_72 : i32 to vector<16x16xi32>
    %166 = arith.muli %165, %163 : vector<16x16xi32>
    %c0_i32_73 = arith.constant 0 : i32
    %167 = vector.broadcast %c0_i32_73 : i32 to vector<16x16xi32>
    %168 = arith.addi %166, %167 : vector<16x16xi32>
    %169 = arith.cmpi eq, %164, %168 : vector<16x16xi32>
    %170 = arith.extui %169 : vector<16x16xi1> to vector<16x16xi32>
    %171 = arith.sitofp %170 : vector<16x16xi32> to vector<16x16xf32>
    %cst_74 = arith.constant dense<0.000000e+00> : vector<16x128xf32>
    %172 = tpu.matmul %171, %147, %cst_74 {dimension_numbers = #tpu.dot_dimension_numbers<[1], [0], [0], [1], [0, 0, 1, 1], [], []>} : vector<16x16xf32>, vector<16x128xf32>, vector<16x128xf32> -> vector<16x128xf32>
    %c1_75 = arith.constant 1 : index
    %c0_76 = arith.constant 0 : index
    %c0_77 = arith.constant 0 : index
    %173 = vector.load %arg6[%c1_75, %c0_76, %c0_77] : memref<3x128x256xf32, #tpu.memory_space<vmem>>, vector<1x128x256xf32>
    %174 = vector.shape_cast %173 : vector<1x128x256xf32> to vector<128x256xf32>
    %cst_78 = arith.constant dense<0.000000e+00> : vector<16x256xf32>
    %175 = tpu.matmul %172, %174, %cst_78 {dimension_numbers = #tpu.dot_dimension_numbers<[1], [0], [0], [1], [0, 0, 1, 1], [], []>} : vector<16x128xf32>, vector<128x256xf32>, vector<16x256xf32> -> vector<16x256xf32>
    %176 = arith.addf %162, %175 : vector<16x256xf32>
    %177 = tpu.iota {dimensions = array<i32: 0>} : vector<16x16xi32>
    %178 = tpu.iota {dimensions = array<i32: 1>} : vector<16x16xi32>
    %c1_i32_79 = arith.constant 1 : i32
    %179 = vector.broadcast %c1_i32_79 : i32 to vector<16x16xi32>
    %180 = arith.muli %179, %177 : vector<16x16xi32>
    %c1_i32_80 = arith.constant 1 : i32
    %181 = vector.broadcast %c1_i32_80 : i32 to vector<16x16xi32>
    %182 = arith.addi %180, %181 : vector<16x16xi32>
    %183 = arith.cmpi eq, %178, %182 : vector<16x16xi32>
    %184 = arith.extui %183 : vector<16x16xi1> to vector<16x16xi32>
    %185 = arith.sitofp %184 : vector<16x16xi32> to vector<16x16xf32>
    %cst_81 = arith.constant dense<0.000000e+00> : vector<16x128xf32>
    %186 = tpu.matmul %185, %147, %cst_81 {dimension_numbers = #tpu.dot_dimension_numbers<[1], [0], [0], [1], [0, 0, 1, 1], [], []>} : vector<16x16xf32>, vector<16x128xf32>, vector<16x128xf32> -> vector<16x128xf32>
    %c2_82 = arith.constant 2 : index
    %c0_83 = arith.constant 0 : index
    %c0_84 = arith.constant 0 : index
    %187 = vector.load %arg6[%c2_82, %c0_83, %c0_84] : memref<3x128x256xf32, #tpu.memory_space<vmem>>, vector<1x128x256xf32>
    %188 = vector.shape_cast %187 : vector<1x128x256xf32> to vector<128x256xf32>
    %cst_85 = arith.constant dense<0.000000e+00> : vector<16x256xf32>
    %189 = tpu.matmul %186, %188, %cst_85 {dimension_numbers = #tpu.dot_dimension_numbers<[1], [0], [0], [1], [0, 0, 1, 1], [], []>} : vector<16x128xf32>, vector<128x256xf32>, vector<16x256xf32> -> vector<16x256xf32>
    %190 = arith.addf %176, %189 : vector<16x256xf32>
    %c0_86 = arith.constant 0 : index
    %c0_87 = arith.constant 0 : index
    %191 = vector.load %arg7[%c0_86, %c0_87] : memref<3x256xf32, #tpu.memory_space<vmem>>, vector<1x256xf32>
    %192 = vector.broadcast %191 : vector<1x256xf32> to vector<16x256xf32>
    %193 = arith.addf %190, %192 : vector<16x256xf32>
    %194 = vector.shape_cast %193 : vector<16x256xf32> to vector<1x16x256xf32>
    %cst_88 = arith.constant dense<0.000000e+00> : vector<1xf32>
    %195 = vector.multi_reduction <add>, %194, %cst_88 [1, 2] : vector<1x16x256xf32> to vector<1xf32>
    %196 = vector.shape_cast %195 : vector<1xf32> to vector<1x1x1xf32>
    %197 = vector.extract %196[0, 0, 0] : f32 from vector<1x1x1xf32>
    %cst_89 = arith.constant 4.096000e+03 : f32
    %198 = arith.divf %197, %cst_89 : f32
    %199 = vector.broadcast %198 : f32 to vector<16x256xf32>
    %200 = arith.subf %193, %199 : vector<16x256xf32>
    %201 = arith.mulf %200, %200 : vector<16x256xf32>
    %202 = vector.shape_cast %201 : vector<16x256xf32> to vector<1x16x256xf32>
    %cst_90 = arith.constant dense<0.000000e+00> : vector<1xf32>
    %203 = vector.multi_reduction <add>, %202, %cst_90 [1, 2] : vector<1x16x256xf32> to vector<1xf32>
    %204 = vector.shape_cast %203 : vector<1xf32> to vector<1x1x1xf32>
    %205 = vector.extract %204[0, 0, 0] : f32 from vector<1x1x1xf32>
    %cst_91 = arith.constant 4.096000e+03 : f32
    %206 = arith.divf %205, %cst_91 : f32
    %207 = vector.broadcast %198 : f32 to vector<16x256xf32>
    %208 = arith.subf %193, %207 : vector<16x256xf32>
    %cst_92 = arith.constant 9.99999974E-6 : f32
    %209 = arith.addf %206, %cst_92 : f32
    %210 = math.rsqrt %209 : f32
    %211 = vector.broadcast %210 : f32 to vector<16x256xf32>
    %212 = arith.mulf %208, %211 : vector<16x256xf32>
    %c1_93 = arith.constant 1 : index
    %c0_94 = arith.constant 0 : index
    %213 = vector.load %arg7[%c1_93, %c0_94] : memref<3x256xf32, #tpu.memory_space<vmem>>, vector<1x256xf32>
    %214 = vector.broadcast %213 : vector<1x256xf32> to vector<16x256xf32>
    %215 = arith.mulf %212, %214 : vector<16x256xf32>
    %c2_95 = arith.constant 2 : index
    %c0_96 = arith.constant 0 : index
    %216 = vector.load %arg7[%c2_95, %c0_96] : memref<3x256xf32, #tpu.memory_space<vmem>>, vector<1x256xf32>
    %217 = vector.broadcast %216 : vector<1x256xf32> to vector<16x256xf32>
    %218 = arith.addf %215, %217 : vector<16x256xf32>
    %cst_97 = arith.constant 0.000000e+00 : f32
    %219 = vector.broadcast %cst_97 : f32 to vector<16x256xf32>
    %220 = arith.maximumf %218, %219 : vector<16x256xf32>
    %cst_98 = arith.constant 0.000000e+00 : f32
    %221 = vector.broadcast %cst_98 : f32 to vector<8x128xf32>
    %222 = tpu.iota {dimensions = array<i32: 0>} : vector<8x16xi32>
    %223 = tpu.iota {dimensions = array<i32: 1>} : vector<8x16xi32>
    %c2_i32 = arith.constant 2 : i32
    %224 = vector.broadcast %c2_i32 : i32 to vector<8x16xi32>
    %225 = arith.muli %224, %222 : vector<8x16xi32>
    %c-1_i32_99 = arith.constant -1 : i32
    %226 = vector.broadcast %c-1_i32_99 : i32 to vector<8x16xi32>
    %227 = arith.addi %225, %226 : vector<8x16xi32>
    %228 = arith.cmpi eq, %223, %227 : vector<8x16xi32>
    %229 = arith.extui %228 : vector<8x16xi1> to vector<8x16xi32>
    %230 = arith.sitofp %229 : vector<8x16xi32> to vector<8x16xf32>
    %cst_100 = arith.constant dense<0.000000e+00> : vector<8x256xf32>
    %231 = tpu.matmul %230, %220, %cst_100 {dimension_numbers = #tpu.dot_dimension_numbers<[1], [0], [0], [1], [0, 0, 1, 1], [], []>} : vector<8x16xf32>, vector<16x256xf32>, vector<8x256xf32> -> vector<8x256xf32>
    %c0_101 = arith.constant 0 : index
    %c0_102 = arith.constant 0 : index
    %c0_103 = arith.constant 0 : index
    %232 = vector.load %arg8[%c0_101, %c0_102, %c0_103] : memref<3x256x128xf32, #tpu.memory_space<vmem>>, vector<1x256x128xf32>
    %233 = vector.shape_cast %232 : vector<1x256x128xf32> to vector<256x128xf32>
    %cst_104 = arith.constant dense<0.000000e+00> : vector<8x128xf32>
    %234 = tpu.matmul %231, %233, %cst_104 {dimension_numbers = #tpu.dot_dimension_numbers<[1], [0], [0], [1], [0, 0, 1, 1], [], []>} : vector<8x256xf32>, vector<256x128xf32>, vector<8x128xf32> -> vector<8x128xf32>
    %235 = arith.addf %221, %234 : vector<8x128xf32>
    %236 = tpu.iota {dimensions = array<i32: 0>} : vector<8x16xi32>
    %237 = tpu.iota {dimensions = array<i32: 1>} : vector<8x16xi32>
    %c2_i32_105 = arith.constant 2 : i32
    %238 = vector.broadcast %c2_i32_105 : i32 to vector<8x16xi32>
    %239 = arith.muli %238, %236 : vector<8x16xi32>
    %c0_i32_106 = arith.constant 0 : i32
    %240 = vector.broadcast %c0_i32_106 : i32 to vector<8x16xi32>
    %241 = arith.addi %239, %240 : vector<8x16xi32>
    %242 = arith.cmpi eq, %237, %241 : vector<8x16xi32>
    %243 = arith.extui %242 : vector<8x16xi1> to vector<8x16xi32>
    %244 = arith.sitofp %243 : vector<8x16xi32> to vector<8x16xf32>
    %cst_107 = arith.constant dense<0.000000e+00> : vector<8x256xf32>
    %245 = tpu.matmul %244, %220, %cst_107 {dimension_numbers = #tpu.dot_dimension_numbers<[1], [0], [0], [1], [0, 0, 1, 1], [], []>} : vector<8x16xf32>, vector<16x256xf32>, vector<8x256xf32> -> vector<8x256xf32>
    %c1_108 = arith.constant 1 : index
    %c0_109 = arith.constant 0 : index
    %c0_110 = arith.constant 0 : index
    %246 = vector.load %arg8[%c1_108, %c0_109, %c0_110] : memref<3x256x128xf32, #tpu.memory_space<vmem>>, vector<1x256x128xf32>
    %247 = vector.shape_cast %246 : vector<1x256x128xf32> to vector<256x128xf32>
    %cst_111 = arith.constant dense<0.000000e+00> : vector<8x128xf32>
    %248 = tpu.matmul %245, %247, %cst_111 {dimension_numbers = #tpu.dot_dimension_numbers<[1], [0], [0], [1], [0, 0, 1, 1], [], []>} : vector<8x256xf32>, vector<256x128xf32>, vector<8x128xf32> -> vector<8x128xf32>
    %249 = arith.addf %235, %248 : vector<8x128xf32>
    %250 = tpu.iota {dimensions = array<i32: 0>} : vector<8x16xi32>
    %251 = tpu.iota {dimensions = array<i32: 1>} : vector<8x16xi32>
    %c2_i32_112 = arith.constant 2 : i32
    %252 = vector.broadcast %c2_i32_112 : i32 to vector<8x16xi32>
    %253 = arith.muli %252, %250 : vector<8x16xi32>
    %c1_i32_113 = arith.constant 1 : i32
    %254 = vector.broadcast %c1_i32_113 : i32 to vector<8x16xi32>
    %255 = arith.addi %253, %254 : vector<8x16xi32>
    %256 = arith.cmpi eq, %251, %255 : vector<8x16xi32>
    %257 = arith.extui %256 : vector<8x16xi1> to vector<8x16xi32>
    %258 = arith.sitofp %257 : vector<8x16xi32> to vector<8x16xf32>
    %cst_114 = arith.constant dense<0.000000e+00> : vector<8x256xf32>
    %259 = tpu.matmul %258, %220, %cst_114 {dimension_numbers = #tpu.dot_dimension_numbers<[1], [0], [0], [1], [0, 0, 1, 1], [], []>} : vector<8x16xf32>, vector<16x256xf32>, vector<8x256xf32> -> vector<8x256xf32>
    %c2_115 = arith.constant 2 : index
    %c0_116 = arith.constant 0 : index
    %c0_117 = arith.constant 0 : index
    %260 = vector.load %arg8[%c2_115, %c0_116, %c0_117] : memref<3x256x128xf32, #tpu.memory_space<vmem>>, vector<1x256x128xf32>
    %261 = vector.shape_cast %260 : vector<1x256x128xf32> to vector<256x128xf32>
    %cst_118 = arith.constant dense<0.000000e+00> : vector<8x128xf32>
    %262 = tpu.matmul %259, %261, %cst_118 {dimension_numbers = #tpu.dot_dimension_numbers<[1], [0], [0], [1], [0, 0, 1, 1], [], []>} : vector<8x256xf32>, vector<256x128xf32>, vector<8x128xf32> -> vector<8x128xf32>
    %263 = arith.addf %249, %262 : vector<8x128xf32>
    %c0_119 = arith.constant 0 : index
    %c0_120 = arith.constant 0 : index
    %264 = vector.load %arg9[%c0_119, %c0_120] : memref<3x128xf32, #tpu.memory_space<vmem>>, vector<1x128xf32>
    %265 = vector.broadcast %264 : vector<1x128xf32> to vector<8x128xf32>
    %266 = arith.addf %263, %265 : vector<8x128xf32>
    %267 = vector.shape_cast %266 : vector<8x128xf32> to vector<1x8x128xf32>
    %cst_121 = arith.constant dense<0.000000e+00> : vector<1xf32>
    %268 = vector.multi_reduction <add>, %267, %cst_121 [1, 2] : vector<1x8x128xf32> to vector<1xf32>
    %269 = vector.shape_cast %268 : vector<1xf32> to vector<1x1x1xf32>
    %270 = vector.extract %269[0, 0, 0] : f32 from vector<1x1x1xf32>
    %cst_122 = arith.constant 1.024000e+03 : f32
    %271 = arith.divf %270, %cst_122 : f32
    %272 = vector.broadcast %271 : f32 to vector<8x128xf32>
    %273 = arith.subf %266, %272 : vector<8x128xf32>
    %274 = arith.mulf %273, %273 : vector<8x128xf32>
    %275 = vector.shape_cast %274 : vector<8x128xf32> to vector<1x8x128xf32>
    %cst_123 = arith.constant dense<0.000000e+00> : vector<1xf32>
    %276 = vector.multi_reduction <add>, %275, %cst_123 [1, 2] : vector<1x8x128xf32> to vector<1xf32>
    %277 = vector.shape_cast %276 : vector<1xf32> to vector<1x1x1xf32>
    %278 = vector.extract %277[0, 0, 0] : f32 from vector<1x1x1xf32>
    %cst_124 = arith.constant 1.024000e+03 : f32
    %279 = arith.divf %278, %cst_124 : f32
    %280 = vector.broadcast %271 : f32 to vector<8x128xf32>
    %281 = arith.subf %266, %280 : vector<8x128xf32>
    %cst_125 = arith.constant 9.99999974E-6 : f32
    %282 = arith.addf %279, %cst_125 : f32
    %283 = math.rsqrt %282 : f32
    %284 = vector.broadcast %283 : f32 to vector<8x128xf32>
    %285 = arith.mulf %281, %284 : vector<8x128xf32>
    %c1_126 = arith.constant 1 : index
    %c0_127 = arith.constant 0 : index
    %286 = vector.load %arg9[%c1_126, %c0_127] : memref<3x128xf32, #tpu.memory_space<vmem>>, vector<1x128xf32>
    %287 = vector.broadcast %286 : vector<1x128xf32> to vector<8x128xf32>
    %288 = arith.mulf %285, %287 : vector<8x128xf32>
    %c2_128 = arith.constant 2 : index
    %c0_129 = arith.constant 0 : index
    %289 = vector.load %arg9[%c2_128, %c0_129] : memref<3x128xf32, #tpu.memory_space<vmem>>, vector<1x128xf32>
    %290 = vector.broadcast %289 : vector<1x128xf32> to vector<8x128xf32>
    %291 = arith.addf %288, %290 : vector<8x128xf32>
    %cst_130 = arith.constant 0.000000e+00 : f32
    %292 = vector.broadcast %cst_130 : f32 to vector<8x128xf32>
    %293 = arith.maximumf %291, %292 : vector<8x128xf32>
    %cst_131 = arith.constant 0.000000e+00 : f32
    %294 = vector.broadcast %cst_131 : f32 to vector<4x64xf32>
    %295 = tpu.iota {dimensions = array<i32: 0>} : vector<4x8xi32>
    %296 = tpu.iota {dimensions = array<i32: 1>} : vector<4x8xi32>
    %c2_i32_132 = arith.constant 2 : i32
    %297 = vector.broadcast %c2_i32_132 : i32 to vector<4x8xi32>
    %298 = arith.muli %297, %295 : vector<4x8xi32>
    %c-1_i32_133 = arith.constant -1 : i32
    %299 = vector.broadcast %c-1_i32_133 : i32 to vector<4x8xi32>
    %300 = arith.addi %298, %299 : vector<4x8xi32>
    %301 = arith.cmpi eq, %296, %300 : vector<4x8xi32>
    %302 = arith.extui %301 : vector<4x8xi1> to vector<4x8xi32>
    %303 = arith.sitofp %302 : vector<4x8xi32> to vector<4x8xf32>
    %cst_134 = arith.constant dense<0.000000e+00> : vector<4x128xf32>
    %304 = tpu.matmul %303, %293, %cst_134 {dimension_numbers = #tpu.dot_dimension_numbers<[1], [0], [0], [1], [0, 0, 1, 1], [], []>} : vector<4x8xf32>, vector<8x128xf32>, vector<4x128xf32> -> vector<4x128xf32>
    %c0_135 = arith.constant 0 : index
    %c0_136 = arith.constant 0 : index
    %c0_137 = arith.constant 0 : index
    %305 = vector.load %arg10[%c0_135, %c0_136, %c0_137] : memref<3x128x64xf32, #tpu.memory_space<vmem>>, vector<1x128x64xf32>
    %306 = vector.shape_cast %305 : vector<1x128x64xf32> to vector<128x64xf32>
    %cst_138 = arith.constant dense<0.000000e+00> : vector<4x64xf32>
    %307 = tpu.matmul %304, %306, %cst_138 {dimension_numbers = #tpu.dot_dimension_numbers<[1], [0], [0], [1], [0, 0, 1, 1], [], []>} : vector<4x128xf32>, vector<128x64xf32>, vector<4x64xf32> -> vector<4x64xf32>
    %308 = arith.addf %294, %307 : vector<4x64xf32>
    %309 = tpu.iota {dimensions = array<i32: 0>} : vector<4x8xi32>
    %310 = tpu.iota {dimensions = array<i32: 1>} : vector<4x8xi32>
    %c2_i32_139 = arith.constant 2 : i32
    %311 = vector.broadcast %c2_i32_139 : i32 to vector<4x8xi32>
    %312 = arith.muli %311, %309 : vector<4x8xi32>
    %c0_i32_140 = arith.constant 0 : i32
    %313 = vector.broadcast %c0_i32_140 : i32 to vector<4x8xi32>
    %314 = arith.addi %312, %313 : vector<4x8xi32>
    %315 = arith.cmpi eq, %310, %314 : vector<4x8xi32>
    %316 = arith.extui %315 : vector<4x8xi1> to vector<4x8xi32>
    %317 = arith.sitofp %316 : vector<4x8xi32> to vector<4x8xf32>
    %cst_141 = arith.constant dense<0.000000e+00> : vector<4x128xf32>
    %318 = tpu.matmul %317, %293, %cst_141 {dimension_numbers = #tpu.dot_dimension_numbers<[1], [0], [0], [1], [0, 0, 1, 1], [], []>} : vector<4x8xf32>, vector<8x128xf32>, vector<4x128xf32> -> vector<4x128xf32>
    %c1_142 = arith.constant 1 : index
    %c0_143 = arith.constant 0 : index
    %c0_144 = arith.constant 0 : index
    %319 = vector.load %arg10[%c1_142, %c0_143, %c0_144] : memref<3x128x64xf32, #tpu.memory_space<vmem>>, vector<1x128x64xf32>
    %320 = vector.shape_cast %319 : vector<1x128x64xf32> to vector<128x64xf32>
    %cst_145 = arith.constant dense<0.000000e+00> : vector<4x64xf32>
    %321 = tpu.matmul %318, %320, %cst_145 {dimension_numbers = #tpu.dot_dimension_numbers<[1], [0], [0], [1], [0, 0, 1, 1], [], []>} : vector<4x128xf32>, vector<128x64xf32>, vector<4x64xf32> -> vector<4x64xf32>
    %322 = arith.addf %308, %321 : vector<4x64xf32>
    %323 = tpu.iota {dimensions = array<i32: 0>} : vector<4x8xi32>
    %324 = tpu.iota {dimensions = array<i32: 1>} : vector<4x8xi32>
    %c2_i32_146 = arith.constant 2 : i32
    %325 = vector.broadcast %c2_i32_146 : i32 to vector<4x8xi32>
    %326 = arith.muli %325, %323 : vector<4x8xi32>
    %c1_i32_147 = arith.constant 1 : i32
    %327 = vector.broadcast %c1_i32_147 : i32 to vector<4x8xi32>
    %328 = arith.addi %326, %327 : vector<4x8xi32>
    %329 = arith.cmpi eq, %324, %328 : vector<4x8xi32>
    %330 = arith.extui %329 : vector<4x8xi1> to vector<4x8xi32>
    %331 = arith.sitofp %330 : vector<4x8xi32> to vector<4x8xf32>
    %cst_148 = arith.constant dense<0.000000e+00> : vector<4x128xf32>
    %332 = tpu.matmul %331, %293, %cst_148 {dimension_numbers = #tpu.dot_dimension_numbers<[1], [0], [0], [1], [0, 0, 1, 1], [], []>} : vector<4x8xf32>, vector<8x128xf32>, vector<4x128xf32> -> vector<4x128xf32>
    %c2_149 = arith.constant 2 : index
    %c0_150 = arith.constant 0 : index
    %c0_151 = arith.constant 0 : index
    %333 = vector.load %arg10[%c2_149, %c0_150, %c0_151] : memref<3x128x64xf32, #tpu.memory_space<vmem>>, vector<1x128x64xf32>
    %334 = vector.shape_cast %333 : vector<1x128x64xf32> to vector<128x64xf32>
    %cst_152 = arith.constant dense<0.000000e+00> : vector<4x64xf32>
    %335 = tpu.matmul %332, %334, %cst_152 {dimension_numbers = #tpu.dot_dimension_numbers<[1], [0], [0], [1], [0, 0, 1, 1], [], []>} : vector<4x128xf32>, vector<128x64xf32>, vector<4x64xf32> -> vector<4x64xf32>
    %336 = arith.addf %322, %335 : vector<4x64xf32>
    %c0_153 = arith.constant 0 : index
    %c0_154 = arith.constant 0 : index
    %337 = vector.load %arg11[%c0_153, %c0_154] : memref<3x64xf32, #tpu.memory_space<vmem>>, vector<1x64xf32>
    %338 = vector.broadcast %337 : vector<1x64xf32> to vector<4x64xf32>
    %339 = arith.addf %336, %338 : vector<4x64xf32>
    %340 = vector.shape_cast %339 : vector<4x64xf32> to vector<1x4x64xf32>
    %cst_155 = arith.constant dense<0.000000e+00> : vector<1xf32>
    %341 = vector.multi_reduction <add>, %340, %cst_155 [1, 2] : vector<1x4x64xf32> to vector<1xf32>
    %342 = vector.shape_cast %341 : vector<1xf32> to vector<1x1x1xf32>
    %343 = vector.extract %342[0, 0, 0] : f32 from vector<1x1x1xf32>
    %cst_156 = arith.constant 2.560000e+02 : f32
    %344 = arith.divf %343, %cst_156 : f32
    %345 = vector.broadcast %344 : f32 to vector<4x64xf32>
    %346 = arith.subf %339, %345 : vector<4x64xf32>
    %347 = arith.mulf %346, %346 : vector<4x64xf32>
    %348 = vector.shape_cast %347 : vector<4x64xf32> to vector<1x4x64xf32>
    %cst_157 = arith.constant dense<0.000000e+00> : vector<1xf32>
    %349 = vector.multi_reduction <add>, %348, %cst_157 [1, 2] : vector<1x4x64xf32> to vector<1xf32>
    %350 = vector.shape_cast %349 : vector<1xf32> to vector<1x1x1xf32>
    %351 = vector.extract %350[0, 0, 0] : f32 from vector<1x1x1xf32>
    %cst_158 = arith.constant 2.560000e+02 : f32
    %352 = arith.divf %351, %cst_158 : f32
    %353 = vector.broadcast %344 : f32 to vector<4x64xf32>
    %354 = arith.subf %339, %353 : vector<4x64xf32>
    %cst_159 = arith.constant 9.99999974E-6 : f32
    %355 = arith.addf %352, %cst_159 : f32
    %356 = math.rsqrt %355 : f32
    %357 = vector.broadcast %356 : f32 to vector<4x64xf32>
    %358 = arith.mulf %354, %357 : vector<4x64xf32>
    %c1_160 = arith.constant 1 : index
    %c0_161 = arith.constant 0 : index
    %359 = vector.load %arg11[%c1_160, %c0_161] : memref<3x64xf32, #tpu.memory_space<vmem>>, vector<1x64xf32>
    %360 = vector.broadcast %359 : vector<1x64xf32> to vector<4x64xf32>
    %361 = arith.mulf %358, %360 : vector<4x64xf32>
    %c2_162 = arith.constant 2 : index
    %c0_163 = arith.constant 0 : index
    %362 = vector.load %arg11[%c2_162, %c0_163] : memref<3x64xf32, #tpu.memory_space<vmem>>, vector<1x64xf32>
    %363 = vector.broadcast %362 : vector<1x64xf32> to vector<4x64xf32>
    %364 = arith.addf %361, %363 : vector<4x64xf32>
    %cst_164 = arith.constant 0.000000e+00 : f32
    %365 = vector.broadcast %cst_164 : f32 to vector<4x64xf32>
    %366 = arith.maximumf %364, %365 : vector<4x64xf32>
    %c0_165 = arith.constant 0 : index
    %c0_166 = arith.constant 0 : index
    %367 = vector.load %arg12[%c0_165, %c0_166] : memref<16x8xf32, #tpu.memory_space<vmem>>, vector<16x8xf32>
    %cst_167 = arith.constant dense<0.000000e+00> : vector<16x128xf32>
    %368 = tpu.matmul %367, %293, %cst_167 {dimension_numbers = #tpu.dot_dimension_numbers<[1], [0], [0], [1], [0, 0, 1, 1], [], []>} : vector<16x8xf32>, vector<8x128xf32>, vector<16x128xf32> -> vector<16x128xf32>
    %c0_168 = arith.constant 0 : index
    %c0_169 = arith.constant 0 : index
    %369 = vector.load %arg13[%c0_168, %c0_169] : memref<128x256xf32, #tpu.memory_space<vmem>>, vector<128x256xf32>
    %cst_170 = arith.constant dense<0.000000e+00> : vector<16x256xf32>
    %370 = tpu.matmul %368, %369, %cst_170 {dimension_numbers = #tpu.dot_dimension_numbers<[1], [0], [0], [1], [0, 0, 1, 1], [], []>} : vector<16x128xf32>, vector<128x256xf32>, vector<16x256xf32> -> vector<16x256xf32>
    %c0_171 = arith.constant 0 : index
    %c0_172 = arith.constant 0 : index
    %371 = vector.load %arg14[%c0_171, %c0_172] : memref<16x4xf32, #tpu.memory_space<vmem>>, vector<16x4xf32>
    %cst_173 = arith.constant dense<0.000000e+00> : vector<16x64xf32>
    %372 = tpu.matmul %371, %366, %cst_173 {dimension_numbers = #tpu.dot_dimension_numbers<[1], [0], [0], [1], [0, 0, 1, 1], [], []>} : vector<16x4xf32>, vector<4x64xf32>, vector<16x64xf32> -> vector<16x64xf32>
    %c0_174 = arith.constant 0 : index
    %c0_175 = arith.constant 0 : index
    %373 = vector.load %arg15[%c0_174, %c0_175] : memref<64x256xf32, #tpu.memory_space<vmem>>, vector<64x256xf32>
    %cst_176 = arith.constant dense<0.000000e+00> : vector<16x256xf32>
    %374 = tpu.matmul %372, %373, %cst_176 {dimension_numbers = #tpu.dot_dimension_numbers<[1], [0], [0], [1], [0, 0, 1, 1], [], []>} : vector<16x64xf32>, vector<64x256xf32>, vector<16x256xf32> -> vector<16x256xf32>
    %375 = arith.addf %220, %370 : vector<16x256xf32>
    %376 = arith.addf %375, %374 : vector<16x256xf32>
    %c0_177 = arith.constant 0 : index
    %c0_178 = arith.constant 0 : index
    %c0_179 = arith.constant 0 : index
    %377 = vector.load %arg16[%c0_177, %c0_178, %c0_179] : memref<1x16x256xf32, #tpu.memory_space<vmem>>, vector<1x16x256xf32>
    %378 = vector.shape_cast %377 : vector<1x16x256xf32> to vector<16x256xf32>
    %379 = vector.shape_cast %376 : vector<16x256xf32> to vector<1x16x256xf32>
    tpu.vector_store %arg16[%c0_177, %c0_178, %c0_179], %379 {strides = array<i32>} : memref<1x16x256xf32, #tpu.memory_space<vmem>>, vector<1x16x256xf32>,
    return
  }
  func.func @transform_0(%arg0: i32) -> (i32, i32, i32) {
    %c0_i32 = arith.constant 0 : i32
    %c0_i32_0 = arith.constant 0 : i32
    %c0_i32_1 = arith.constant 0 : i32
    return %arg0, %c0_i32, %c0_i32_0 : i32, i32, i32
  }
  func.func @transform_1(%arg0: i32) -> (i32, i32, i32) {
    %c0_i32 = arith.constant 0 : i32
    %c0_i32_0 = arith.constant 0 : i32
    %c0_i32_1 = arith.constant 0 : i32
    %c0_i32_2 = arith.constant 0 : i32
    return %c0_i32, %c0_i32_0, %c0_i32_1 : i32, i32, i32
  }
  func.func @transform_2(%arg0: i32) -> (i32, i32) {
    %c0_i32 = arith.constant 0 : i32
    %c0_i32_0 = arith.constant 0 : i32
    %c0_i32_1 = arith.constant 0 : i32
    return %c0_i32, %c0_i32_0 : i32, i32
  }
  func.func @transform_3(%arg0: i32) -> (i32, i32, i32) {
    %c0_i32 = arith.constant 0 : i32
    %c0_i32_0 = arith.constant 0 : i32
    %c0_i32_1 = arith.constant 0 : i32
    %c0_i32_2 = arith.constant 0 : i32
    return %c0_i32, %c0_i32_0, %c0_i32_1 : i32, i32, i32
  }
  func.func @transform_4(%arg0: i32) -> (i32, i32) {
    %c0_i32 = arith.constant 0 : i32
    %c0_i32_0 = arith.constant 0 : i32
    %c0_i32_1 = arith.constant 0 : i32
    return %c0_i32, %c0_i32_0 : i32, i32
  }
  func.func @transform_5(%arg0: i32) -> (i32, i32, i32) {
    %c0_i32 = arith.constant 0 : i32
    %c0_i32_0 = arith.constant 0 : i32
    %c0_i32_1 = arith.constant 0 : i32
    %c0_i32_2 = arith.constant 0 : i32
    return %c0_i32, %c0_i32_0, %c0_i32_1 : i32, i32, i32
  }
  func.func @transform_6(%arg0: i32) -> (i32, i32) {
    %c0_i32 = arith.constant 0 : i32
    %c0_i32_0 = arith.constant 0 : i32
    %c0_i32_1 = arith.constant 0 : i32
    return %c0_i32, %c0_i32_0 : i32, i32
  }
  func.func @transform_7(%arg0: i32) -> (i32, i32, i32) {
    %c0_i32 = arith.constant 0 : i32
    %c0_i32_0 = arith.constant 0 : i32
    %c0_i32_1 = arith.constant 0 : i32
    %c0_i32_2 = arith.constant 0 : i32
    return %c0_i32, %c0_i32_0, %c0_i32_1 : i32, i32, i32
  }
  func.func @transform_8(%arg0: i32) -> (i32, i32) {
    %c0_i32 = arith.constant 0 : i32
    %c0_i32_0 = arith.constant 0 : i32
    %c0_i32_1 = arith.constant 0 : i32
    return %c0_i32, %c0_i32_0 : i32, i32
  }
  func.func @transform_9(%arg0: i32) -> (i32, i32, i32) {
    %c0_i32 = arith.constant 0 : i32
    %c0_i32_0 = arith.constant 0 : i32
    %c0_i32_1 = arith.constant 0 : i32
    %c0_i32_2 = arith.constant 0 : i32
    return %c0_i32, %c0_i32_0, %c0_i32_1 : i32, i32, i32
  }
  func.func @transform_10(%arg0: i32) -> (i32, i32) {
    %c0_i32 = arith.constant 0 : i32
    %c0_i32_0 = arith.constant 0 : i32
    %c0_i32_1 = arith.constant 0 : i32
    return %c0_i32, %c0_i32_0 : i32, i32
  }
  func.func @transform_11(%arg0: i32) -> (i32, i32) {
    %c0_i32 = arith.constant 0 : i32
    %c0_i32_0 = arith.constant 0 : i32
    %c0_i32_1 = arith.constant 0 : i32
    return %c0_i32, %c0_i32_0 : i32, i32
  }
  func.func @transform_12(%arg0: i32) -> (i32, i32) {
    %c0_i32 = arith.constant 0 : i32
    %c0_i32_0 = arith.constant 0 : i32
    %c0_i32_1 = arith.constant 0 : i32
    return %c0_i32, %c0_i32_0 : i32, i32
  }
  func.func @transform_13(%arg0: i32) -> (i32, i32) {
    %c0_i32 = arith.constant 0 : i32
    %c0_i32_0 = arith.constant 0 : i32
    %c0_i32_1 = arith.constant 0 : i32
    return %c0_i32, %c0_i32_0 : i32, i32
  }
  func.func @transform_14(%arg0: i32) -> (i32, i32) {
    %c0_i32 = arith.constant 0 : i32
    %c0_i32_0 = arith.constant 0 : i32
    %c0_i32_1 = arith.constant 0 : i32
    return %c0_i32, %c0_i32_0 : i32, i32
  }
  func.func @transform_15(%arg0: i32) -> (i32, i32, i32) {
    %c0_i32 = arith.constant 0 : i32
    %c0_i32_0 = arith.constant 0 : i32
    %c0_i32_1 = arith.constant 0 : i32
    return %arg0, %c0_i32, %c0_i32_0 : i32, i32, i32
  }
}

</mosaic_0001>

<llo_original>
// kernel: tile.108
$region0: #{tile.108}
  #allocation0 [shape = 's32[1]{0}', space=sflag, size = 0x4, scoped, tag = 'scoped memory for tile.108']
  %s0 = inlined_call_operand.vmem [shape: f32[16], index: 0, kind: input, shape index: {}]
  %s1 = inlined_call_operand.vmem [shape: f32[16,16], index: 1, kind: output, shape index: {}]
  // Predicated region
  $region2: #{tile.108} parent=0 // pred_check
    _
  $region3: #{tile.108} parent=0 // pred_check_branch
    %3 = sbr.rel (0) target = $region5
  $region4: #{tile.108} parent=0 // pred_region
    _
  $region5: #{tile.108} parent=0 // pred_fallthru
    _
  %v4 = vld [vmem:[%s0] ss:$0 sm:$0xff]
  %5 = vst [vmem:[%s1] sm:$0xff] %v4
  %s6 = scalar_lea.vmem %s1, 8
  %7 = vst [vmem:[%s6] sm:$0xff] %v4

// kernel: tile.117
$region0: #{tile.117}
  %s0 = inlined_call_operand.vmem [shape: f32[16,16], index: 0, kind: input, shape index: {}]
  %s1 = inlined_call_operand.vmem [shape: f32[1,256], index: 1, kind: output, shape index: {}]
  $region1: #{tile.117} parent=0
    #allocation0 [shape = 'u8[8192]{0}', space=vmem, size = 0x2000, scoped, tag = 'scoped mem for output reshape']
    %s2 = smov 3
    %v3 = vld [vmem:[%s0] ss:$8 sm:%s2]
    %vm4 = vcmask 130048
    %5 = vst.msk [vmem:[#allocation0] ss:$8 sm:$0x3] %vm4, %v3
    %s6 = scalar_lea.vmem %s0, 7
    %s7 = smov 3
    %v8 = vld [vmem:[%s6] ss:$8 sm:%s7]
    %9 = vrot.lane.b32.xlu0 %v8, 112
    %v10 = vpop.permute.xlu0 %9
    %vm11 = vcmask 1048448
    %12 = vst.msk [vmem:[#allocation0] ss:$8 sm:$0x3] %vm11, %v10
    %s13 = scalar_lea.vmem %s0, 6
    %s14 = smov 3
    %v15 = vld [vmem:[%s13] ss:$8 sm:%s14]
    %16 = vrot.lane.b32.xlu0 %v15, 96
    %v17 = vpop.permute.xlu0 %16
    %vm18 = vcmask 917248
    %19 = vst.msk [vmem:[#allocation0] ss:$8 sm:$0x3] %vm18, %v17
    %s20 = scalar_lea.vmem %s0, 5
    %s21 = smov 3
    %v22 = vld [vmem:[%s20] ss:$8 sm:%s21]
    %23 = vrot.lane.b32.xlu0 %v22, 80
    %v24 = vpop.permute.xlu0 %23
    %vm25 = vcmask 786048
    %26 = vst.msk [vmem:[#allocation0] ss:$8 sm:$0x3] %vm25, %v24
    %s27 = scalar_lea.vmem %s0, 4
    %s28 = smov 3
    %v29 = vld [vmem:[%s27] ss:$8 sm:%s28]
    %30 = vrot.lane.b32.xlu0 %v29, 64
    %v31 = vpop.permute.xlu0 %30
    %vm32 = vcmask 654848
    %33 = vst.msk [vmem:[#allocation0] ss:$8 sm:$0x3] %vm32, %v31
    %s34 = scalar_lea.vmem %s0, 3
    %s35 = smov 3
    %v36 = vld [vmem:[%s34] ss:$8 sm:%s35]
    %37 = vrot.lane.b32.xlu0 %v36, 48
    %v38 = vpop.permute.xlu0 %37
    %vm39 = vcmask 523648
    %40 = vst.msk [vmem:[#allocation0] ss:$8 sm:$0x3] %vm39, %v38
    %s41 = scalar_lea.vmem %s0, 2
    %s42 = smov 3
    %v43 = vld [vmem:[%s41] ss:$8 sm:%s42]
    %44 = vrot.lane.b32.xlu0 %v43, 32
    %v45 = vpop.permute.xlu0 %44
    %vm46 = vcmask 392448
    %47 = vst.msk [vmem:[#allocation0] ss:$8 sm:$0x3] %vm46, %v45
    %s48 = scalar_lea.vmem %s0, 1
    %s49 = smov 3
    %v50 = vld [vmem:[%s48] ss:$8 sm:%s49]
    %51 = vrot.lane.b32.xlu0 %v50, 16
    %v52 = vpop.permute.xlu0 %51
    %vm53 = vcmask 261248
    %54 = vst.msk [vmem:[#allocation0] ss:$8 sm:$0x3] %vm53, %v52
    %s56 = ssub.s32 2, 1
    %v57 = vld [vmem:[#allocation0] sm:%s56]
    %s59 = ssub.s32 2, 1
    %60 = vst [vmem:[%s1] sm:%s59] %v57
    %s61 = scalar_lea.vmem [#allocation0], 8
    %v62 = vld [vmem:[%s61] sm:%s56]
    %s64 = ssub.s32 2, 1
    %s65 = scalar_lea.vmem %s1, 1
    %66 = vst [vmem:[%s65] sm:%s64] %v62

// kernel: tile.78
$region0: #{tile.78}
  #allocation0 [shape = 's32[1]{0}', space=sflag, size = 0x4, scoped, tag = 'scoped memory for tile.78']
  %s0 = inlined_call_operand.vmem [shape: f32[4], index: 0, kind: input, shape index: {}]
  %s1 = inlined_call_operand.vmem [shape: f32[16,4], index: 1, kind: output, shape index: {}]
  // Predicated region
  $region2: #{tile.78} parent=0 // pred_check
    _
  $region3: #{tile.78} parent=0 // pred_check_branch
    %3 = sbr.rel (0) target = $region5
  $region4: #{tile.78} parent=0 // pred_region
    _
  $region5: #{tile.78} parent=0 // pred_fallthru
    _
  %v4 = vld [vmem:[%s0] ss:$0 sm:$0xff]
  %5 = vst [vmem:[%s1] sm:$0xff] %v4
  %s6 = scalar_lea.vmem %s1, 8
  %7 = vst [vmem:[%s6] sm:$0xff] %v4

// kernel: tile.87
$region0: #{tile.87}
  %s0 = inlined_call_operand.vmem [shape: f32[16,4], index: 0, kind: input, shape index: {}]
  %s1 = inlined_call_operand.vmem [shape: f32[1,64], index: 1, kind: output, shape index: {}]
  $region1: #{tile.87} parent=0
    #allocation0 [shape = 'u8[4096]{0}', space=vmem, size = 0x1000, scoped, tag = 'scoped mem for output reshape']
    %v2 = vld [vmem:[%s0] sm:$0x1]
    %vm3 = vcmask 31744
    %4 = vst.msk [vmem:[#allocation0] sm:$0x1] %vm3, %v2
    %s5 = scalar_lea.vmem %s0, 15
    %v6 = vld [vmem:[%s5] sm:$0x1]
    %7 = vrot.lane.b32.xlu0 %v6, 60
    %v8 = vpop.permute.xlu0 %7
    %vm9 = vcmask 523744
    %10 = vst.msk [vmem:[#allocation0] sm:$0x1] %vm9, %v8
    %s11 = scalar_lea.vmem %s0, 14
    %v12 = vld [vmem:[%s11] sm:$0x1]
    %13 = vrot.lane.b32.xlu0 %v12, 56
    %v14 = vpop.permute.xlu0 %13
    %vm15 = vcmask 490944
    %16 = vst.msk [vmem:[#allocation0] sm:$0x1] %vm15, %v14
    %s17 = scalar_lea.vmem %s0, 13
    %v18 = vld [vmem:[%s17] sm:$0x1]
    %19 = vrot.lane.b32.xlu0 %v18, 52
    %v20 = vpop.permute.xlu0 %19
    %vm21 = vcmask 458144
    %22 = vst.msk [vmem:[#allocation0] sm:$0x1] %vm21, %v20
    %s23 = scalar_lea.vmem %s0, 12
    %v24 = vld [vmem:[%s23] sm:$0x1]
    %25 = vrot.lane.b32.xlu0 %v24, 48
    %v26 = vpop.permute.xlu0 %25
    %vm27 = vcmask 425344
    %28 = vst.msk [vmem:[#allocation0] sm:$0x1] %vm27, %v26
    %s29 = scalar_lea.vmem %s0, 11
    %v30 = vld [vmem:[%s29] sm:$0x1]
    %31 = vrot.lane.b32.xlu0 %v30, 44
    %v32 = vpop.permute.xlu0 %31
    %vm33 = vcmask 392544
    %34 = vst.msk [vmem:[#allocation0] sm:$0x1] %vm33, %v32
    %s35 = scalar_lea.vmem %s0, 10
    %v36 = vld [vmem:[%s35] sm:$0x1]
    %37 = vrot.lane.b32.xlu0 %v36, 40
    %v38 = vpop.permute.xlu0 %37
    %vm39 = vcmask 359744
    %40 = vst.msk [vmem:[#allocation0] sm:$0x1] %vm39, %v38
    %s41 = scalar_lea.vmem %s0, 9
    %v42 = vld [vmem:[%s41] sm:$0x1]
    %43 = vrot.lane.b32.xlu0 %v42, 36
    %v44 = vpop.permute.xlu0 %43
    %vm45 = vcmask 326944
    %46 = vst.msk [vmem:[#allocation0] sm:$0x1] %vm45, %v44
    %s47 = scalar_lea.vmem %s0, 8
    %v48 = vld [vmem:[%s47] sm:$0x1]
    %49 = vrot.lane.b32.xlu0 %v48, 32
    %v50 = vpop.permute.xlu0 %49
    %vm51 = vcmask 294144
    %52 = vst.msk [vmem:[#allocation0] sm:$0x1] %vm51, %v50
    %s53 = scalar_lea.vmem %s0, 7
    %v54 = vld [vmem:[%s53] sm:$0x1]
    %55 = vrot.lane.b32.xlu0 %v54, 28
    %v56 = vpop.permute.xlu0 %55
    %vm57 = vcmask 261344
    %58 = vst.msk [vmem:[#allocation0] sm:$0x1] %vm57, %v56
    %s59 = scalar_lea.vmem %s0, 6
    %v60 = vld [vmem:[%s59] sm:$0x1]
    %61 = vrot.lane.b32.xlu0 %v60, 24
    %v62 = vpop.permute.xlu0 %61
    %vm63 = vcmask 228544
    %64 = vst.msk [vmem:[#allocation0] sm:$0x1] %vm63, %v62
    %s65 = scalar_lea.vmem %s0, 5
    %v66 = vld [vmem:[%s65] sm:$0x1]
    %67 = vrot.lane.b32.xlu0 %v66, 20
    %v68 = vpop.permute.xlu0 %67
    %vm69 = vcmask 195744
    %70 = vst.msk [vmem:[#allocation0] sm:$0x1] %vm69, %v68
    %s71 = scalar_lea.vmem %s0, 4
    %v72 = vld [vmem:[%s71] sm:$0x1]
    %73 = vrot.lane.b32.xlu0 %v72, 16
    %v74 = vpop.permute.xlu0 %73
    %vm75 = vcmask 162944
    %76 = vst.msk [vmem:[#allocation0] sm:$0x1] %vm75, %v74
    %s77 = scalar_lea.vmem %s0, 3
    %v78 = vld [vmem:[%s77] sm:$0x1]
    %79 = vrot.lane.b32.xlu0 %v78, 12
    %v80 = vpop.permute.xlu0 %79
    %vm81 = vcmask 130144
    %82 = vst.msk [vmem:[#allocation0] sm:$0x1] %vm81, %v80
    %s83 = scalar_lea.vmem %s0, 2
    %v84 = vld [vmem:[%s83] sm:$0x1]
    %85 = vrot.lane.b32.xlu0 %v84, 8
    %v86 = vpop.permute.xlu0 %85
    %vm87 = vcmask 97344
    %88 = vst.msk [vmem:[#allocation0] sm:$0x1] %vm87, %v86
    %s89 = scalar_lea.vmem %s0, 1
    %v90 = vld [vmem:[%s89] sm:$0x1]
    %91 = vrot.lane.b32.xlu0 %v90, 4
    %v92 = vpop.permute.xlu0 %91
    %vm93 = vcmask 64544
    %94 = vst.msk [vmem:[#allocation0] sm:$0x1] %vm93, %v92
    %s96 = ssub.s32 2, 1
    %v97 = vld [vmem:[#allocation0] sm:%s96]
    %s99 = ssub.s32 2, 1
    %100 = vst [vmem:[%s1] sm:%s99] %v97

// kernel: tile.93
$region0: #{tile.93}
  #allocation0 [shape = 's32[1]{0}', space=sflag, size = 0x4, scoped, tag = 'scoped memory for tile.93']
  %s0 = inlined_call_operand.vmem [shape: f32[8], index: 0, kind: input, shape index: {}]
  %s1 = inlined_call_operand.vmem [shape: f32[16,8], index: 1, kind: output, shape index: {}]
  // Predicated region
  $region2: #{tile.93} parent=0 // pred_check
    _
  $region3: #{tile.93} parent=0 // pred_check_branch
    %3 = sbr.rel (0) target = $region5
  $region4: #{tile.93} parent=0 // pred_region
    _
  $region5: #{tile.93} parent=0 // pred_fallthru
    _
  %v4 = vld [vmem:[%s0] ss:$0 sm:$0xff]
  %5 = vst [vmem:[%s1] sm:$0xff] %v4
  %s6 = scalar_lea.vmem %s1, 8
  %7 = vst [vmem:[%s6] sm:$0xff] %v4

// kernel: tile.102
$region0: #{tile.102}
  %s0 = inlined_call_operand.vmem [shape: f32[16,8], index: 0, kind: input, shape index: {}]
  %s1 = inlined_call_operand.vmem [shape: f32[1,128], index: 1, kind: output, shape index: {}]
  $region1: #{tile.102} parent=0
    #allocation0 [shape = 'u8[4096]{0}', space=vmem, size = 0x1000, scoped, tag = 'scoped mem for output reshape']
    %v2 = vld [vmem:[%s0] sm:$0x1]
    %vm3 = vcmask 64512
    %4 = vst.msk [vmem:[#allocation0] sm:$0x1] %vm3, %v2
    %s5 = scalar_lea.vmem %s0, 15
    %v6 = vld [vmem:[%s5] sm:$0x1]
    %7 = vrot.lane.b32.xlu0 %v6, 120
    %v8 = vpop.permute.xlu0 %7
    %vm9 = vcmask 1048512
    %10 = vst.msk [vmem:[#allocation0] sm:$0x1] %vm9, %v8
    %s11 = scalar_lea.vmem %s0, 14
    %v12 = vld [vmem:[%s11] sm:$0x1]
    %13 = vrot.lane.b32.xlu0 %v12, 112
    %v14 = vpop.permute.xlu0 %13
    %vm15 = vcmask 982912
    %16 = vst.msk [vmem:[#allocation0] sm:$0x1] %vm15, %v14
    %s17 = scalar_lea.vmem %s0, 13
    %v18 = vld [vmem:[%s17] sm:$0x1]
    %19 = vrot.lane.b32.xlu0 %v18, 104
    %v20 = vpop.permute.xlu0 %19
    %vm21 = vcmask 917312
    %22 = vst.msk [vmem:[#allocation0] sm:$0x1] %vm21, %v20
    %s23 = scalar_lea.vmem %s0, 12
    %v24 = vld [vmem:[%s23] sm:$0x1]
    %25 = vrot.lane.b32.xlu0 %v24, 96
    %v26 = vpop.permute.xlu0 %25
    %vm27 = vcmask 851712
    %28 = vst.msk [vmem:[#allocation0] sm:$0x1] %vm27, %v26
    %s29 = scalar_lea.vmem %s0, 11
    %v30 = vld [vmem:[%s29] sm:$0x1]
    %31 = vrot.lane.b32.xlu0 %v30, 88
    %v32 = vpop.permute.xlu0 %31
    %vm33 = vcmask 786112
    %34 = vst.msk [vmem:[#allocation0] sm:$0x1] %vm33, %v32
    %s35 = scalar_lea.vmem %s0, 10
    %v36 = vld [vmem:[%s35] sm:$0x1]
    %37 = vrot.lane.b32.xlu0 %v36, 80
    %v38 = vpop.permute.xlu0 %37
    %vm39 = vcmask 720512
    %40 = vst.msk [vmem:[#allocation0] sm:$0x1] %vm39, %v38
    %s41 = scalar_lea.vmem %s0, 9
    %v42 = vld [vmem:[%s41] sm:$0x1]
    %43 = vrot.lane.b32.xlu0 %v42, 72
    %v44 = vpop.permute.xlu0 %43
    %vm45 = vcmask 654912
    %46 = vst.msk [vmem:[#allocation0] sm:$0x1] %vm45, %v44
    %s47 = scalar_lea.vmem %s0, 8
    %v48 = vld [vmem:[%s47] sm:$0x1]
    %49 = vrot.lane.b32.xlu0 %v48, 64
    %v50 = vpop.permute.xlu0 %49
    %vm51 = vcmask 589312
    %52 = vst.msk [vmem:[#allocation0] sm:$0x1] %vm51, %v50
    %s53 = scalar_lea.vmem %s0, 7
    %v54 = vld [vmem:[%s53] sm:$0x1]
    %55 = vrot.lane.b32.xlu0 %v54, 56
    %v56 = vpop.permute.xlu0 %55
    %vm57 = vcmask 523712
    %58 = vst.msk [vmem:[#allocation0] sm:$0x1] %vm57, %v56
    %s59 = scalar_lea.vmem %s0, 6
    %v60 = vld [vmem:[%s59] sm:$0x1]
    %61 = vrot.lane.b32.xlu0 %v60, 48
    %v62 = vpop.permute.xlu0 %61
    %vm63 = vcmask 458112
    %64 = vst.msk [vmem:[#allocation0] sm:$0x1] %vm63, %v62
    %s65 = scalar_lea.vmem %s0, 5
    %v66 = vld [vmem:[%s65] sm:$0x1]
    %67 = vrot.lane.b32.xlu0 %v66, 40
    %v68 = vpop.permute.xlu0 %67
    %vm69 = vcmask 392512
    %70 = vst.msk [vmem:[#allocation0] sm:$0x1] %vm69, %v68
    %s71 = scalar_lea.vmem %s0, 4
    %v72 = vld [vmem:[%s71] sm:$0x1]
    %73 = vrot.lane.b32.xlu0 %v72, 32
    %v74 = vpop.permute.xlu0 %73
    %vm75 = vcmask 326912
    %76 = vst.msk [vmem:[#allocation0] sm:$0x1] %vm75, %v74
    %s77 = scalar_lea.vmem %s0, 3
    %v78 = vld [vmem:[%s77] sm:$0x1]
    %79 = vrot.lane.b32.xlu0 %v78, 24
    %v80 = vpop.permute.xlu0 %79
    %vm81 = vcmask 261312
    %82 = vst.msk [vmem:[#allocation0] sm:$0x1] %vm81, %v80
    %s83 = scalar_lea.vmem %s0, 2
    %v84 = vld [vmem:[%s83] sm:$0x1]
    %85 = vrot.lane.b32.xlu0 %v84, 16
    %v86 = vpop.permute.xlu0 %85
    %vm87 = vcmask 195712
    %88 = vst.msk [vmem:[#allocation0] sm:$0x1] %vm87, %v86
    %s89 = scalar_lea.vmem %s0, 1
    %v90 = vld [vmem:[%s89] sm:$0x1]
    %91 = vrot.lane.b32.xlu0 %v90, 8
    %v92 = vpop.permute.xlu0 %91
    %vm93 = vcmask 130112
    %94 = vst.msk [vmem:[#allocation0] sm:$0x1] %vm93, %v92
    %s96 = ssub.s32 2, 1
    %v97 = vld [vmem:[#allocation0] sm:%s96]
    %s99 = ssub.s32 2, 1
    %100 = vst [vmem:[%s1] sm:%s99] %v97

// kernel: tile.123
$region0: #{tile.123}
  #allocation0 [shape = 's32[1]{0}', space=sflag, size = 0x4, scoped, tag = 'scoped memory for tile.123']
  %s0 = inlined_call_operand.vmem [shape: f32[16], index: 0, kind: input, shape index: {}]
  %s1 = inlined_call_operand.vmem [shape: f32[8,16], index: 1, kind: output, shape index: {}]
  // Predicated region
  $region2: #{tile.123} parent=0 // pred_check
    _
  $region3: #{tile.123} parent=0 // pred_check_branch
    %3 = sbr.rel (0) target = $region5
  $region4: #{tile.123} parent=0 // pred_region
    _
  $region5: #{tile.123} parent=0 // pred_fallthru
    _
  %v4 = vld [vmem:[%s0] ss:$0 sm:$0xff]
  %5 = vst [vmem:[%s1] sm:$0xff] %v4

// kernel: tile.132
$region0: #{tile.132}
  %s0 = inlined_call_operand.vmem [shape: f32[8,16], index: 0, kind: input, shape index: {}]
  %s1 = inlined_call_operand.vmem [shape: f32[1,128], index: 1, kind: output, shape index: {}]
  $region1: #{tile.132} parent=0
    #allocation0 [shape = 'u8[4096]{0}', space=vmem, size = 0x1000, scoped, tag = 'scoped mem for output reshape']
    %v2 = vld [vmem:[%s0] sm:$0x1]
    %vm3 = vcmask 130048
    %4 = vst.msk [vmem:[#allocation0] sm:$0x1] %vm3, %v2
    %s5 = scalar_lea.vmem %s0, 7
    %v6 = vld [vmem:[%s5] sm:$0x1]
    %7 = vrot.lane.b32.xlu0 %v6, 112
    %v8 = vpop.permute.xlu0 %7
    %vm9 = vcmask 1048448
    %10 = vst.msk [vmem:[#allocation0] sm:$0x1] %vm9, %v8
    %s11 = scalar_lea.vmem %s0, 6
    %v12 = vld [vmem:[%s11] sm:$0x1]
    %13 = vrot.lane.b32.xlu0 %v12, 96
    %v14 = vpop.permute.xlu0 %13
    %vm15 = vcmask 917248
    %16 = vst.msk [vmem:[#allocation0] sm:$0x1] %vm15, %v14
    %s17 = scalar_lea.vmem %s0, 5
    %v18 = vld [vmem:[%s17] sm:$0x1]
    %19 = vrot.lane.b32.xlu0 %v18, 80
    %v20 = vpop.permute.xlu0 %19
    %vm21 = vcmask 786048
    %22 = vst.msk [vmem:[#allocation0] sm:$0x1] %vm21, %v20
    %s23 = scalar_lea.vmem %s0, 4
    %v24 = vld [vmem:[%s23] sm:$0x1]
    %25 = vrot.lane.b32.xlu0 %v24, 64
    %v26 = vpop.permute.xlu0 %25
    %vm27 = vcmask 654848
    %28 = vst.msk [vmem:[#allocation0] sm:$0x1] %vm27, %v26
    %s29 = scalar_lea.vmem %s0, 3
    %v30 = vld [vmem:[%s29] sm:$0x1]
    %31 = vrot.lane.b32.xlu0 %v30, 48
    %v32 = vpop.permute.xlu0 %31
    %vm33 = vcmask 523648
    %34 = vst.msk [vmem:[#allocation0] sm:$0x1] %vm33, %v32
    %s35 = scalar_lea.vmem %s0, 2
    %v36 = vld [vmem:[%s35] sm:$0x1]
    %37 = vrot.lane.b32.xlu0 %v36, 32
    %v38 = vpop.permute.xlu0 %37
    %vm39 = vcmask 392448
    %40 = vst.msk [vmem:[#allocation0] sm:$0x1] %vm39, %v38
    %s41 = scalar_lea.vmem %s0, 1
    %v42 = vld [vmem:[%s41] sm:$0x1]
    %43 = vrot.lane.b32.xlu0 %v42, 16
    %v44 = vpop.permute.xlu0 %43
    %vm45 = vcmask 261248
    %46 = vst.msk [vmem:[#allocation0] sm:$0x1] %vm45, %v44
    %s48 = ssub.s32 2, 1
    %v49 = vld [vmem:[#allocation0] sm:%s48]
    %s51 = ssub.s32 2, 1
    %52 = vst [vmem:[%s1] sm:%s51] %v49

// kernel: tile.138
$region0: #{tile.138}
  #allocation0 [shape = 's32[1]{0}', space=sflag, size = 0x4, scoped, tag = 'scoped memory for tile.138']
  %s0 = inlined_call_operand.vmem [shape: f32[16], index: 0, kind: input, shape index: {}]
  %s1 = inlined_call_operand.vmem [shape: f32[4,16], index: 1, kind: output, shape index: {}]
  // Predicated region
  $region2: #{tile.138} parent=0 // pred_check
    _
  $region3: #{tile.138} parent=0 // pred_check_branch
    %3 = sbr.rel (0) target = $region5
  $region4: #{tile.138} parent=0 // pred_region
    _
  $region5: #{tile.138} parent=0 // pred_fallthru
    _
  %v4 = vld [vmem:[%s0] ss:$0 sm:$0xff]
  %5 = vst [vmem:[%s1] sm:$0xf] %v4

// kernel: tile.147
$region0: #{tile.147}
  %s0 = inlined_call_operand.vmem [shape: f32[4,16], index: 0, kind: input, shape index: {}]
  %s1 = inlined_call_operand.vmem [shape: f32[1,64], index: 1, kind: output, shape index: {}]
  $region1: #{tile.147} parent=0
    #allocation0 [shape = 'u8[4096]{0}', space=vmem, size = 0x1000, scoped, tag = 'scoped mem for output reshape']
    #allocation1 [shape = 'u8[4096]{0}', space=vmem, size = 0x1000, scoped, tag = 'scoped mem for input reshape']
    %s3 = ssub.s32 16, 1
    %v4 = vld [vmem:[%s0] sm:%s3]
    %5 = vst [vmem:[#allocation1] sm:%s3] %v4
    %v6 = vld [vmem:[#allocation1] sm:$0x1]
    %vm7 = vcmask 130048
    %8 = vst.msk [vmem:[#allocation0] sm:$0x1] %vm7, %v6
    %s9 = scalar_lea.vmem [#allocation1], 3
    %v10 = vld [vmem:[%s9] sm:$0x1]
    %11 = vrot.lane.b32.xlu0 %v10, 48
    %v12 = vpop.permute.xlu0 %11
    %vm13 = vcmask 523648
    %14 = vst.msk [vmem:[#allocation0] sm:$0x1] %vm13, %v12
    %s15 = scalar_lea.vmem [#allocation1], 2
    %v16 = vld [vmem:[%s15] sm:$0x1]
    %17 = vrot.lane.b32.xlu0 %v16, 32
    %v18 = vpop.permute.xlu0 %17
    %vm19 = vcmask 392448
    %20 = vst.msk [vmem:[#allocation0] sm:$0x1] %vm19, %v18
    %s21 = scalar_lea.vmem [#allocation1], 1
    %v22 = vld [vmem:[%s21] sm:$0x1]
    %23 = vrot.lane.b32.xlu0 %v22, 16
    %v24 = vpop.permute.xlu0 %23
    %vm25 = vcmask 261248
    %26 = vst.msk [vmem:[#allocation0] sm:$0x1] %vm25, %v24
    %s28 = ssub.s32 2, 1
    %v29 = vld [vmem:[#allocation0] sm:%s28]
    %s31 = ssub.s32 2, 1
    %32 = vst [vmem:[%s1] sm:%s31] %v29

// kernel: custom_model_forward.1
$region0: #{custom_model_forward.1}
  #allocation0 [shape = 'u32[]', space=smem, size = 0x4, offset = 0x4, fixed_abs, tag = 'smem constant byte address 0x4 - core index']
  #allocation1 [shape = 'u32[72,128]{1,0:T(1,128)}', space=vmem, size = 0x9000, scoped, tag = 'internal scratch']
  %s0 = inlined_call_operand.vmem [shape: f32[2,16,48], index: 0, kind: input, shape index: {}]
  %s1 = inlined_call_operand.vmem [shape: f32[3,48,64], index: 1, kind: input, shape index: {}]
  %s2 = inlined_call_operand.vmem [shape: f32[3,64], index: 2, kind: input, shape index: {}]
  %s3 = inlined_call_operand.vmem [shape: f32[3,64,128], index: 3, kind: input, shape index: {}]
  %s4 = inlined_call_operand.vmem [shape: f32[3,128], index: 4, kind: input, shape index: {}]
  %s5 = inlined_call_operand.vmem [shape: f32[3,128,256], index: 5, kind: input, shape index: {}]
  %s6 = inlined_call_operand.vmem [shape: f32[3,256], index: 6, kind: input, shape index: {}]
  %s7 = inlined_call_operand.vmem [shape: f32[3,256,128], index: 7, kind: input, shape index: {}]
  %s8 = inlined_call_operand.vmem [shape: f32[3,128], index: 8, kind: input, shape index: {}]
  %s9 = inlined_call_operand.vmem [shape: f32[3,128,64], index: 9, kind: input, shape index: {}]
  %s10 = inlined_call_operand.vmem [shape: f32[3,64], index: 10, kind: input, shape index: {}]
  %s11 = inlined_call_operand.vmem [shape: f32[16,8], index: 11, kind: input, shape index: {}]
  %s12 = inlined_call_operand.vmem [shape: f32[128,256], index: 12, kind: input, shape index: {}]
  %s13 = inlined_call_operand.vmem [shape: f32[16,4], index: 13, kind: input, shape index: {}]
  %s14 = inlined_call_operand.vmem [shape: f32[64,256], index: 14, kind: input, shape index: {}]
  %s15 = inlined_call_operand.vmem [shape: f32[2,16,256], index: 15, kind: output, shape index: {}]
  %s16 = sld [smem:[#allocation0]]
  $region93: #{custom_model_forward.1} parent=0
    _
  %s18 = ssub.s32 1, %s16
  %s19 = scalar_select 0, %s18, %s16
  loop: start=0, step=1, limit=4
  $region2: #{custom_model_forward.1} parent=0 // loop_pre_header
    _
  $region3: #{custom_model_forward.1} parent=0 // loop_header
    %s21 = sphi 0, %s25
    %p22 = scmp.ge.s32.totalorder %s21, 4
    %s31 = sphi 0, %s33
    %s34 = sphi 0, %s31
    %s35 = sphi 0, %s34
    %s51 = sphi 0, %s35
    %s55 = sphi 0, %s55
    %s57 = sphi 0, %s55
    %s58 = sphi 0, %s57
    %s72 = sphi 0, %s58
    %s76 = sphi 0, %s76
    %s78 = sphi 0, %s76
    %s79 = sphi 0, %s78
    %s93 = sphi 0, %s79
    %s97 = sphi 0, %s97
    %s99 = sphi 0, %s97
    %s100 = sphi 0, %s99
    %s114 = sphi 0, %s100
    %s118 = sphi 0, %s118
    %s120 = sphi 0, %s118
    %s121 = sphi 0, %s120
    %s135 = sphi 0, %s121
    %s139 = sphi 0, %s139
    %s141 = sphi 0, %s139
    %s142 = sphi 0, %s141
    %s156 = sphi 0, %s142
    %s160 = sphi 0, %s160
    %s162 = sphi 0, %s160
    %s163 = sphi 0, %s162
    %s177 = sphi 0, %s163
    %s181 = sphi 0, %s181
    %s183 = sphi 0, %s181
    %s184 = sphi 0, %s183
    %s198 = sphi 0, %s184
    %s202 = sphi 0, %s202
    %s204 = sphi 0, %s202
    %s205 = sphi 0, %s204
    %s219 = sphi 0, %s205
    %s223 = sphi 0, %s223
    %s225 = sphi 0, %s223
    %s226 = sphi 0, %s225
    %s240 = sphi 0, %s226
    %s244 = sphi 0, %s244
    %s246 = sphi 0, %s244
    %s247 = sphi 0, %s246
    %s261 = sphi 0, %s247
    %s265 = sphi 0, %s265
    %s267 = sphi 0, %s265
    %s268 = sphi 0, %s267
    %s282 = sphi 0, %s268
    %s286 = sphi 0, %s286
    %s288 = sphi 0, %s286
    %s289 = sphi 0, %s288
    %s303 = sphi 0, %s289
    %s307 = sphi 0, %s307
    %s309 = sphi 0, %s307
    %s310 = sphi 0, %s309
    %s324 = sphi 0, %s310
    %s328 = sphi 0, %s328
    %s330 = sphi 0, %s328
    %s331 = sphi 0, %s330
    %s345 = sphi 0, %s331
    %s351 = sphi 0, %s353
    %s354 = sphi 0, %s351
    %s355 = sphi 0, %s354
    %s371 = sphi 0, %s355
  $region4: #{custom_model_forward.1} parent=0 // loop_header_branch
    %24 = sbr.rel (%p22) target = $region8
  $region5: #{custom_model_forward.1} parent=0 // loop_body
    %s26 = ssub.s32 %s21, 1
    %s27 = ssub.s32 %s21, 2
    %s28 = sadd.s32 %s21, 1
    %s29 = ssub.s32 %s21, %s28
    %p30 = scmp.eq.s32.totalorder %s29, 0
    %s32 = sadd.s32 %s31, 1
    %s33 = scalar_select %p30, %s31, %s32
    %p36 = pneg %p30
    %p37 = scmp.eq.s32.totalorder %s21, 1
    %p38 = por %p36, %p37
    %p39 = scmp.ne.s32.totalorder %s31, %s34
    %p40 = scmp.eq.s32.totalorder %s21, 0
    %p41 = por %p39, %p40
    %p42 = scmp.ne.s32.totalorder %s31, %s34
    %p43 = scmp.eq.s32.totalorder %s26, 1
    %p44 = por %p42, %p43
    %p45 = scmp.ne.s32.totalorder %s34, %s35
    %p46 = scmp.eq.s32.totalorder %s26, 0
    %p47 = por %p45, %p46
    %p48 = scmp.ne.s32.totalorder %s34, %s35
    %p49 = scmp.eq.s32.totalorder %s27, 1
    %p50 = por %p48, %p49
    %p52 = scmp.ne.s32.totalorder %s35, %s51
    %p53 = scmp.eq.s32.totalorder %s27, 0
    %p54 = por %p52, %p53
    %s56 = sadd.s32 %s55, 1
    %p59 = scmp.eq.s32.totalorder %s21, 1
    %p60 = scmp.ne.s32.totalorder %s55, %s57
    %p61 = scmp.eq.s32.totalorder %s21, 0
    %p62 = por %p60, %p61
    %p63 = scmp.ne.s32.totalorder %s55, %s57
    %p64 = scmp.eq.s32.totalorder %s26, 1
    %p65 = por %p63, %p64
    %p66 = scmp.ne.s32.totalorder %s57, %s58
    %p67 = scmp.eq.s32.totalorder %s26, 0
    %p68 = por %p66, %p67
    %p69 = scmp.ne.s32.totalorder %s57, %s58
    %p70 = scmp.eq.s32.totalorder %s27, 1
    %p71 = por %p69, %p70
    %p73 = scmp.ne.s32.totalorder %s58, %s72
    %p74 = scmp.eq.s32.totalorder %s27, 0
    %p75 = por %p73, %p74
    %s77 = sadd.s32 %s76, 1
    %p80 = scmp.eq.s32.totalorder %s21, 1
    %p81 = scmp.ne.s32.totalorder %s76, %s78
    %p82 = scmp.eq.s32.totalorder %s21, 0
    %p83 = por %p81, %p82
    %p84 = scmp.ne.s32.totalorder %s76, %s78
    %p85 = scmp.eq.s32.totalorder %s26, 1
    %p86 = por %p84, %p85
    %p87 = scmp.ne.s32.totalorder %s78, %s79
    %p88 = scmp.eq.s32.totalorder %s26, 0
    %p89 = por %p87, %p88
    %p90 = scmp.ne.s32.totalorder %s78, %s79
    %p91 = scmp.eq.s32.totalorder %s27, 1
    %p92 = por %p90, %p91
    %p94 = scmp.ne.s32.totalorder %s79, %s93
    %p95 = scmp.eq.s32.totalorder %s27, 0
    %p96 = por %p94, %p95
    %s98 = sadd.s32 %s97, 1
    %p101 = scmp.eq.s32.totalorder %s21, 1
    %p102 = scmp.ne.s32.totalorder %s97, %s99
    %p103 = scmp.eq.s32.totalorder %s21, 0
    %p104 = por %p102, %p103
    %p105 = scmp.ne.s32.totalorder %s97, %s99
    %p106 = scmp.eq.s32.totalorder %s26, 1
    %p107 = por %p105, %p106
    %p108 = scmp.ne.s32.totalorder %s99, %s100
    %p109 = scmp.eq.s32.totalorder %s26, 0
    %p110 = por %p108, %p109
    %p111 = scmp.ne.s32.totalorder %s99, %s100
    %p112 = scmp.eq.s32.totalorder %s27, 1
    %p113 = por %p111, %p112
    %p115 = scmp.ne.s32.totalorder %s100, %s114
    %p116 = scmp.eq.s32.totalorder %s27, 0
    %p117 = por %p115, %p116
    %s119 = sadd.s32 %s118, 1
    %p122 = scmp.eq.s32.totalorder %s21, 1
    %p123 = scmp.ne.s32.totalorder %s118, %s120
    %p124 = scmp.eq.s32.totalorder %s21, 0
    %p125 = por %p123, %p124
    %p126 = scmp.ne.s32.totalorder %s118, %s120
    %p127 = scmp.eq.s32.totalorder %s26, 1
    %p128 = por %p126, %p127
    %p129 = scmp.ne.s32.totalorder %s120, %s121
    %p130 = scmp.eq.s32.totalorder %s26, 0
    %p131 = por %p129, %p130
    %p132 = scmp.ne.s32.totalorder %s120, %s121
    %p133 = scmp.eq.s32.totalorder %s27, 1
    %p134 = por %p132, %p133
    %p136 = scmp.ne.s32.totalorder %s121, %s135
    %p137 = scmp.eq.s32.totalorder %s27, 0
    %p138 = por %p136, %p137
    %s140 = sadd.s32 %s139, 1
    %p143 = scmp.eq.s32.totalorder %s21, 1
    %p144 = scmp.ne.s32.totalorder %s139, %s141
    %p145 = scmp.eq.s32.totalorder %s21, 0
    %p146 = por %p144, %p145
    %p147 = scmp.ne.s32.totalorder %s139, %s141
    %p148 = scmp.eq.s32.totalorder %s26, 1
    %p149 = por %p147, %p148
    %p150 = scmp.ne.s32.totalorder %s141, %s142
    %p151 = scmp.eq.s32.totalorder %s26, 0
    %p152 = por %p150, %p151
    %p153 = scmp.ne.s32.totalorder %s141, %s142
    %p154 = scmp.eq.s32.totalorder %s27, 1
    %p155 = por %p153, %p154
    %p157 = scmp.ne.s32.totalorder %s142, %s156
    %p158 = scmp.eq.s32.totalorder %s27, 0
    %p159 = por %p157, %p158
    %s161 = sadd.s32 %s160, 1
    %p164 = scmp.eq.s32.totalorder %s21, 1
    %p165 = scmp.ne.s32.totalorder %s160, %s162
    %p166 = scmp.eq.s32.totalorder %s21, 0
    %p167 = por %p165, %p166
    %p168 = scmp.ne.s32.totalorder %s160, %s162
    %p169 = scmp.eq.s32.totalorder %s26, 1
    %p170 = por %p168, %p169
    %p171 = scmp.ne.s32.totalorder %s162, %s163
    %p172 = scmp.eq.s32.totalorder %s26, 0
    %p173 = por %p171, %p172
    %p174 = scmp.ne.s32.totalorder %s162, %s163
    %p175 = scmp.eq.s32.totalorder %s27, 1
    %p176 = por %p174, %p175
    %p178 = scmp.ne.s32.totalorder %s163, %s177
    %p179 = scmp.eq.s32.totalorder %s27, 0
    %p180 = por %p178, %p179
    %s182 = sadd.s32 %s181, 1
    %p185 = scmp.eq.s32.totalorder %s21, 1
    %p186 = scmp.ne.s32.totalorder %s181, %s183
    %p187 = scmp.eq.s32.totalorder %s21, 0
    %p188 = por %p186, %p187
    %p189 = scmp.ne.s32.totalorder %s181, %s183
    %p190 = scmp.eq.s32.totalorder %s26, 1
    %p191 = por %p189, %p190
    %p192 = scmp.ne.s32.totalorder %s183, %s184
    %p193 = scmp.eq.s32.totalorder %s26, 0
    %p194 = por %p192, %p193
    %p195 = scmp.ne.s32.totalorder %s183, %s184
    %p196 = scmp.eq.s32.totalorder %s27, 1
    %p197 = por %p195, %p196
    %p199 = scmp.ne.s32.totalorder %s184, %s198
    %p200 = scmp.eq.s32.totalorder %s27, 0
    %p201 = por %p199, %p200
    %s203 = sadd.s32 %s202, 1
    %p206 = scmp.eq.s32.totalorder %s21, 1
    %p207 = scmp.ne.s32.totalorder %s202, %s204
    %p208 = scmp.eq.s32.totalorder %s21, 0
    %p209 = por %p207, %p208
    %p210 = scmp.ne.s32.totalorder %s202, %s204
    %p211 = scmp.eq.s32.totalorder %s26, 1
    %p212 = por %p210, %p211
    %p213 = scmp.ne.s32.totalorder %s204, %s205
    %p214 = scmp.eq.s32.totalorder %s26, 0
    %p215 = por %p213, %p214
    %p216 = scmp.ne.s32.totalorder %s204, %s205
    %p217 = scmp.eq.s32.totalorder %s27, 1
    %p218 = por %p216, %p217
    %p220 = scmp.ne.s32.totalorder %s205, %s219
    %p221 = scmp.eq.s32.totalorder %s27, 0
    %p222 = por %p220, %p221
    %s224 = sadd.s32 %s223, 1
    %p227 = scmp.eq.s32.totalorder %s21, 1
    %p228 = scmp.ne.s32.totalorder %s223, %s225
    %p229 = scmp.eq.s32.totalorder %s21, 0
    %p230 = por %p228, %p229
    %p231 = scmp.ne.s32.totalorder %s223, %s225
    %p232 = scmp.eq.s32.totalorder %s26, 1
    %p233 = por %p231, %p232
    %p234 = scmp.ne.s32.totalorder %s225, %s226
    %p235 = scmp.eq.s32.totalorder %s26, 0
    %p236 = por %p234, %p235
    %p237 = scmp.ne.s32.totalorder %s225, %s226
    %p238 = scmp.eq.s32.totalorder %s27, 1
    %p239 = por %p237, %p238
    %p241 = scmp.ne.s32.totalorder %s226, %s240
    %p242 = scmp.eq.s32.totalorder %s27, 0
    %p243 = por %p241, %p242
    %s245 = sadd.s32 %s244, 1
    %p248 = scmp.eq.s32.totalorder %s21, 1
    %p249 = scmp.ne.s32.totalorder %s244, %s246
    %p250 = scmp.eq.s32.totalorder %s21, 0
    %p251 = por %p249, %p250
    %p252 = scmp.ne.s32.totalorder %s244, %s246
    %p253 = scmp.eq.s32.totalorder %s26, 1
    %p254 = por %p252, %p253
    %p255 = scmp.ne.s32.totalorder %s246, %s247
    %p256 = scmp.eq.s32.totalorder %s26, 0
    %p257 = por %p255, %p256
    %p258 = scmp.ne.s32.totalorder %s246, %s247
    %p259 = scmp.eq.s32.totalorder %s27, 1
    %p260 = por %p258, %p259
    %p262 = scmp.ne.s32.totalorder %s247, %s261
    %p263 = scmp.eq.s32.totalorder %s27, 0
    %p264 = por %p262, %p263
    %s266 = sadd.s32 %s265, 1
    %p269 = scmp.eq.s32.totalorder %s21, 1
    %p270 = scmp.ne.s32.totalorder %s265, %s267
    %p271 = scmp.eq.s32.totalorder %s21, 0
    %p272 = por %p270, %p271
    %p273 = scmp.ne.s32.totalorder %s265, %s267
    %p274 = scmp.eq.s32.totalorder %s26, 1
    %p275 = por %p273, %p274
    %p276 = scmp.ne.s32.totalorder %s267, %s268
    %p277 = scmp.eq.s32.totalorder %s26, 0
    %p278 = por %p276, %p277
    %p279 = scmp.ne.s32.totalorder %s267, %s268
    %p280 = scmp.eq.s32.totalorder %s27, 1
    %p281 = por %p279, %p280
    %p283 = scmp.ne.s32.totalorder %s268, %s282
    %p284 = scmp.eq.s32.totalorder %s27, 0
    %p285 = por %p283, %p284
    %s287 = sadd.s32 %s286, 1
    %p290 = scmp.eq.s32.totalorder %s21, 1
    %p291 = scmp.ne.s32.totalorder %s286, %s288
    %p292 = scmp.eq.s32.totalorder %s21, 0
    %p293 = por %p291, %p292
    %p294 = scmp.ne.s32.totalorder %s286, %s288
    %p295 = scmp.eq.s32.totalorder %s26, 1
    %p296 = por %p294, %p295
    %p297 = scmp.ne.s32.totalorder %s288, %s289
    %p298 = scmp.eq.s32.totalorder %s26, 0
    %p299 = por %p297, %p298
    %p300 = scmp.ne.s32.totalorder %s288, %s289
    %p301 = scmp.eq.s32.totalorder %s27, 1
    %p302 = por %p300, %p301
    %p304 = scmp.ne.s32.totalorder %s289, %s303
    %p305 = scmp.eq.s32.totalorder %s27, 0
    %p306 = por %p304, %p305
    %s308 = sadd.s32 %s307, 1
    %p311 = scmp.eq.s32.totalorder %s21, 1
    %p312 = scmp.ne.s32.totalorder %s307, %s309
    %p313 = scmp.eq.s32.totalorder %s21, 0
    %p314 = por %p312, %p313
    %p315 = scmp.ne.s32.totalorder %s307, %s309
    %p316 = scmp.eq.s32.totalorder %s26, 1
    %p317 = por %p315, %p316
    %p318 = scmp.ne.s32.totalorder %s309, %s310
    %p319 = scmp.eq.s32.totalorder %s26, 0
    %p320 = por %p318, %p319
    %p321 = scmp.ne.s32.totalorder %s309, %s310
    %p322 = scmp.eq.s32.totalorder %s27, 1
    %p323 = por %p321, %p322
    %p325 = scmp.ne.s32.totalorder %s310, %s324
    %p326 = scmp.eq.s32.totalorder %s27, 0
    %p327 = por %p325, %p326
    %s329 = sadd.s32 %s328, 1
    %p332 = scmp.eq.s32.totalorder %s21, 1
    %p333 = scmp.ne.s32.totalorder %s328, %s330
    %p334 = scmp.eq.s32.totalorder %s21, 0
    %p335 = por %p333, %p334
    %p336 = scmp.ne.s32.totalorder %s328, %s330
    %p337 = scmp.eq.s32.totalorder %s26, 1
    %p338 = por %p336, %p337
    %p339 = scmp.ne.s32.totalorder %s330, %s331
    %p340 = scmp.eq.s32.totalorder %s26, 0
    %p341 = por %p339, %p340
    %p342 = scmp.ne.s32.totalorder %s330, %s331
    %p343 = scmp.eq.s32.totalorder %s27, 1
    %p344 = por %p342, %p343
    %p346 = scmp.ne.s32.totalorder %s331, %s345
    %p347 = scmp.eq.s32.totalorder %s27, 0
    %p348 = por %p346, %p347
    %s349 = ssub.s32 %s21, %s28
    %p350 = scmp.eq.s32.totalorder %s349, 0
    %s352 = sadd.s32 %s351, 1
    %s353 = scalar_select %p350, %s351, %s352
    %p356 = pneg %p350
    %p357 = scmp.eq.s32.totalorder %s21, 1
    %p358 = por %p356, %p357
    %p359 = scmp.ne.s32.totalorder %s351, %s354
    %p360 = scmp.eq.s32.totalorder %s21, 0
    %p361 = por %p359, %p360
    %p362 = scmp.ne.s32.totalorder %s351, %s354
    %p363 = scmp.eq.s32.totalorder %s26, 1
    %p364 = por %p362, %p363
    %p365 = scmp.ne.s32.totalorder %s354, %s355
    %p366 = scmp.eq.s32.totalorder %s26, 0
    %p367 = por %p365, %p366
    %p368 = scmp.ne.s32.totalorder %s354, %s355
    %p369 = scmp.eq.s32.totalorder %s27, 1
    %p370 = por %p368, %p369
    %p372 = scmp.ne.s32.totalorder %s355, %s371
    %p373 = scmp.eq.s32.totalorder %s27, 0
    %p374 = por %p372, %p373
    %p375 = scmp.le.s32.totalorder 1, %s21
    %p376 = scmp.lt.s32.totalorder %s21, 3
    %p377 = pnand %p375, %p376
    %p378 = pneg %p377
    // Predicated region
    $region9: #{custom_model_forward.1} parent=5 // pred_check
      _
    $region10: #{custom_model_forward.1} parent=5 // pred_check_branch
      %380 = sbr.rel (%p377) target = $region12
    $region11: #{custom_model_forward.1} parent=5 // pred_region
      %s381 = ssub.s32 %s21, 1
      // Predicated region
      $region13: #{custom_model_forward.1} parent=11 // pred_check
        %p382 = pneg %p68
      $region14: #{custom_model_forward.1} parent=11 // pred_check_branch
        %384 = sbr.rel (%p382) target = $region16
      $region15: #{custom_model_forward.1} parent=11 // pred_region
        _
      $region16: #{custom_model_forward.1} parent=11 // pred_fallthru
        _
      // Predicated region
      $region17: #{custom_model_forward.1} parent=11 // pred_check
        %p385 = pneg %p89
      $region18: #{custom_model_forward.1} parent=11 // pred_check_branch
        %387 = sbr.rel (%p385) target = $region20
      $region19: #{custom_model_forward.1} parent=11 // pred_region
        _
      $region20: #{custom_model_forward.1} parent=11 // pred_fallthru
        _
      // Predicated region
      $region21: #{custom_model_forward.1} parent=11 // pred_check
        %p388 = pneg %p110
      $region22: #{custom_model_forward.1} parent=11 // pred_check_branch
        %390 = sbr.rel (%p388) target = $region24
      $region23: #{custom_model_forward.1} parent=11 // pred_region
        _
      $region24: #{custom_model_forward.1} parent=11 // pred_fallthru
        _
      // Predicated region
      $region25: #{custom_model_forward.1} parent=11 // pred_check
        %p391 = pneg %p131
      $region26: #{custom_model_forward.1} parent=11 // pred_check_branch
        %393 = sbr.rel (%p391) target = $region28
      $region27: #{custom_model_forward.1} parent=11 // pred_region
        _
      $region28: #{custom_model_forward.1} parent=11 // pred_fallthru
        _
      // Predicated region
      $region29: #{custom_model_forward.1} parent=11 // pred_check
        %p394 = pneg %p152
      $region30: #{custom_model_forward.1} parent=11 // pred_check_branch
        %396 = sbr.rel (%p394) target = $region32
      $region31: #{custom_model_forward.1} parent=11 // pred_region
        _
      $region32: #{custom_model_forward.1} parent=11 // pred_fallthru
        _
      // Predicated region
      $region33: #{custom_model_forward.1} parent=11 // pred_check
        %p397 = pneg %p173
      $region34: #{custom_model_forward.1} parent=11 // pred_check_branch
        %399 = sbr.rel (%p397) target = $region36
      $region35: #{custom_model_forward.1} parent=11 // pred_region
        _
      $region36: #{custom_model_forward.1} parent=11 // pred_fallthru
        _
      // Predicated region
      $region37: #{custom_model_forward.1} parent=11 // pred_check
        %p400 = pneg %p194
      $region38: #{custom_model_forward.1} parent=11 // pred_check_branch
        %402 = sbr.rel (%p400) target = $region40
      $region39: #{custom_model_forward.1} parent=11 // pred_region
        _
      $region40: #{custom_model_forward.1} parent=11 // pred_fallthru
        _
      // Predicated region
      $region41: #{custom_model_forward.1} parent=11 // pred_check
        %p403 = pneg %p215
      $region42: #{custom_model_forward.1} parent=11 // pred_check_branch
        %405 = sbr.rel (%p403) target = $region44
      $region43: #{custom_model_forward.1} parent=11 // pred_region
        _
      $region44: #{custom_model_forward.1} parent=11 // pred_fallthru
        _
      // Predicated region
      $region45: #{custom_model_forward.1} parent=11 // pred_check
        %p406 = pneg %p236
      $region46: #{custom_model_forward.1} parent=11 // pred_check_branch
        %408 = sbr.rel (%p406) target = $region48
      $region47: #{custom_model_forward.1} parent=11 // pred_region
        _
      $region48: #{custom_model_forward.1} parent=11 // pred_fallthru
        _
      // Predicated region
      $region49: #{custom_model_forward.1} parent=11 // pred_check
        %p409 = pneg %p257
      $region50: #{custom_model_forward.1} parent=11 // pred_check_branch
        %411 = sbr.rel (%p409) target = $region52
      $region51: #{custom_model_forward.1} parent=11 // pred_region
        _
      $region52: #{custom_model_forward.1} parent=11 // pred_fallthru
        _
      // Predicated region
      $region53: #{custom_model_forward.1} parent=11 // pred_check
        %p412 = pneg %p278
      $region54: #{custom_model_forward.1} parent=11 // pred_check_branch
        %414 = sbr.rel (%p412) target = $region56
      $region55: #{custom_model_forward.1} parent=11 // pred_region
        _
      $region56: #{custom_model_forward.1} parent=11 // pred_fallthru
        _
      // Predicated region
      $region57: #{custom_model_forward.1} parent=11 // pred_check
        %p415 = pneg %p299
      $region58: #{custom_model_forward.1} parent=11 // pred_check_branch
        %417 = sbr.rel (%p415) target = $region60
      $region59: #{custom_model_forward.1} parent=11 // pred_region
        _
      $region60: #{custom_model_forward.1} parent=11 // pred_fallthru
        _
      // Predicated region
      $region61: #{custom_model_forward.1} parent=11 // pred_check
        %p418 = pneg %p320
      $region62: #{custom_model_forward.1} parent=11 // pred_check_branch
        %420 = sbr.rel (%p418) target = $region64
      $region63: #{custom_model_forward.1} parent=11 // pred_region
        _
      $region64: #{custom_model_forward.1} parent=11 // pred_fallthru
        _
      // Predicated region
      $region65: #{custom_model_forward.1} parent=11 // pred_check
        %p421 = pneg %p341
      $region66: #{custom_model_forward.1} parent=11 // pred_check_branch
        %423 = sbr.rel (%p421) target = $region68
      $region67: #{custom_model_forward.1} parent=11 // pred_region
        _
      $region68: #{custom_model_forward.1} parent=11 // pred_fallthru
        _
    $region12: #{custom_model_forward.1} parent=5 // pred_fallthru
      _
    %p424 = scmp.lt.s32.totalorder %s21, 2
    // Predicated region
    $region69: #{custom_model_forward.1} parent=5 // pred_check
      %p425 = pneg %p424
    $region70: #{custom_model_forward.1} parent=5 // pred_check_branch
      %427 = sbr.rel (%p425) target = $region72
    $region71: #{custom_model_forward.1} parent=5 // pred_region
      // Predicated region
      $region73: #{custom_model_forward.1} parent=71 // pred_check
        %p428 = pneg %p41
      $region74: #{custom_model_forward.1} parent=71 // pred_check_branch
        %430 = sbr.rel (%p428) target = $region76
      $region75: #{custom_model_forward.1} parent=71 // pred_region
        %p431 = scmp.lt.s32.totalorder %s21, 1
        %s432 = scalar_select %p431, %s21, 1
        %s433 = smul.addr %s432, 2
        %s434 = smul.addr %s433, 8
        %s435 = scalar_lea.vmem %s0, %s434
      $region76: #{custom_model_forward.1} parent=71 // pred_fallthru
        _
    $region72: #{custom_model_forward.1} parent=5 // pred_fallthru
      _
    %p436 = scmp.le.s32.totalorder 1, %s21
    %p437 = scmp.lt.s32.totalorder %s21, 3
    %p438 = pnand %p436, %p437
    %p439 = pneg %p438
    // Predicated region
    $region77: #{custom_model_forward.1} parent=5 // pred_check
      _
    $region78: #{custom_model_forward.1} parent=5 // pred_check_branch
      %441 = sbr.rel (%p438) target = $region80
    $region79: #{custom_model_forward.1} parent=5 // pred_region
      %s442 = ssub.s32 %s21, 1
      %p443 = scmp.lt.s32.totalorder %s26, 1
      %s444 = scalar_select %p443, %s26, 1
      %s445 = smul.addr %s444, 2
      %s446 = smul.addr %s445, 8
      %s447 = scalar_lea.vmem %s0, %s446
      %p448 = pneg %p47
      %p449 = pneg %p44
      %p450 = pneg %p68
      %p451 = pneg %p65
      %p452 = pneg %p89
      %p453 = pneg %p86
      %p454 = pneg %p110
      %p455 = pneg %p107
      %p456 = pneg %p131
      %p457 = pneg %p128
      %p458 = pneg %p152
      %p459 = pneg %p149
      %p460 = pneg %p173
      %p461 = pneg %p170
      %p462 = pneg %p194
      %p463 = pneg %p191
      %p464 = pneg %p215
      %p465 = pneg %p212
      %p466 = pneg %p236
      %p467 = pneg %p233
      %p468 = pneg %p257
      %p469 = pneg %p254
      %p470 = pneg %p278
      %p471 = pneg %p275
      %p472 = pneg %p299
      %p473 = pneg %p296
      %p474 = pneg %p320
      %p475 = pneg %p317
      %p476 = pneg %p341
      %p477 = pneg %p338
      %p478 = pneg %p367
      %p479 = pneg %p364
      %p480 = scmp.lt.s32.totalorder %s26, 1
      %s481 = scalar_select %p480, %s26, 1
      %s482 = smul.addr %s481, 4
      %s483 = smul.addr %s482, 8
      %s484 = scalar_lea.vmem %s15, %s483
      %p485 = scmp.lt.s32.totalorder %s26, 1
      %s486 = scalar_select %p485, %s26, 1
      %s487 = smul.addr %s486, 2
      %s488 = smul.addr %s487, 8
      %s489 = scalar_lea.vmem %s0, %s488
      %p490 = scmp.lt.s32.totalorder %s26, 1
      %s491 = scalar_select %p490, %s26, 1
      %s492 = smul.addr %s491, 4
      %s493 = smul.addr %s492, 8
      %s494 = scalar_lea.vmem %s15, %s493
      %v495 = vld [vmem:[%s489] sm:$0xff]
      %v496 = vld [vmem:[%s489 + $0x8] sm:$0xff]
      %v497 = vlaneseq
      %v498 = vshrl.u32 %v497, 7
      %v499 = vadd.s32 %v498, 8
      %v500 = vlaneseq
      %v501 = vand.u32 %v500, 127
      %v502 = vadd.s32 %v498, 4294967295
      %v503 = vadd.s32 %v499, 4294967295
      %vm504 = vcmp.eq.s32.totalorder %v501, %v502
      %vm505 = vcmp.eq.s32.totalorder %v501, %v503
      %v506 = vsel %vm504, 1, 0
      %v507 = vsel %vm505, 1, 0
      %v508 = vcvt.s32.f32 %v506
      %v509 = vcvt.s32.f32 %v507
      %vm510 = vcmask 130048
      %v512 = vsel %vm510, %v508, 0
      %v515 = vsel %vm510, %v509, 0
      %517 = vmatpush.msra.mxu0 0.0
      %518 = vmatpush.msra.mxu0 0.0
      %519 = vmatpush.msra.mxu0 0.0
      %520 = vmatpush.msra.mxu0 0.0
      %521 = vmatpush.msra.mxu0 0.0
      %522 = vmatpush.msra.mxu0 0.0
      %523 = vmatpush.msra.mxu0 0.0
      %524 = vmatpush.msra.mxu0 0.0
      %525 = vmatpush.msra.mxu0 0.0
      %526 = vmatpush.msra.mxu0 0.0
      %527 = vmatpush.msra.mxu0 0.0
      %528 = vmatpush.msra.mxu0 0.0
      %529 = vmatpush.msra.mxu0 0.0
      %530 = vmatpush.msra.mxu0 0.0
      %531 = vmatpush.msra.mxu0 %v496
      %532 = vmatpush.msra.mxu0 %v495
      %533 = vmatmul.f32.gmra.mxu0 %v512
      %v534 = vpop.f32.mrf.mxu0
      %v535 = vadd.f32 0.0, %v534
      %536 = vmatmul.f32.gmra.mxu0 %v515
      %v537 = vpop.f32.mrf.mxu0
      %v538 = vadd.f32 0.0, %v537
      %539 = vdwg.mxu0
      %v540 = vld [vmem:[%s1] sm:$0xff]
      %v541 = vld [vmem:[%s1 + $0x8] sm:$0xff]
      %v542 = vld [vmem:[%s1 + $0x10] sm:$0xff]
      %v543 = vld [vmem:[%s1 + $0x18] sm:$0xff]
      %v544 = vld [vmem:[%s1 + $0x20] sm:$0xff]
      %v545 = vld [vmem:[%s1 + $0x28] sm:$0xff]
      %vm546 = vcmp.eq.s32.totalorder %v501, %v498
      %vm547 = vcmp.eq.s32.totalorder %v501, %v499
      %v548 = vsel %vm546, 1, 0
      %v549 = vsel %vm547, 1, 0
      %v550 = vcvt.s32.f32 %v548
      %v551 = vcvt.s32.f32 %v549
      %v553 = vsel %vm510, %v550, 0
      %v556 = vsel %vm510, %v551, 0
      %558 = vmatpush.msra.mxu0 0.0
      %559 = vmatpush.msra.mxu0 0.0
      %560 = vmatpush.msra.mxu0 0.0
      %561 = vmatpush.msra.mxu0 0.0
      %562 = vmatpush.msra.mxu0 0.0
      %563 = vmatpush.msra.mxu0 0.0
      %564 = vmatpush.msra.mxu0 0.0
      %565 = vmatpush.msra.mxu0 0.0
      %566 = vmatpush.msra.mxu0 0.0
      %567 = vmatpush.msra.mxu0 0.0
      %568 = vmatpush.msra.mxu0 0.0
      %569 = vmatpush.msra.mxu0 0.0
      %570 = vmatpush.msra.mxu0 0.0
      %571 = vmatpush.msra.mxu0 0.0
      %572 = vmatpush.msra.mxu0 %v496
      %573 = vmatpush.msra.mxu0 %v495
      %574 = vmatmul.f32.gmra.mxu0 %v553
      %v575 = vpop.f32.mrf.mxu0
      %v576 = vadd.f32 0.0, %v575
      %577 = vmatmul.f32.gmra.mxu0 %v556
      %v578 = vpop.f32.mrf.mxu0
      %v579 = vadd.f32 0.0, %v578
      %580 = vdwg.mxu0
      %s581 = scalar_lea.vmem %s1, 48
      %v582 = vld [vmem:[%s581] sm:$0xff]
      %v583 = vld [vmem:[%s581 + $0x8] sm:$0xff]
      %v584 = vld [vmem:[%s581 + $0x10] sm:$0xff]
      %v585 = vld [vmem:[%s581 + $0x18] sm:$0xff]
      %v586 = vld [vmem:[%s581 + $0x20] sm:$0xff]
      %v587 = vld [vmem:[%s581 + $0x28] sm:$0xff]
      %vm588 = vcmask 392192
      %v590 = vsel %vm588, %v576, 0
      %v593 = vsel %vm588, %v579, 0
      %595 = vmatpush.msra.mxu0 0.0
      %596 = vmatpush.msra.mxu0 0.0
      %597 = vmatpush.msra.mxu0 0.0
      %598 = vmatpush.msra.mxu0 0.0
      %599 = vmatpush.msra.mxu0 0.0
      %600 = vmatpush.msra.mxu0 0.0
      %601 = vmatpush.msra.mxu0 0.0
      %602 = vmatpush.msra.mxu0 0.0
      %603 = vmatpush.msra.mxu0 0.0
      %604 = vmatpush.msra.mxu0 0.0
      %605 = vmatpush.msra.mxu0 %v587
      %606 = vmatpush.msra.mxu0 %v586
      %607 = vmatpush.msra.mxu0 %v585
      %608 = vmatpush.msra.mxu0 %v584
      %609 = vmatpush.msra.mxu0 %v583
      %610 = vmatpush.msra.mxu0 %v582
      %611 = vmatmul.f32.gmra.mxu0 %v590
      %v612 = vpop.f32.mrf.mxu0
      %v613 = vadd.f32 0.0, %v612
      %614 = vmatmul.f32.gmra.mxu0 %v593
      %v615 = vpop.f32.mrf.mxu0
      %v616 = vadd.f32 0.0, %v615
      %617 = vdwg.mxu0
      %v619 = vsel %vm588, %v535, 0
      %v622 = vsel %vm588, %v538, 0
      %624 = vmatpush.msra.mxu0 0.0
      %625 = vmatpush.msra.mxu0 0.0
      %626 = vmatpush.msra.mxu0 0.0
      %627 = vmatpush.msra.mxu0 0.0
      %628 = vmatpush.msra.mxu0 0.0
      %629 = vmatpush.msra.mxu0 0.0
      %630 = vmatpush.msra.mxu0 0.0
      %631 = vmatpush.msra.mxu0 0.0
      %632 = vmatpush.msra.mxu0 0.0
      %633 = vmatpush.msra.mxu0 0.0
      %634 = vmatpush.msra.mxu0 %v545
      %635 = vmatpush.msra.mxu0 %v544
      %636 = vmatpush.msra.mxu0 %v543
      %637 = vmatpush.msra.mxu0 %v542
      %638 = vmatpush.msra.mxu0 %v541
      %639 = vmatpush.msra.mxu0 %v540
      %640 = vmatmul.f32.gmra.mxu0 %v619
      %v641 = vpop.f32.mrf.mxu0
      %v642 = vadd.f32 %v613, %v641
      %643 = vmatmul.f32.gmra.mxu0 %v622
      %v644 = vpop.f32.mrf.mxu0
      %v645 = vadd.f32 %v616, %v644
      %646 = vdwg.mxu0
      %v647 = vadd.s32 %v498, 1
      %v648 = vadd.s32 %v499, 1
      %vm649 = vcmp.eq.s32.totalorder %v501, %v647
      %vm650 = vcmp.eq.s32.totalorder %v501, %v648
      %v651 = vsel %vm649, 1, 0
      %v652 = vsel %vm650, 1, 0
      %v653 = vcvt.s32.f32 %v651
      %v654 = vcvt.s32.f32 %v652
      %v656 = vsel %vm510, %v653, 0
      %v659 = vsel %vm510, %v654, 0
      %661 = vmatpush.msra.mxu0 0.0
      %662 = vmatpush.msra.mxu0 0.0
      %663 = vmatpush.msra.mxu0 0.0
      %664 = vmatpush.msra.mxu0 0.0
      %665 = vmatpush.msra.mxu0 0.0
      %666 = vmatpush.msra.mxu0 0.0
      %667 = vmatpush.msra.mxu0 0.0
      %668 = vmatpush.msra.mxu0 0.0
      %669 = vmatpush.msra.mxu0 0.0
      %670 = vmatpush.msra.mxu0 0.0
      %671 = vmatpush.msra.mxu0 0.0
      %672 = vmatpush.msra.mxu0 0.0
      %673 = vmatpush.msra.mxu0 0.0
      %674 = vmatpush.msra.mxu0 0.0
      %675 = vmatpush.msra.mxu0 %v496
      %676 = vmatpush.msra.mxu0 %v495
      %677 = vmatmul.f32.gmra.mxu0 %v656
      %v678 = vpop.f32.mrf.mxu0
      %v679 = vadd.f32 0.0, %v678
      %680 = vmatmul.f32.gmra.mxu0 %v659
      %v681 = vpop.f32.mrf.mxu0
      %v682 = vadd.f32 0.0, %v681
      %683 = vdwg.mxu0
      %s684 = scalar_lea.vmem %s1, 96
      %v685 = vld [vmem:[%s684] sm:$0xff]
      %v686 = vld [vmem:[%s684 + $0x8] sm:$0xff]
      %v687 = vld [vmem:[%s684 + $0x10] sm:$0xff]
      %v688 = vld [vmem:[%s684 + $0x18] sm:$0xff]
      %v689 = vld [vmem:[%s684 + $0x20] sm:$0xff]
      %v690 = vld [vmem:[%s684 + $0x28] sm:$0xff]
      %v692 = vsel %vm588, %v679, 0
      %v695 = vsel %vm588, %v682, 0
      %697 = vmatpush.msra.mxu0 0.0
      %698 = vmatpush.msra.mxu0 0.0
      %699 = vmatpush.msra.mxu0 0.0
      %700 = vmatpush.msra.mxu0 0.0
      %701 = vmatpush.msra.mxu0 0.0
      %702 = vmatpush.msra.mxu0 0.0
      %703 = vmatpush.msra.mxu0 0.0
      %704 = vmatpush.msra.mxu0 0.0
      %705 = vmatpush.msra.mxu0 0.0
      %706 = vmatpush.msra.mxu0 0.0
      %707 = vmatpush.msra.mxu0 %v690
      %708 = vmatpush.msra.mxu0 %v689
      %709 = vmatpush.msra.mxu0 %v688
      %710 = vmatpush.msra.mxu0 %v687
      %711 = vmatpush.msra.mxu0 %v686
      %712 = vmatpush.msra.mxu0 %v685
      %713 = vmatmul.f32.gmra.mxu0 %v692
      %v714 = vpop.f32.mrf.mxu0
      %v715 = vadd.f32 0.0, %v714
      %716 = vmatmul.f32.gmra.mxu0 %v695
      %v717 = vpop.f32.mrf.mxu0
      %v718 = vadd.f32 0.0, %v717
      %719 = vdwg.mxu0
      %v720 = vadd.f32 %v642, %v715
      %v721 = vadd.f32 %v645, %v718
      %v722 = vld [vmem:[%s2] sm:$0x1]
      %v723 = vperm.slane %v722, 0
      %v724 = vadd.f32 %v720, %v723
      %v725 = vadd.f32 %v721, %v723
      %vm726 = vcmask 523264
      %v727 = vsel %vm726, %v724, 0.0
      %v728 = vsel %vm726, %v725, 0.0
      %v729 = vadd.f32 %v727, %v728
      %730 = vadd.xlane.f32.xlu0 %v729
      %v731 = vpop.xlane.xlu0 %730
      %v732 = vrot.slane %v731, 4
      %v733 = vadd.f32 %v731, %v732
      %v734 = vrot.slane %v733, 2
      %v735 = vadd.f32 %v733, %v734
      %v736 = vrot.slane %v735, 1
      %v737 = vadd.f32 %v735, %v736
      %s738 = vtos %v737
      %v739 = vrcp.pop 1024.0
      %v740 = vmul.f32 1024.0, %v739
      %v741 = vsub.f32 1.0, %v740
      %v742 = vmul.f32 %v739, %v741
      %v743 = vadd.f32 %v739, %v742
      %vm744 = vweird.f32 %v739
      %v745 = vsel %vm744, %v739, %v743
      %s746 = vtos %v745
      %s747 = smul.f32 %s738, %s746
      %v748 = vstv %s747
      %v749 = vsub.f32 %v724, %v748
      %v750 = vsub.f32 %v725, %v748
      %v751 = vmul.f32 %v749, %v749
      %v752 = vmul.f32 %v750, %v750
      %v753 = vsel %vm726, %v751, 0.0
      %v754 = vsel %vm726, %v752, 0.0
      %v755 = vadd.f32 %v753, %v754
      %756 = vadd.xlane.f32.xlu0 %v755
      %v757 = vpop.xlane.xlu0 %756
      %v758 = vrot.slane %v757, 4
      %v759 = vadd.f32 %v757, %v758
      %v760 = vrot.slane %v759, 2
      %v761 = vadd.f32 %v759, %v760
      %v762 = vrot.slane %v761, 1
      %v763 = vadd.f32 %v761, %v762
      %s764 = vtos %v763
      %v765 = vrcp.pop 1024.0
      %v766 = vmul.f32 1024.0, %v765
      %v767 = vsub.f32 1.0, %v766
      %v768 = vmul.f32 %v765, %v767
      %v769 = vadd.f32 %v765, %v768
      %vm770 = vweird.f32 %v765
      %v771 = vsel %vm770, %v765, %v769
      %s772 = vtos %v771
      %s773 = smul.f32 %s764, %s772
      %s774 = sadd.f32 %s773, 1e-05
      %v775 = vstv %s774
      %v776 = vrsqrt.pop %v775
      %v777 = vmul.f32 %v776, %v775
      %v778 = vmul.f32 %v777, %v776
      %v779 = vmul.f32 0.5, %v778
      %v780 = vsub.f32 1.5, %v779
      %v781 = vmul.f32 %v776, %v780
      %vm782 = vweird.f32 %v775
      %vm783 = vweird.f32 %v776
      %vm784 = vmor %vm782, %vm783
      %v785 = vsel %vm784, %v776, %v781
      %s786 = vtos %v785
      %v787 = vstv %s786
      %v788 = vmul.f32 %v749, %v787
      %v789 = vmul.f32 %v750, %v787
      %v790 = vld [vmem:[%s2 + $0x1] sm:$0x1]
      %v791 = vperm.slane %v790, 0
      %v792 = vmul.f32 %v788, %v791
      %v793 = vmul.f32 %v789, %v791
      %v794 = vld [vmem:[%s2 + $0x2] sm:$0x1]
      %v795 = vperm.slane %v794, 0
      %v796 = vadd.f32 %v792, %v795
      %v797 = vadd.f32 %v793, %v795
      %v798 = vmax.f32 %v796, 0.0
      %v799 = vmax.f32 %v797, 0.0
      %800 = vmatpush.msra.mxu0 0.0
      %801 = vmatpush.msra.mxu0 0.0
      %802 = vmatpush.msra.mxu0 0.0
      %803 = vmatpush.msra.mxu0 0.0
      %804 = vmatpush.msra.mxu0 0.0
      %805 = vmatpush.msra.mxu0 0.0
      %806 = vmatpush.msra.mxu0 0.0
      %807 = vmatpush.msra.mxu0 0.0
      %808 = vmatpush.msra.mxu0 0.0
      %809 = vmatpush.msra.mxu0 0.0
      %810 = vmatpush.msra.mxu0 0.0
      %811 = vmatpush.msra.mxu0 0.0
      %812 = vmatpush.msra.mxu0 0.0
      %813 = vmatpush.msra.mxu0 0.0
      %814 = vmatpush.msra.mxu0 %v799
      %815 = vmatpush.msra.mxu0 %v798
      %816 = vmatmul.f32.gmra.mxu0 %v512
      %v817 = vpop.f32.mrf.mxu0
      %v818 = vadd.f32 0.0, %v817
      %819 = vmatmul.f32.gmra.mxu0 %v515
      %v820 = vpop.f32.mrf.mxu0
      %v821 = vadd.f32 0.0, %v820
      %822 = vdwg.mxu0
      %v823 = vld [vmem:[%s3] sm:$0xff]
      %v824 = vld [vmem:[%s3 + $0x8] sm:$0xff]
      %v825 = vld [vmem:[%s3 + $0x10] sm:$0xff]
      %v826 = vld [vmem:[%s3 + $0x18] sm:$0xff]
      %v827 = vld [vmem:[%s3 + $0x20] sm:$0xff]
      %v828 = vld [vmem:[%s3 + $0x28] sm:$0xff]
      %v829 = vld [vmem:[%s3 + $0x30] sm:$0xff]
      %v830 = vld [vmem:[%s3 + $0x38] sm:$0xff]
      %831 = vmatpush.msra.mxu0 0.0
      %832 = vmatpush.msra.mxu0 0.0
      %833 = vmatpush.msra.mxu0 0.0
      %834 = vmatpush.msra.mxu0 0.0
      %835 = vmatpush.msra.mxu0 0.0
      %836 = vmatpush.msra.mxu0 0.0
      %837 = vmatpush.msra.mxu0 0.0
      %838 = vmatpush.msra.mxu0 0.0
      %839 = vmatpush.msra.mxu0 0.0
      %840 = vmatpush.msra.mxu0 0.0
      %841 = vmatpush.msra.mxu0 0.0
      %842 = vmatpush.msra.mxu0 0.0
      %843 = vmatpush.msra.mxu0 0.0
      %844 = vmatpush.msra.mxu0 0.0
      %845 = vmatpush.msra.mxu0 %v799
      %846 = vmatpush.msra.mxu0 %v798
      %847 = vmatmul.f32.gmra.mxu0 %v553
      %v848 = vpop.f32.mrf.mxu0
      %v849 = vadd.f32 0.0, %v848
      %850 = vmatmul.f32.gmra.mxu0 %v556
      %v851 = vpop.f32.mrf.mxu0
      %v852 = vadd.f32 0.0, %v851
      %853 = vdwg.mxu0
      %s854 = scalar_lea.vmem %s3, 64
      %v855 = vld [vmem:[%s854] sm:$0xff]
      %v856 = vld [vmem:[%s854 + $0x8] sm:$0xff]
      %v857 = vld [vmem:[%s854 + $0x10] sm:$0xff]
      %v858 = vld [vmem:[%s854 + $0x18] sm:$0xff]
      %v859 = vld [vmem:[%s854 + $0x20] sm:$0xff]
      %v860 = vld [vmem:[%s854 + $0x28] sm:$0xff]
      %v861 = vld [vmem:[%s854 + $0x30] sm:$0xff]
      %v862 = vld [vmem:[%s854 + $0x38] sm:$0xff]
      %v864 = vsel %vm726, %v849, 0
      %v867 = vsel %vm726, %v852, 0
      %869 = vmatpush.msra.mxu0 0.0
      %870 = vmatpush.msra.mxu0 0.0
      %871 = vmatpush.msra.mxu0 0.0
      %872 = vmatpush.msra.mxu0 0.0
      %873 = vmatpush.msra.mxu0 0.0
      %874 = vmatpush.msra.mxu0 0.0
      %875 = vmatpush.msra.mxu0 0.0
      %876 = vmatpush.msra.mxu0 0.0
      %877 = vmatpush.msra.mxu0 %v862
      %878 = vmatpush.msra.mxu0 %v861
      %879 = vmatpush.msra.mxu0 %v860
      %880 = vmatpush.msra.mxu0 %v859
      %881 = vmatpush.msra.mxu0 %v858
      %882 = vmatpush.msra.mxu0 %v857
      %883 = vmatpush.msra.mxu0 %v856
      %884 = vmatpush.msra.mxu0 %v855
      %885 = vmatmul.f32.gmra.mxu0 %v864
      %v886 = vpop.f32.mrf.mxu0
      %v887 = vadd.f32 0.0, %v886
      %888 = vmatmul.f32.gmra.mxu0 %v867
      %v889 = vpop.f32.mrf.mxu0
      %v890 = vadd.f32 0.0, %v889
      %891 = vdwg.mxu0
      %v893 = vsel %vm726, %v818, 0
      %v896 = vsel %vm726, %v821, 0
      %898 = vmatpush.msra.mxu0 0.0
      %899 = vmatpush.msra.mxu0 0.0
      %900 = vmatpush.msra.mxu0 0.0
      %901 = vmatpush.msra.mxu0 0.0
      %902 = vmatpush.msra.mxu0 0.0
      %903 = vmatpush.msra.mxu0 0.0
      %904 = vmatpush.msra.mxu0 0.0
      %905 = vmatpush.msra.mxu0 0.0
      %906 = vmatpush.msra.mxu0 %v830
      %907 = vmatpush.msra.mxu0 %v829
      %908 = vmatpush.msra.mxu0 %v828
      %909 = vmatpush.msra.mxu0 %v827
      %910 = vmatpush.msra.mxu0 %v826
      %911 = vmatpush.msra.mxu0 %v825
      %912 = vmatpush.msra.mxu0 %v824
      %913 = vmatpush.msra.mxu0 %v823
      %914 = vmatmul.f32.gmra.mxu0 %v893
      %v915 = vpop.f32.mrf.mxu0
      %v916 = vadd.f32 %v887, %v915
      %917 = vmatmul.f32.gmra.mxu0 %v896
      %v918 = vpop.f32.mrf.mxu0
      %v919 = vadd.f32 %v890, %v918
      %920 = vdwg.mxu0
      %921 = vmatpush.msra.mxu0 0.0
      %922 = vmatpush.msra.mxu0 0.0
      %923 = vmatpush.msra.mxu0 0.0
      %924 = vmatpush.msra.mxu0 0.0
      %925 = vmatpush.msra.mxu0 0.0
      %926 = vmatpush.msra.mxu0 0.0
      %927 = vmatpush.msra.mxu0 0.0
      %928 = vmatpush.msra.mxu0 0.0
      %929 = vmatpush.msra.mxu0 0.0
      %930 = vmatpush.msra.mxu0 0.0
      %931 = vmatpush.msra.mxu0 0.0
      %932 = vmatpush.msra.mxu0 0.0
      %933 = vmatpush.msra.mxu0 0.0
      %934 = vmatpush.msra.mxu0 0.0
      %935 = vmatpush.msra.mxu0 %v799
      %936 = vmatpush.msra.mxu0 %v798
      %937 = vmatmul.f32.gmra.mxu0 %v656
      %v938 = vpop.f32.mrf.mxu0
      %v939 = vadd.f32 0.0, %v938
      %940 = vmatmul.f32.gmra.mxu0 %v659
      %v941 = vpop.f32.mrf.mxu0
      %v942 = vadd.f32 0.0, %v941
      %943 = vdwg.mxu0
      %s944 = scalar_lea.vmem %s3, 128
      %v945 = vld [vmem:[%s944] sm:$0xff]
      %v946 = vld [vmem:[%s944 + $0x8] sm:$0xff]
      %v947 = vld [vmem:[%s944 + $0x10] sm:$0xff]
      %v948 = vld [vmem:[%s944 + $0x18] sm:$0xff]
      %v949 = vld [vmem:[%s944 + $0x20] sm:$0xff]
      %v950 = vld [vmem:[%s944 + $0x28] sm:$0xff]
      %v951 = vld [vmem:[%s944 + $0x30] sm:$0xff]
      %v952 = vld [vmem:[%s944 + $0x38] sm:$0xff]
      %v954 = vsel %vm726, %v939, 0
      %v957 = vsel %vm726, %v942, 0
      %959 = vmatpush.msra.mxu0 0.0
      %960 = vmatpush.msra.mxu0 0.0
      %961 = vmatpush.msra.mxu0 0.0
      %962 = vmatpush.msra.mxu0 0.0
      %963 = vmatpush.msra.mxu0 0.0
      %964 = vmatpush.msra.mxu0 0.0
      %965 = vmatpush.msra.mxu0 0.0
      %966 = vmatpush.msra.mxu0 0.0
      %967 = vmatpush.msra.mxu0 %v952
      %968 = vmatpush.msra.mxu0 %v951
      %969 = vmatpush.msra.mxu0 %v950
      %970 = vmatpush.msra.mxu0 %v949
      %971 = vmatpush.msra.mxu0 %v948
      %972 = vmatpush.msra.mxu0 %v947
      %973 = vmatpush.msra.mxu0 %v946
      %974 = vmatpush.msra.mxu0 %v945
      %975 = vmatmul.f32.gmra.mxu0 %v954
      %v976 = vpop.f32.mrf.mxu0
      %v977 = vadd.f32 0.0, %v976
      %978 = vmatmul.f32.gmra.mxu0 %v957
      %v979 = vpop.f32.mrf.mxu0
      %v980 = vadd.f32 0.0, %v979
      %981 = vdwg.mxu0
      %v982 = vadd.f32 %v916, %v977
      %v983 = vadd.f32 %v919, %v980
      %v984 = vld [vmem:[%s4] sm:$0x1]
      %v985 = vperm.slane %v984, 0
      %v986 = vadd.f32 %v982, %v985
      %v987 = vadd.f32 %v983, %v985
      %v988 = vadd.f32 %v986, %v987
      %989 = vadd.xlane.f32.xlu0 %v988
      %v990 = vpop.xlane.xlu0 %989
      %v991 = vrot.slane %v990, 4
      %v992 = vadd.f32 %v990, %v991
      %v993 = vrot.slane %v992, 2
      %v994 = vadd.f32 %v992, %v993
      %v995 = vrot.slane %v994, 1
      %v996 = vadd.f32 %v994, %v995
      %s997 = vtos %v996
      %v998 = vrcp.pop 2048.0
      %v999 = vmul.f32 2048.0, %v998
      %v1000 = vsub.f32 1.0, %v999
      %v1001 = vmul.f32 %v998, %v1000
      %v1002 = vadd.f32 %v998, %v1001
      %vm1003 = vweird.f32 %v998
      %v1004 = vsel %vm1003, %v998, %v1002
      %s1005 = vtos %v1004
      %s1006 = smul.f32 %s997, %s1005
      %v1007 = vstv %s1006
      %v1008 = vsub.f32 %v986, %v1007
      %v1009 = vsub.f32 %v987, %v1007
      %v1010 = vmul.f32 %v1008, %v1008
      %v1011 = vmul.f32 %v1009, %v1009
      %v1012 = vadd.f32 %v1010, %v1011
      %1013 = vadd.xlane.f32.xlu0 %v1012
      %v1014 = vpop.xlane.xlu0 %1013
      %v1015 = vrot.slane %v1014, 4
      %v1016 = vadd.f32 %v1014, %v1015
      %v1017 = vrot.slane %v1016, 2
      %v1018 = vadd.f32 %v1016, %v1017
      %v1019 = vrot.slane %v1018, 1
      %v1020 = vadd.f32 %v1018, %v1019
      %s1021 = vtos %v1020
      %v1022 = vrcp.pop 2048.0
      %v1023 = vmul.f32 2048.0, %v1022
      %v1024 = vsub.f32 1.0, %v1023
      %v1025 = vmul.f32 %v1022, %v1024
      %v1026 = vadd.f32 %v1022, %v1025
      %vm1027 = vweird.f32 %v1022
      %v1028 = vsel %vm1027, %v1022, %v1026
      %s1029 = vtos %v1028
      %s1030 = smul.f32 %s1021, %s1029
      %s1031 = sadd.f32 %s1030, 1e-05
      %v1032 = vstv %s1031
      %v1033 = vrsqrt.pop %v1032
      %v1034 = vmul.f32 %v1033, %v1032
      %v1035 = vmul.f32 %v1034, %v1033
      %v1036 = vmul.f32 0.5, %v1035
      %v1037 = vsub.f32 1.5, %v1036
      %v1038 = vmul.f32 %v1033, %v1037
      %vm1039 = vweird.f32 %v1032
      %vm1040 = vweird.f32 %v1033
      %vm1041 = vmor %vm1039, %vm1040
      %v1042 = vsel %vm1041, %v1033, %v1038
      %s1043 = vtos %v1042
      %v1044 = vstv %s1043
      %v1045 = vmul.f32 %v1008, %v1044
      %v1046 = vmul.f32 %v1009, %v1044
      %v1047 = vld [vmem:[%s4 + $0x1] sm:$0x1]
      %v1048 = vperm.slane %v1047, 0
      %v1049 = vmul.f32 %v1045, %v1048
      %v1050 = vmul.f32 %v1046, %v1048
      %v1051 = vld [vmem:[%s4 + $0x2] sm:$0x1]
      %v1052 = vperm.slane %v1051, 0
      %v1053 = vadd.f32 %v1049, %v1052
      %v1054 = vadd.f32 %v1050, %v1052
      %v1055 = vmax.f32 %v1053, 0.0
      %v1056 = vmax.f32 %v1054, 0.0
      %1057 = vmatpush.msra.mxu0 0.0
      %1058 = vmatpush.msra.mxu0 0.0
      %1059 = vmatpush.msra.mxu0 0.0
      %1060 = vmatpush.msra.mxu0 0.0
      %1061 = vmatpush.msra.mxu0 0.0
      %1062 = vmatpush.msra.mxu0 0.0
      %1063 = vmatpush.msra.mxu0 0.0
      %1064 = vmatpush.msra.mxu0 0.0
      %1065 = vmatpush.msra.mxu0 0.0
      %1066 = vmatpush.msra.mxu0 0.0
      %1067 = vmatpush.msra.mxu0 0.0
      %1068 = vmatpush.msra.mxu0 0.0
      %1069 = vmatpush.msra.mxu0 0.0
      %1070 = vmatpush.msra.mxu0 0.0
      %1071 = vmatpush.msra.mxu0 %v1056
      %1072 = vmatpush.msra.mxu0 %v1055
      %1073 = vmatmul.f32.gmra.mxu0 %v512
      %v1074 = vpop.f32.mrf.mxu0
      %v1075 = vadd.f32 0.0, %v1074
      %1076 = vmatmul.f32.gmra.mxu0 %v515
      %v1077 = vpop.f32.mrf.mxu0
      %v1078 = vadd.f32 0.0, %v1077
      %1079 = vdwg.mxu0
      %v1080 = vld [vmem:[%s5] sm:$0xff]
      %v1081 = vld [vmem:[%s5 + $0x8] sm:$0xff]
      %v1082 = vld [vmem:[%s5 + $0x10] sm:$0xff]
      %v1083 = vld [vmem:[%s5 + $0x18] sm:$0xff]
      %v1084 = vld [vmem:[%s5 + $0x20] sm:$0xff]
      %v1085 = vld [vmem:[%s5 + $0x28] sm:$0xff]
      %v1086 = vld [vmem:[%s5 + $0x30] sm:$0xff]
      %v1087 = vld [vmem:[%s5 + $0x38] sm:$0xff]
      %v1088 = vld [vmem:[%s5 + $0x40] sm:$0xff]
      %v1089 = vld [vmem:[%s5 + $0x48] sm:$0xff]
      %v1090 = vld [vmem:[%s5 + $0x50] sm:$0xff]
      %v1091 = vld [vmem:[%s5 + $0x58] sm:$0xff]
      %v1092 = vld [vmem:[%s5 + $0x60] sm:$0xff]
      %v1093 = vld [vmem:[%s5 + $0x68] sm:$0xff]
      %v1094 = vld [vmem:[%s5 + $0x70] sm:$0xff]
      %v1095 = vld [vmem:[%s5 + $0x78] sm:$0xff]
      %v1096 = vld [vmem:[%s5 + $0x80] sm:$0xff]
      %v1097 = vld [vmem:[%s5 + $0x88] sm:$0xff]
      %v1098 = vld [vmem:[%s5 + $0x90] sm:$0xff]
      %v1099 = vld [vmem:[%s5 + $0x98] sm:$0xff]
      %v1100 = vld [vmem:[%s5 + $0xa0] sm:$0xff]
      %v1101 = vld [vmem:[%s5 + $0xa8] sm:$0xff]
      %v1102 = vld [vmem:[%s5 + $0xb0] sm:$0xff]
      %v1103 = vld [vmem:[%s5 + $0xb8] sm:$0xff]
      %v1104 = vld [vmem:[%s5 + $0xc0] sm:$0xff]
      %v1105 = vld [vmem:[%s5 + $0xc8] sm:$0xff]
      %v1106 = vld [vmem:[%s5 + $0xd0] sm:$0xff]
      %v1107 = vld [vmem:[%s5 + $0xd8] sm:$0xff]
      %v1108 = vld [vmem:[%s5 + $0xe0] sm:$0xff]
      %v1109 = vld [vmem:[%s5 + $0xe8] sm:$0xff]
      %v1110 = vld [vmem:[%s5 + $0xf0] sm:$0xff]
      %v1111 = vld [vmem:[%s5 + $0xf8] sm:$0xff]
      %1112 = vmatpush.msra.mxu0 0.0
      %1113 = vmatpush.msra.mxu0 0.0
      %1114 = vmatpush.msra.mxu0 0.0
      %1115 = vmatpush.msra.mxu0 0.0
      %1116 = vmatpush.msra.mxu0 0.0
      %1117 = vmatpush.msra.mxu0 0.0
      %1118 = vmatpush.msra.mxu0 0.0
      %1119 = vmatpush.msra.mxu0 0.0
      %1120 = vmatpush.msra.mxu0 0.0
      %1121 = vmatpush.msra.mxu0 0.0
      %1122 = vmatpush.msra.mxu0 0.0
      %1123 = vmatpush.msra.mxu0 0.0
      %1124 = vmatpush.msra.mxu0 0.0
      %1125 = vmatpush.msra.mxu0 0.0
      %1126 = vmatpush.msra.mxu0 %v1056
      %1127 = vmatpush.msra.mxu0 %v1055
      %1128 = vmatmul.f32.gmra.mxu0 %v553
      %v1129 = vpop.f32.mrf.mxu0
      %v1130 = vadd.f32 0.0, %v1129
      %1131 = vmatmul.f32.gmra.mxu0 %v556
      %v1132 = vpop.f32.mrf.mxu0
      %v1133 = vadd.f32 0.0, %v1132
      %1134 = vdwg.mxu0
      %s1135 = scalar_lea.vmem %s5, 256
      %v1136 = vld [vmem:[%s1135] sm:$0xff]
      %v1137 = vld [vmem:[%s1135 + $0x8] sm:$0xff]
      %v1138 = vld [vmem:[%s1135 + $0x10] sm:$0xff]
      %v1139 = vld [vmem:[%s1135 + $0x18] sm:$0xff]
      %v1140 = vld [vmem:[%s1135 + $0x20] sm:$0xff]
      %v1141 = vld [vmem:[%s1135 + $0x28] sm:$0xff]
      %v1142 = vld [vmem:[%s1135 + $0x30] sm:$0xff]
      %v1143 = vld [vmem:[%s1135 + $0x38] sm:$0xff]
      %v1144 = vld [vmem:[%s1135 + $0x40] sm:$0xff]
      %v1145 = vld [vmem:[%s1135 + $0x48] sm:$0xff]
      %v1146 = vld [vmem:[%s1135 + $0x50] sm:$0xff]
      %v1147 = vld [vmem:[%s1135 + $0x58] sm:$0xff]
      %v1148 = vld [vmem:[%s1135 + $0x60] sm:$0xff]
      %v1149 = vld [vmem:[%s1135 + $0x68] sm:$0xff]
      %v1150 = vld [vmem:[%s1135 + $0x70] sm:$0xff]
      %v1151 = vld [vmem:[%s1135 + $0x78] sm:$0xff]
      %v1152 = vld [vmem:[%s1135 + $0x80] sm:$0xff]
      %v1153 = vld [vmem:[%s1135 + $0x88] sm:$0xff]
      %v1154 = vld [vmem:[%s1135 + $0x90] sm:$0xff]
      %v1155 = vld [vmem:[%s1135 + $0x98] sm:$0xff]
      %v1156 = vld [vmem:[%s1135 + $0xa0] sm:$0xff]
      %v1157 = vld [vmem:[%s1135 + $0xa8] sm:$0xff]
      %v1158 = vld [vmem:[%s1135 + $0xb0] sm:$0xff]
      %v1159 = vld [vmem:[%s1135 + $0xb8] sm:$0xff]
      %v1160 = vld [vmem:[%s1135 + $0xc0] sm:$0xff]
      %v1161 = vld [vmem:[%s1135 + $0xc8] sm:$0xff]
      %v1162 = vld [vmem:[%s1135 + $0xd0] sm:$0xff]
      %v1163 = vld [vmem:[%s1135 + $0xd8] sm:$0xff]
      %v1164 = vld [vmem:[%s1135 + $0xe0] sm:$0xff]
      %v1165 = vld [vmem:[%s1135 + $0xe8] sm:$0xff]
      %v1166 = vld [vmem:[%s1135 + $0xf0] sm:$0xff]
      %v1167 = vld [vmem:[%s1135 + $0xf8] sm:$0xff]
      %1168 = vmatpush.msra.mxu0 %v1166
      %1169 = vmatpush.msra.mxu0 %v1164
      %1170 = vmatpush.msra.mxu0 %v1162
      %1171 = vmatpush.msra.mxu0 %v1160
      %1172 = vmatpush.msra.mxu0 %v1158
      %1173 = vmatpush.msra.mxu0 %v1156
      %1174 = vmatpush.msra.mxu0 %v1154
      %1175 = vmatpush.msra.mxu0 %v1152
      %1176 = vmatpush.msra.mxu0 %v1150
      %1177 = vmatpush.msra.mxu0 %v1148
      %1178 = vmatpush.msra.mxu0 %v1146
      %1179 = vmatpush.msra.mxu0 %v1144
      %1180 = vmatpush.msra.mxu0 %v1142
      %1181 = vmatpush.msra.mxu0 %v1140
      %1182 = vmatpush.msra.mxu0 %v1138
      %1183 = vmatpush.msra.mxu0 %v1136
      %1184 = vmatmul.f32.gmra.mxu0 %v1130
      %v1185 = vpop.f32.mrf.mxu0
      %v1186 = vadd.f32 0.0, %v1185
      %1187 = vmatmul.f32.gmra.mxu0 %v1133
      %v1188 = vpop.f32.mrf.mxu0
      %v1189 = vadd.f32 0.0, %v1188
      %1190 = vdwg.mxu0
      %1191 = vmatpush.msra.mxu0 %v1167
      %1192 = vmatpush.msra.mxu0 %v1165
      %1193 = vmatpush.msra.mxu0 %v1163
      %1194 = vmatpush.msra.mxu0 %v1161
      %1195 = vmatpush.msra.mxu0 %v1159
      %1196 = vmatpush.msra.mxu0 %v1157
      %1197 = vmatpush.msra.mxu0 %v1155
      %1198 = vmatpush.msra.mxu0 %v1153
      %1199 = vmatpush.msra.mxu0 %v1151
      %1200 = vmatpush.msra.mxu0 %v1149
      %1201 = vmatpush.msra.mxu0 %v1147
      %1202 = vmatpush.msra.mxu0 %v1145
      %1203 = vmatpush.msra.mxu0 %v1143
      %1204 = vmatpush.msra.mxu0 %v1141
      %1205 = vmatpush.msra.mxu0 %v1139
      %1206 = vmatpush.msra.mxu0 %v1137
      %1207 = vmatmul.f32.gmra.mxu0 %v1130
      %v1208 = vpop.f32.mrf.mxu0
      %v1209 = vadd.f32 0.0, %v1208
      %1210 = vmatmul.f32.gmra.mxu0 %v1133
      %v1211 = vpop.f32.mrf.mxu0
      %v1212 = vadd.f32 0.0, %v1211
      %1213 = vdwg.mxu0
      %1214 = vmatpush.msra.mxu0 %v1110
      %1215 = vmatpush.msra.mxu0 %v1108
      %1216 = vmatpush.msra.mxu0 %v1106
      %1217 = vmatpush.msra.mxu0 %v1104
      %1218 = vmatpush.msra.mxu0 %v1102
      %1219 = vmatpush.msra.mxu0 %v1100
      %1220 = vmatpush.msra.mxu0 %v1098
      %1221 = vmatpush.msra.mxu0 %v1096
      %1222 = vmatpush.msra.mxu0 %v1094
      %1223 = vmatpush.msra.mxu0 %v1092
      %1224 = vmatpush.msra.mxu0 %v1090
      %1225 = vmatpush.msra.mxu0 %v1088
      %1226 = vmatpush.msra.mxu0 %v1086
      %1227 = vmatpush.msra.mxu0 %v1084
      %1228 = vmatpush.msra.mxu0 %v1082
      %1229 = vmatpush.msra.mxu0 %v1080
      %1230 = vmatmul.f32.gmra.mxu0 %v1075
      %v1231 = vpop.f32.mrf.mxu0
      %v1232 = vadd.f32 %v1186, %v1231
      %1233 = vmatmul.f32.gmra.mxu0 %v1078
      %v1234 = vpop.f32.mrf.mxu0
      %v1235 = vadd.f32 %v1189, %v1234
      %1236 = vdwg.mxu0
      %1237 = vmatpush.msra.mxu0 %v1111
      %1238 = vmatpush.msra.mxu0 %v1109
      %1239 = vmatpush.msra.mxu0 %v1107
      %1240 = vmatpush.msra.mxu0 %v1105
      %1241 = vmatpush.msra.mxu0 %v1103
      %1242 = vmatpush.msra.mxu0 %v1101
      %1243 = vmatpush.msra.mxu0 %v1099
      %1244 = vmatpush.msra.mxu0 %v1097
      %1245 = vmatpush.msra.mxu0 %v1095
      %1246 = vmatpush.msra.mxu0 %v1093
      %1247 = vmatpush.msra.mxu0 %v1091
      %1248 = vmatpush.msra.mxu0 %v1089
      %1249 = vmatpush.msra.mxu0 %v1087
      %1250 = vmatpush.msra.mxu0 %v1085
      %1251 = vmatpush.msra.mxu0 %v1083
      %1252 = vmatpush.msra.mxu0 %v1081
      %1253 = vmatmul.f32.gmra.mxu0 %v1075
      %v1254 = vpop.f32.mrf.mxu0
      %v1255 = vadd.f32 %v1209, %v1254
      %1256 = vmatmul.f32.gmra.mxu0 %v1078
      %v1257 = vpop.f32.mrf.mxu0
      %v1258 = vadd.f32 %v1212, %v1257
      %1259 = vdwg.mxu0
      %1260 = vmatpush.msra.mxu0 0.0
      %1261 = vmatpush.msra.mxu0 0.0
      %1262 = vmatpush.msra.mxu0 0.0
      %1263 = vmatpush.msra.mxu0 0.0
      %1264 = vmatpush.msra.mxu0 0.0
      %1265 = vmatpush.msra.mxu0 0.0
      %1266 = vmatpush.msra.mxu0 0.0
      %1267 = vmatpush.msra.mxu0 0.0
      %1268 = vmatpush.msra.mxu0 0.0
      %1269 = vmatpush.msra.mxu0 0.0
      %1270 = vmatpush.msra.mxu0 0.0
      %1271 = vmatpush.msra.mxu0 0.0
      %1272 = vmatpush.msra.mxu0 0.0
      %1273 = vmatpush.msra.mxu0 0.0
      %1274 = vmatpush.msra.mxu0 %v1056
      %1275 = vmatpush.msra.mxu0 %v1055
      %1276 = vmatmul.f32.gmra.mxu0 %v656
      %v1277 = vpop.f32.mrf.mxu0
      %v1278 = vadd.f32 0.0, %v1277
      %1279 = vmatmul.f32.gmra.mxu0 %v659
      %v1280 = vpop.f32.mrf.mxu0
      %v1281 = vadd.f32 0.0, %v1280
      %1282 = vdwg.mxu0
      %s1283 = scalar_lea.vmem %s5, 512
      %v1284 = vld [vmem:[%s1283] sm:$0xff]
      %v1285 = vld [vmem:[%s1283 + $0x8] sm:$0xff]
      %v1286 = vld [vmem:[%s1283 + $0x10] sm:$0xff]
      %v1287 = vld [vmem:[%s1283 + $0x18] sm:$0xff]
      %v1288 = vld [vmem:[%s1283 + $0x20] sm:$0xff]
      %v1289 = vld [vmem:[%s1283 + $0x28] sm:$0xff]
      %v1290 = vld [vmem:[%s1283 + $0x30] sm:$0xff]
      %v1291 = vld [vmem:[%s1283 + $0x38] sm:$0xff]
      %v1292 = vld [vmem:[%s1283 + $0x40] sm:$0xff]
      %v1293 = vld [vmem:[%s1283 + $0x48] sm:$0xff]
      %v1294 = vld [vmem:[%s1283 + $0x50] sm:$0xff]
      %v1295 = vld [vmem:[%s1283 + $0x58] sm:$0xff]
      %v1296 = vld [vmem:[%s1283 + $0x60] sm:$0xff]
      %v1297 = vld [vmem:[%s1283 + $0x68] sm:$0xff]
      %v1298 = vld [vmem:[%s1283 + $0x70] sm:$0xff]
      %v1299 = vld [vmem:[%s1283 + $0x78] sm:$0xff]
      %v1300 = vld [vmem:[%s1283 + $0x80] sm:$0xff]
      %v1301 = vld [vmem:[%s1283 + $0x88] sm:$0xff]
      %v1302 = vld [vmem:[%s1283 + $0x90] sm:$0xff]
      %v1303 = vld [vmem:[%s1283 + $0x98] sm:$0xff]
      %v1304 = vld [vmem:[%s1283 + $0xa0] sm:$0xff]
      %v1305 = vld [vmem:[%s1283 + $0xa8] sm:$0xff]
      %v1306 = vld [vmem:[%s1283 + $0xb0] sm:$0xff]
      %v1307 = vld [vmem:[%s1283 + $0xb8] sm:$0xff]
      %v1308 = vld [vmem:[%s1283 + $0xc0] sm:$0xff]
      %v1309 = vld [vmem:[%s1283 + $0xc8] sm:$0xff]
      %v1310 = vld [vmem:[%s1283 + $0xd0] sm:$0xff]
      %v1311 = vld [vmem:[%s1283 + $0xd8] sm:$0xff]
      %v1312 = vld [vmem:[%s1283 + $0xe0] sm:$0xff]
      %v1313 = vld [vmem:[%s1283 + $0xe8] sm:$0xff]
      %v1314 = vld [vmem:[%s1283 + $0xf0] sm:$0xff]
      %v1315 = vld [vmem:[%s1283 + $0xf8] sm:$0xff]
      %1316 = vmatpush.msra.mxu0 %v1314
      %1317 = vmatpush.msra.mxu0 %v1312
      %1318 = vmatpush.msra.mxu0 %v1310
      %1319 = vmatpush.msra.mxu0 %v1308
      %1320 = vmatpush.msra.mxu0 %v1306
      %1321 = vmatpush.msra.mxu0 %v1304
      %1322 = vmatpush.msra.mxu0 %v1302
      %1323 = vmatpush.msra.mxu0 %v1300
      %1324 = vmatpush.msra.mxu0 %v1298
      %1325 = vmatpush.msra.mxu0 %v1296
      %1326 = vmatpush.msra.mxu0 %v1294
      %1327 = vmatpush.msra.mxu0 %v1292
      %1328 = vmatpush.msra.mxu0 %v1290
      %1329 = vmatpush.msra.mxu0 %v1288
      %1330 = vmatpush.msra.mxu0 %v1286
      %1331 = vmatpush.msra.mxu0 %v1284
      %1332 = vmatmul.f32.gmra.mxu0 %v1278
      %v1333 = vpop.f32.mrf.mxu0
      %v1334 = vadd.f32 0.0, %v1333
      %1335 = vmatmul.f32.gmra.mxu0 %v1281
      %v1336 = vpop.f32.mrf.mxu0
      %v1337 = vadd.f32 0.0, %v1336
      %1338 = vdwg.mxu0
      %1339 = vmatpush.msra.mxu0 %v1315
      %1340 = vmatpush.msra.mxu0 %v1313
      %1341 = vmatpush.msra.mxu0 %v1311
      %1342 = vmatpush.msra.mxu0 %v1309
      %1343 = vmatpush.msra.mxu0 %v1307
      %1344 = vmatpush.msra.mxu0 %v1305
      %1345 = vmatpush.msra.mxu0 %v1303
      %1346 = vmatpush.msra.mxu0 %v1301
      %1347 = vmatpush.msra.mxu0 %v1299
      %1348 = vmatpush.msra.mxu0 %v1297
      %1349 = vmatpush.msra.mxu0 %v1295
      %1350 = vmatpush.msra.mxu0 %v1293
      %1351 = vmatpush.msra.mxu0 %v1291
      %1352 = vmatpush.msra.mxu0 %v1289
      %1353 = vmatpush.msra.mxu0 %v1287
      %1354 = vmatpush.msra.mxu0 %v1285
      %1355 = vmatmul.f32.gmra.mxu0 %v1278
      %v1356 = vpop.f32.mrf.mxu0
      %v1357 = vadd.f32 0.0, %v1356
      %1358 = vmatmul.f32.gmra.mxu0 %v1281
      %v1359 = vpop.f32.mrf.mxu0
      %v1360 = vadd.f32 0.0, %v1359
      %1361 = vdwg.mxu0
      %v1362 = vadd.f32 %v1232, %v1334
      %v1363 = vadd.f32 %v1255, %v1357
      %v1364 = vadd.f32 %v1235, %v1337
      %v1365 = vadd.f32 %v1258, %v1360
      %v1366 = vld [vmem:[%s6] ss:$4 sm:$0x3]
      %v1368 = vperm.slane %v1366, 0
      %v1369 = vperm.slane %v1366, 1
      %v1372 = vadd.f32 %v1362, %v1368
      %v1373 = vadd.f32 %v1363, %v1369
      %v1374 = vadd.f32 %v1364, %v1368
      %v1375 = vadd.f32 %v1365, %v1369
      %v1376 = vadd.f32 %v1372, %v1373
      %v1377 = vadd.f32 %v1376, %v1374
      %v1378 = vadd.f32 %v1377, %v1375
      %1379 = vadd.xlane.f32.xlu0 %v1378
      %v1380 = vpop.xlane.xlu0 %1379
      %v1381 = vrot.slane %v1380, 4
      %v1382 = vadd.f32 %v1380, %v1381
      %v1383 = vrot.slane %v1382, 2
      %v1384 = vadd.f32 %v1382, %v1383
      %v1385 = vrot.slane %v1384, 1
      %v1386 = vadd.f32 %v1384, %v1385
      %s1387 = vtos %v1386
      %v1388 = vrcp.pop 4096.0
      %v1389 = vmul.f32 4096.0, %v1388
      %v1390 = vsub.f32 1.0, %v1389
      %v1391 = vmul.f32 %v1388, %v1390
      %v1392 = vadd.f32 %v1388, %v1391
      %vm1393 = vweird.f32 %v1388
      %v1394 = vsel %vm1393, %v1388, %v1392
      %s1395 = vtos %v1394
      %s1396 = smul.f32 %s1387, %s1395
      %v1397 = vstv %s1396
      %v1398 = vsub.f32 %v1372, %v1397
      %v1399 = vsub.f32 %v1373, %v1397
      %v1400 = vsub.f32 %v1374, %v1397
      %v1401 = vsub.f32 %v1375, %v1397
      %v1402 = vmul.f32 %v1398, %v1398
      %v1403 = vmul.f32 %v1399, %v1399
      %v1404 = vmul.f32 %v1400, %v1400
      %v1405 = vmul.f32 %v1401, %v1401
      %v1406 = vadd.f32 %v1402, %v1403
      %v1407 = vadd.f32 %v1406, %v1404
      %v1408 = vadd.f32 %v1407, %v1405
      %1409 = vadd.xlane.f32.xlu0 %v1408
      %v1410 = vpop.xlane.xlu0 %1409
      %v1411 = vrot.slane %v1410, 4
      %v1412 = vadd.f32 %v1410, %v1411
      %v1413 = vrot.slane %v1412, 2
      %v1414 = vadd.f32 %v1412, %v1413
      %v1415 = vrot.slane %v1414, 1
      %v1416 = vadd.f32 %v1414, %v1415
      %s1417 = vtos %v1416
      %v1418 = vrcp.pop 4096.0
      %v1419 = vmul.f32 4096.0, %v1418
      %v1420 = vsub.f32 1.0, %v1419
      %v1421 = vmul.f32 %v1418, %v1420
      %v1422 = vadd.f32 %v1418, %v1421
      %vm1423 = vweird.f32 %v1418
      %v1424 = vsel %vm1423, %v1418, %v1422
      %s1425 = vtos %v1424
      %s1426 = smul.f32 %s1417, %s1425
      %s1427 = sadd.f32 %s1426, 1e-05
      %v1428 = vstv %s1427
      %v1429 = vrsqrt.pop %v1428
      %v1430 = vmul.f32 %v1429, %v1428
      %v1431 = vmul.f32 %v1430, %v1429
      %v1432 = vmul.f32 0.5, %v1431
      %v1433 = vsub.f32 1.5, %v1432
      %v1434 = vmul.f32 %v1429, %v1433
      %vm1435 = vweird.f32 %v1428
      %vm1436 = vweird.f32 %v1429
      %vm1437 = vmor %vm1435, %vm1436
      %v1438 = vsel %vm1437, %v1429, %v1434
      %s1439 = vtos %v1438
      %v1440 = vstv %s1439
      %v1441 = vmul.f32 %v1398, %v1440
      %v1442 = vmul.f32 %v1399, %v1440
      %v1443 = vmul.f32 %v1400, %v1440
      %v1444 = vmul.f32 %v1401, %v1440
      %s1445 = scalar_lea.vmem %s6, 1
      %v1446 = vld [vmem:[%s1445] ss:$4 sm:$0x3]
      %v1448 = vperm.slane %v1446, 0
      %v1449 = vperm.slane %v1446, 1
      %v1452 = vmul.f32 %v1441, %v1448
      %v1453 = vmul.f32 %v1442, %v1449
      %v1454 = vmul.f32 %v1443, %v1448
      %v1455 = vmul.f32 %v1444, %v1449
      %s1456 = scalar_lea.vmem %s6, 2
      %v1457 = vld [vmem:[%s1456] ss:$4 sm:$0x3]
      %v1459 = vperm.slane %v1457, 0
      %v1460 = vperm.slane %v1457, 1
      %v1463 = vadd.f32 %v1452, %v1459
      %v1464 = vadd.f32 %v1453, %v1460
      %v1465 = vadd.f32 %v1454, %v1459
      %v1466 = vadd.f32 %v1455, %v1460
      %v1467 = vmax.f32 %v1463, 0.0
      %v1468 = vmax.f32 %v1464, 0.0
      %v1469 = vmax.f32 %v1465, 0.0
      %v1470 = vmax.f32 %v1466, 0.0
      %v1471 = vmul.u32 %v498, 2
      %v1472 = vadd.s32 %v1471, 4294967295
      %vm1473 = vcmp.eq.s32.totalorder %v501, %v1472
      %v1474 = vsel %vm1473, 1, 0
      %v1475 = vcvt.s32.f32 %v1474
      %v1477 = vsel %vm510, %v1475, 0
      %1479 = vmatpush.msra.mxu0 0.0
      %1480 = vmatpush.msra.mxu0 0.0
      %1481 = vmatpush.msra.mxu0 0.0
      %1482 = vmatpush.msra.mxu0 0.0
      %1483 = vmatpush.msra.mxu0 0.0
      %1484 = vmatpush.msra.mxu0 0.0
      %1485 = vmatpush.msra.mxu0 0.0
      %1486 = vmatpush.msra.mxu0 0.0
      %1487 = vmatpush.msra.mxu0 0.0
      %1488 = vmatpush.msra.mxu0 0.0
      %1489 = vmatpush.msra.mxu0 0.0
      %1490 = vmatpush.msra.mxu0 0.0
      %1491 = vmatpush.msra.mxu0 0.0
      %1492 = vmatpush.msra.mxu0 0.0
      %1493 = vmatpush.msra.mxu0 %v1469
      %1494 = vmatpush.msra.mxu0 %v1467
      %1495 = vmatmul.f32.gmra.mxu0 %v1477
      %v1496 = vpop.f32.mrf.mxu0
      %v1497 = vadd.f32 0.0, %v1496
      %1498 = vdwg.mxu0
      %1499 = vmatpush.msra.mxu0 0.0
      %1500 = vmatpush.msra.mxu0 0.0
      %1501 = vmatpush.msra.mxu0 0.0
      %1502 = vmatpush.msra.mxu0 0.0
      %1503 = vmatpush.msra.mxu0 0.0
      %1504 = vmatpush.msra.mxu0 0.0
      %1505 = vmatpush.msra.mxu0 0.0
      %1506 = vmatpush.msra.mxu0 0.0
      %1507 = vmatpush.msra.mxu0 0.0
      %1508 = vmatpush.msra.mxu0 0.0
      %1509 = vmatpush.msra.mxu0 0.0
      %1510 = vmatpush.msra.mxu0 0.0
      %1511 = vmatpush.msra.mxu0 0.0
      %1512 = vmatpush.msra.mxu0 0.0
      %1513 = vmatpush.msra.mxu0 %v1470
      %1514 = vmatpush.msra.mxu0 %v1468
      %1515 = vmatmul.f32.gmra.mxu0 %v1477
      %v1516 = vpop.f32.mrf.mxu0
      %v1517 = vadd.f32 0.0, %v1516
      %1518 = vdwg.mxu0
      %v1519 = vld [vmem:[%s7] sm:$0xff]
      %v1520 = vld [vmem:[%s7 + $0x8] sm:$0xff]
      %v1521 = vld [vmem:[%s7 + $0x10] sm:$0xff]
      %v1522 = vld [vmem:[%s7 + $0x18] sm:$0xff]
      %v1523 = vld [vmem:[%s7 + $0x20] sm:$0xff]
      %v1524 = vld [vmem:[%s7 + $0x28] sm:$0xff]
      %v1525 = vld [vmem:[%s7 + $0x30] sm:$0xff]
      %v1526 = vld [vmem:[%s7 + $0x38] sm:$0xff]
      %v1527 = vld [vmem:[%s7 + $0x40] sm:$0xff]
      %v1528 = vld [vmem:[%s7 + $0x48] sm:$0xff]
      %v1529 = vld [vmem:[%s7 + $0x50] sm:$0xff]
      %v1530 = vld [vmem:[%s7 + $0x58] sm:$0xff]
      %v1531 = vld [vmem:[%s7 + $0x60] sm:$0xff]
      %v1532 = vld [vmem:[%s7 + $0x68] sm:$0xff]
      %v1533 = vld [vmem:[%s7 + $0x70] sm:$0xff]
      %v1534 = vld [vmem:[%s7 + $0x78] sm:$0xff]
      %v1535 = vld [vmem:[%s7 + $0x80] sm:$0xff]
      %v1536 = vld [vmem:[%s7 + $0x88] sm:$0xff]
      %v1537 = vld [vmem:[%s7 + $0x90] sm:$0xff]
      %v1538 = vld [vmem:[%s7 + $0x98] sm:$0xff]
      %v1539 = vld [vmem:[%s7 + $0xa0] sm:$0xff]
      %v1540 = vld [vmem:[%s7 + $0xa8] sm:$0xff]
      %v1541 = vld [vmem:[%s7 + $0xb0] sm:$0xff]
      %v1542 = vld [vmem:[%s7 + $0xb8] sm:$0xff]
      %v1543 = vld [vmem:[%s7 + $0xc0] sm:$0xff]
      %v1544 = vld [vmem:[%s7 + $0xc8] sm:$0xff]
      %v1545 = vld [vmem:[%s7 + $0xd0] sm:$0xff]
      %v1546 = vld [vmem:[%s7 + $0xd8] sm:$0xff]
      %v1547 = vld [vmem:[%s7 + $0xe0] sm:$0xff]
      %v1548 = vld [vmem:[%s7 + $0xe8] sm:$0xff]
      %v1549 = vld [vmem:[%s7 + $0xf0] sm:$0xff]
      %v1550 = vld [vmem:[%s7 + $0xf8] sm:$0xff]
      %vm1551 = vcmp.eq.s32.totalorder %v501, %v1471
      %v1552 = vsel %vm1551, 1, 0
      %v1553 = vcvt.s32.f32 %v1552
      %v1555 = vsel %vm510, %v1553, 0
      %1557 = vmatpush.msra.mxu0 0.0
      %1558 = vmatpush.msra.mxu0 0.0
      %1559 = vmatpush.msra.mxu0 0.0
      %1560 = vmatpush.msra.mxu0 0.0
      %1561 = vmatpush.msra.mxu0 0.0
      %1562 = vmatpush.msra.mxu0 0.0
      %1563 = vmatpush.msra.mxu0 0.0
      %1564 = vmatpush.msra.mxu0 0.0
      %1565 = vmatpush.msra.mxu0 0.0
      %1566 = vmatpush.msra.mxu0 0.0
      %1567 = vmatpush.msra.mxu0 0.0
      %1568 = vmatpush.msra.mxu0 0.0
      %1569 = vmatpush.msra.mxu0 0.0
      %1570 = vmatpush.msra.mxu0 0.0
      %1571 = vmatpush.msra.mxu0 %v1469
      %1572 = vmatpush.msra.mxu0 %v1467
      %1573 = vmatmul.f32.gmra.mxu0 %v1555
      %v1574 = vpop.f32.mrf.mxu0
      %v1575 = vadd.f32 0.0, %v1574
      %1576 = vdwg.mxu0
      %1577 = vmatpush.msra.mxu0 0.0
      %1578 = vmatpush.msra.mxu0 0.0
      %1579 = vmatpush.msra.mxu0 0.0
      %1580 = vmatpush.msra.mxu0 0.0
      %1581 = vmatpush.msra.mxu0 0.0
      %1582 = vmatpush.msra.mxu0 0.0
      %1583 = vmatpush.msra.mxu0 0.0
      %1584 = vmatpush.msra.mxu0 0.0
      %1585 = vmatpush.msra.mxu0 0.0
      %1586 = vmatpush.msra.mxu0 0.0
      %1587 = vmatpush.msra.mxu0 0.0
      %1588 = vmatpush.msra.mxu0 0.0
      %1589 = vmatpush.msra.mxu0 0.0
      %1590 = vmatpush.msra.mxu0 0.0
      %1591 = vmatpush.msra.mxu0 %v1470
      %1592 = vmatpush.msra.mxu0 %v1468
      %1593 = vmatmul.f32.gmra.mxu0 %v1555
      %v1594 = vpop.f32.mrf.mxu0
      %v1595 = vadd.f32 0.0, %v1594
      %1596 = vdwg.mxu0
      %s1597 = scalar_lea.vmem %s7, 256
      %v1598 = vld [vmem:[%s1597] sm:$0xff]
      %v1599 = vld [vmem:[%s1597 + $0x8] sm:$0xff]
      %v1600 = vld [vmem:[%s1597 + $0x10] sm:$0xff]
      %v1601 = vld [vmem:[%s1597 + $0x18] sm:$0xff]
      %v1602 = vld [vmem:[%s1597 + $0x20] sm:$0xff]
      %v1603 = vld [vmem:[%s1597 + $0x28] sm:$0xff]
      %v1604 = vld [vmem:[%s1597 + $0x30] sm:$0xff]
      %v1605 = vld [vmem:[%s1597 + $0x38] sm:$0xff]
      %v1606 = vld [vmem:[%s1597 + $0x40] sm:$0xff]
      %v1607 = vld [vmem:[%s1597 + $0x48] sm:$0xff]
      %v1608 = vld [vmem:[%s1597 + $0x50] sm:$0xff]
      %v1609 = vld [vmem:[%s1597 + $0x58] sm:$0xff]
      %v1610 = vld [vmem:[%s1597 + $0x60] sm:$0xff]
      %v1611 = vld [vmem:[%s1597 + $0x68] sm:$0xff]
      %v1612 = vld [vmem:[%s1597 + $0x70] sm:$0xff]
      %v1613 = vld [vmem:[%s1597 + $0x78] sm:$0xff]
      %v1614 = vld [vmem:[%s1597 + $0x80] sm:$0xff]
      %v1615 = vld [vmem:[%s1597 + $0x88] sm:$0xff]
      %v1616 = vld [vmem:[%s1597 + $0x90] sm:$0xff]
      %v1617 = vld [vmem:[%s1597 + $0x98] sm:$0xff]
      %v1618 = vld [vmem:[%s1597 + $0xa0] sm:$0xff]
      %v1619 = vld [vmem:[%s1597 + $0xa8] sm:$0xff]
      %v1620 = vld [vmem:[%s1597 + $0xb0] sm:$0xff]
      %v1621 = vld [vmem:[%s1597 + $0xb8] sm:$0xff]
      %v1622 = vld [vmem:[%s1597 + $0xc0] sm:$0xff]
      %v1623 = vld [vmem:[%s1597 + $0xc8] sm:$0xff]
      %v1624 = vld [vmem:[%s1597 + $0xd0] sm:$0xff]
      %v1625 = vld [vmem:[%s1597 + $0xd8] sm:$0xff]
      %v1626 = vld [vmem:[%s1597 + $0xe0] sm:$0xff]
      %v1627 = vld [vmem:[%s1597 + $0xe8] sm:$0xff]
      %v1628 = vld [vmem:[%s1597 + $0xf0] sm:$0xff]
      %v1629 = vld [vmem:[%s1597 + $0xf8] sm:$0xff]
      %1630 = vmatpush.msra.mxu0 %v1613
      %1631 = vmatpush.msra.mxu0 %v1612
      %1632 = vmatpush.msra.mxu0 %v1611
      %1633 = vmatpush.msra.mxu0 %v1610
      %1634 = vmatpush.msra.mxu0 %v1609
      %1635 = vmatpush.msra.mxu0 %v1608
      %1636 = vmatpush.msra.mxu0 %v1607
      %1637 = vmatpush.msra.mxu0 %v1606
      %1638 = vmatpush.msra.mxu0 %v1605
      %1639 = vmatpush.msra.mxu0 %v1604
      %1640 = vmatpush.msra.mxu0 %v1603
      %1641 = vmatpush.msra.mxu0 %v1602
      %1642 = vmatpush.msra.mxu0 %v1601
      %1643 = vmatpush.msra.mxu0 %v1600
      %1644 = vmatpush.msra.mxu0 %v1599
      %1645 = vmatpush.msra.mxu0 %v1598
      %1646 = vmatmul.f32.gmra.mxu0 %v1575
      %v1647 = vpop.f32.mrf.mxu0
      %v1648 = vadd.f32 0.0, %v1647
      %1649 = vdwg.mxu0
      %1650 = vmatpush.msra.mxu0 %v1629
      %1651 = vmatpush.msra.mxu0 %v1628
      %1652 = vmatpush.msra.mxu0 %v1627
      %1653 = vmatpush.msra.mxu0 %v1626
      %1654 = vmatpush.msra.mxu0 %v1625
      %1655 = vmatpush.msra.mxu0 %v1624
      %1656 = vmatpush.msra.mxu0 %v1623
      %1657 = vmatpush.msra.mxu0 %v1622
      %1658 = vmatpush.msra.mxu0 %v1621
      %1659 = vmatpush.msra.mxu0 %v1620
      %1660 = vmatpush.msra.mxu0 %v1619
      %1661 = vmatpush.msra.mxu0 %v1618
      %1662 = vmatpush.msra.mxu0 %v1617
      %1663 = vmatpush.msra.mxu0 %v1616
      %1664 = vmatpush.msra.mxu0 %v1615
      %1665 = vmatpush.msra.mxu0 %v1614
      %1666 = vmatmul.f32.gmra.mxu0 %v1595
      %v1667 = vpop.f32.mrf.mxu0
      %v1668 = vadd.f32 %v1648, %v1667
      %1669 = vdwg.mxu0
      %1670 = vmatpush.msra.mxu0 %v1534
      %1671 = vmatpush.msra.mxu0 %v1533
      %1672 = vmatpush.msra.mxu0 %v1532
      %1673 = vmatpush.msra.mxu0 %v1531
      %1674 = vmatpush.msra.mxu0 %v1530
      %1675 = vmatpush.msra.mxu0 %v1529
      %1676 = vmatpush.msra.mxu0 %v1528
      %1677 = vmatpush.msra.mxu0 %v1527
      %1678 = vmatpush.msra.mxu0 %v1526
      %1679 = vmatpush.msra.mxu0 %v1525
      %1680 = vmatpush.msra.mxu0 %v1524
      %1681 = vmatpush.msra.mxu0 %v1523
      %1682 = vmatpush.msra.mxu0 %v1522
      %1683 = vmatpush.msra.mxu0 %v1521
      %1684 = vmatpush.msra.mxu0 %v1520
      %1685 = vmatpush.msra.mxu0 %v1519
      %1686 = vmatmul.f32.gmra.mxu0 %v1497
      %v1687 = vpop.f32.mrf.mxu0
      %v1688 = vadd.f32 %v1668, %v1687
      %1689 = vdwg.mxu0
      %1690 = vmatpush.msra.mxu0 %v1550
      %1691 = vmatpush.msra.mxu0 %v1549
      %1692 = vmatpush.msra.mxu0 %v1548
      %1693 = vmatpush.msra.mxu0 %v1547
      %1694 = vmatpush.msra.mxu0 %v1546
      %1695 = vmatpush.msra.mxu0 %v1545
      %1696 = vmatpush.msra.mxu0 %v1544
      %1697 = vmatpush.msra.mxu0 %v1543
      %1698 = vmatpush.msra.mxu0 %v1542
      %1699 = vmatpush.msra.mxu0 %v1541
      %1700 = vmatpush.msra.mxu0 %v1540
      %1701 = vmatpush.msra.mxu0 %v1539
      %1702 = vmatpush.msra.mxu0 %v1538
      %1703 = vmatpush.msra.mxu0 %v1537
      %1704 = vmatpush.msra.mxu0 %v1536
      %1705 = vmatpush.msra.mxu0 %v1535
      %1706 = vmatmul.f32.gmra.mxu0 %v1517
      %v1707 = vpop.f32.mrf.mxu0
      %v1708 = vadd.f32 %v1688, %v1707
      %1709 = vdwg.mxu0
      %v1710 = vadd.s32 %v1471, 1
      %vm1711 = vcmp.eq.s32.totalorder %v501, %v1710
      %v1712 = vsel %vm1711, 1, 0
      %v1713 = vcvt.s32.f32 %v1712
      %v1715 = vsel %vm510, %v1713, 0
      %1717 = vmatpush.msra.mxu0 0.0
      %1718 = vmatpush.msra.mxu0 0.0
      %1719 = vmatpush.msra.mxu0 0.0
      %1720 = vmatpush.msra.mxu0 0.0
      %1721 = vmatpush.msra.mxu0 0.0
      %1722 = vmatpush.msra.mxu0 0.0
      %1723 = vmatpush.msra.mxu0 0.0
      %1724 = vmatpush.msra.mxu0 0.0
      %1725 = vmatpush.msra.mxu0 0.0
      %1726 = vmatpush.msra.mxu0 0.0
      %1727 = vmatpush.msra.mxu0 0.0
      %1728 = vmatpush.msra.mxu0 0.0
      %1729 = vmatpush.msra.mxu0 0.0
      %1730 = vmatpush.msra.mxu0 0.0
      %1731 = vmatpush.msra.mxu0 %v1469
      %1732 = vmatpush.msra.mxu0 %v1467
      %1733 = vmatmul.f32.gmra.mxu0 %v1715
      %v1734 = vpop.f32.mrf.mxu0
      %v1735 = vadd.f32 0.0, %v1734
      %1736 = vdwg.mxu0
      %1737 = vmatpush.msra.mxu0 0.0
      %1738 = vmatpush.msra.mxu0 0.0
      %1739 = vmatpush.msra.mxu0 0.0
      %1740 = vmatpush.msra.mxu0 0.0
      %1741 = vmatpush.msra.mxu0 0.0
      %1742 = vmatpush.msra.mxu0 0.0
      %1743 = vmatpush.msra.mxu0 0.0
      %1744 = vmatpush.msra.mxu0 0.0
      %1745 = vmatpush.msra.mxu0 0.0
      %1746 = vmatpush.msra.mxu0 0.0
      %1747 = vmatpush.msra.mxu0 0.0
      %1748 = vmatpush.msra.mxu0 0.0
      %1749 = vmatpush.msra.mxu0 0.0
      %1750 = vmatpush.msra.mxu0 0.0
      %1751 = vmatpush.msra.mxu0 %v1470
      %1752 = vmatpush.msra.mxu0 %v1468
      %1753 = vmatmul.f32.gmra.mxu0 %v1715
      %v1754 = vpop.f32.mrf.mxu0
      %v1755 = vadd.f32 0.0, %v1754
      %1756 = vdwg.mxu0
      %s1757 = scalar_lea.vmem %s7, 512
      %v1758 = vld [vmem:[%s1757] sm:$0xff]
      %v1759 = vld [vmem:[%s1757 + $0x8] sm:$0xff]
      %v1760 = vld [vmem:[%s1757 + $0x10] sm:$0xff]
      %v1761 = vld [vmem:[%s1757 + $0x18] sm:$0xff]
      %v1762 = vld [vmem:[%s1757 + $0x20] sm:$0xff]
      %v1763 = vld [vmem:[%s1757 + $0x28] sm:$0xff]
      %v1764 = vld [vmem:[%s1757 + $0x30] sm:$0xff]
      %v1765 = vld [vmem:[%s1757 + $0x38] sm:$0xff]
      %v1766 = vld [vmem:[%s1757 + $0x40] sm:$0xff]
      %v1767 = vld [vmem:[%s1757 + $0x48] sm:$0xff]
      %v1768 = vld [vmem:[%s1757 + $0x50] sm:$0xff]
      %v1769 = vld [vmem:[%s1757 + $0x58] sm:$0xff]
      %v1770 = vld [vmem:[%s1757 + $0x60] sm:$0xff]
      %v1771 = vld [vmem:[%s1757 + $0x68] sm:$0xff]
      %v1772 = vld [vmem:[%s1757 + $0x70] sm:$0xff]
      %v1773 = vld [vmem:[%s1757 + $0x78] sm:$0xff]
      %v1774 = vld [vmem:[%s1757 + $0x80] sm:$0xff]
      %v1775 = vld [vmem:[%s1757 + $0x88] sm:$0xff]
      %v1776 = vld [vmem:[%s1757 + $0x90] sm:$0xff]
      %v1777 = vld [vmem:[%s1757 + $0x98] sm:$0xff]
      %v1778 = vld [vmem:[%s1757 + $0xa0] sm:$0xff]
      %v1779 = vld [vmem:[%s1757 + $0xa8] sm:$0xff]
      %v1780 = vld [vmem:[%s1757 + $0xb0] sm:$0xff]
      %v1781 = vld [vmem:[%s1757 + $0xb8] sm:$0xff]
      %v1782 = vld [vmem:[%s1757 + $0xc0] sm:$0xff]
      %v1783 = vld [vmem:[%s1757 + $0xc8] sm:$0xff]
      %v1784 = vld [vmem:[%s1757 + $0xd0] sm:$0xff]
      %v1785 = vld [vmem:[%s1757 + $0xd8] sm:$0xff]
      %v1786 = vld [vmem:[%s1757 + $0xe0] sm:$0xff]
      %v1787 = vld [vmem:[%s1757 + $0xe8] sm:$0xff]
      %v1788 = vld [vmem:[%s1757 + $0xf0] sm:$0xff]
      %v1789 = vld [vmem:[%s1757 + $0xf8] sm:$0xff]
      %1790 = vmatpush.msra.mxu0 %v1773
      %1791 = vmatpush.msra.mxu0 %v1772
      %1792 = vmatpush.msra.mxu0 %v1771
      %1793 = vmatpush.msra.mxu0 %v1770
      %1794 = vmatpush.msra.mxu0 %v1769
      %1795 = vmatpush.msra.mxu0 %v1768
      %1796 = vmatpush.msra.mxu0 %v1767
      %1797 = vmatpush.msra.mxu0 %v1766
      %1798 = vmatpush.msra.mxu0 %v1765
      %1799 = vmatpush.msra.mxu0 %v1764
      %1800 = vmatpush.msra.mxu0 %v1763
      %1801 = vmatpush.msra.mxu0 %v1762
      %1802 = vmatpush.msra.mxu0 %v1761
      %1803 = vmatpush.msra.mxu0 %v1760
      %1804 = vmatpush.msra.mxu0 %v1759
      %1805 = vmatpush.msra.mxu0 %v1758
      %1806 = vmatmul.f32.gmra.mxu0 %v1735
      %v1807 = vpop.f32.mrf.mxu0
      %v1808 = vadd.f32 0.0, %v1807
      %1809 = vdwg.mxu0
      %1810 = vmatpush.msra.mxu0 %v1789
      %1811 = vmatpush.msra.mxu0 %v1788
      %1812 = vmatpush.msra.mxu0 %v1787
      %1813 = vmatpush.msra.mxu0 %v1786
      %1814 = vmatpush.msra.mxu0 %v1785
      %1815 = vmatpush.msra.mxu0 %v1784
      %1816 = vmatpush.msra.mxu0 %v1783
      %1817 = vmatpush.msra.mxu0 %v1782
      %1818 = vmatpush.msra.mxu0 %v1781
      %1819 = vmatpush.msra.mxu0 %v1780
      %1820 = vmatpush.msra.mxu0 %v1779
      %1821 = vmatpush.msra.mxu0 %v1778
      %1822 = vmatpush.msra.mxu0 %v1777
      %1823 = vmatpush.msra.mxu0 %v1776
      %1824 = vmatpush.msra.mxu0 %v1775
      %1825 = vmatpush.msra.mxu0 %v1774
      %1826 = vmatmul.f32.gmra.mxu0 %v1755
      %v1827 = vpop.f32.mrf.mxu0
      %v1828 = vadd.f32 %v1808, %v1827
      %1829 = vdwg.mxu0
      %v1830 = vadd.f32 %v1708, %v1828
      %v1831 = vld [vmem:[%s8] sm:$0x1]
      %v1832 = vperm.slane %v1831, 0
      %v1833 = vadd.f32 %v1830, %v1832
      %1834 = vadd.xlane.f32.xlu0 %v1833
      %v1835 = vpop.xlane.xlu0 %1834
      %v1836 = vrot.slane %v1835, 4
      %v1837 = vadd.f32 %v1835, %v1836
      %v1838 = vrot.slane %v1837, 2
      %v1839 = vadd.f32 %v1837, %v1838
      %v1840 = vrot.slane %v1839, 1
      %v1841 = vadd.f32 %v1839, %v1840
      %s1842 = vtos %v1841
      %v1843 = vrcp.pop 1024.0
      %v1844 = vmul.f32 1024.0, %v1843
      %v1845 = vsub.f32 1.0, %v1844
      %v1846 = vmul.f32 %v1843, %v1845
      %v1847 = vadd.f32 %v1843, %v1846
      %vm1848 = vweird.f32 %v1843
      %v1849 = vsel %vm1848, %v1843, %v1847
      %s1850 = vtos %v1849
      %s1851 = smul.f32 %s1842, %s1850
      %v1852 = vstv %s1851
      %v1853 = vsub.f32 %v1833, %v1852
      %v1854 = vmul.f32 %v1853, %v1853
      %1855 = vadd.xlane.f32.xlu0 %v1854
      %v1856 = vpop.xlane.xlu0 %1855
      %v1857 = vrot.slane %v1856, 4
      %v1858 = vadd.f32 %v1856, %v1857
      %v1859 = vrot.slane %v1858, 2
      %v1860 = vadd.f32 %v1858, %v1859
      %v1861 = vrot.slane %v1860, 1
      %v1862 = vadd.f32 %v1860, %v1861
      %s1863 = vtos %v1862
      %v1864 = vrcp.pop 1024.0
      %v1865 = vmul.f32 1024.0, %v1864
      %v1866 = vsub.f32 1.0, %v1865
      %v1867 = vmul.f32 %v1864, %v1866
      %v1868 = vadd.f32 %v1864, %v1867
      %vm1869 = vweird.f32 %v1864
      %v1870 = vsel %vm1869, %v1864, %v1868
      %s1871 = vtos %v1870
      %s1872 = smul.f32 %s1863, %s1871
      %s1873 = sadd.f32 %s1872, 1e-05
      %v1874 = vstv %s1873
      %v1875 = vrsqrt.pop %v1874
      %v1876 = vmul.f32 %v1875, %v1874
      %v1877 = vmul.f32 %v1876, %v1875
      %v1878 = vmul.f32 0.5, %v1877
      %v1879 = vsub.f32 1.5, %v1878
      %v1880 = vmul.f32 %v1875, %v1879
      %vm1881 = vweird.f32 %v1874
      %vm1882 = vweird.f32 %v1875
      %vm1883 = vmor %vm1881, %vm1882
      %v1884 = vsel %vm1883, %v1875, %v1880
      %s1885 = vtos %v1884
      %v1886 = vstv %s1885
      %v1887 = vmul.f32 %v1853, %v1886
      %v1888 = vld [vmem:[%s8 + $0x1] sm:$0x1]
      %v1889 = vperm.slane %v1888, 0
      %v1890 = vmul.f32 %v1887, %v1889
      %v1891 = vld [vmem:[%s8 + $0x2] sm:$0x1]
      %v1892 = vperm.slane %v1891, 0
      %v1893 = vadd.f32 %v1890, %v1892
      %v1894 = vmax.f32 %v1893, 0.0
      %vm1895 = vcmask 64512
      %v1896 = vsel %vm1895, %v1475, 0
      %1898 = vmatpush.msra.mxu0 0.0
      %1899 = vmatpush.msra.mxu0 0.0
      %1900 = vmatpush.msra.mxu0 0.0
      %1901 = vmatpush.msra.mxu0 0.0
      %1902 = vmatpush.msra.mxu0 0.0
      %1903 = vmatpush.msra.mxu0 0.0
      %1904 = vmatpush.msra.mxu0 0.0
      %1905 = vmatpush.msra.mxu0 0.0
      %1906 = vmatpush.msra.mxu0 0.0
      %1907 = vmatpush.msra.mxu0 0.0
      %1908 = vmatpush.msra.mxu0 0.0
      %1909 = vmatpush.msra.mxu0 0.0
      %1910 = vmatpush.msra.mxu0 0.0
      %1911 = vmatpush.msra.mxu0 0.0
      %1912 = vmatpush.msra.mxu0 0.0
      %1913 = vmatpush.msra.mxu0 %v1894
      %1914 = vmatmul.f32.gmra.mxu0 %v1896
      %v1915 = vpop.f32.mrf.mxu0
      %v1916 = vadd.f32 0.0, %v1915
      %1917 = vdwg.mxu0
      %v1918 = vld [vmem:[%s9] sm:$0xff]
      %v1919 = vld [vmem:[%s9 + $0x8] sm:$0xff]
      %v1920 = vld [vmem:[%s9 + $0x10] sm:$0xff]
      %v1921 = vld [vmem:[%s9 + $0x18] sm:$0xff]
      %v1922 = vld [vmem:[%s9 + $0x20] sm:$0xff]
      %v1923 = vld [vmem:[%s9 + $0x28] sm:$0xff]
      %v1924 = vld [vmem:[%s9 + $0x30] sm:$0xff]
      %v1925 = vld [vmem:[%s9 + $0x38] sm:$0xff]
      %v1926 = vld [vmem:[%s9 + $0x40] sm:$0xff]
      %v1927 = vld [vmem:[%s9 + $0x48] sm:$0xff]
      %v1928 = vld [vmem:[%s9 + $0x50] sm:$0xff]
      %v1929 = vld [vmem:[%s9 + $0x58] sm:$0xff]
      %v1930 = vld [vmem:[%s9 + $0x60] sm:$0xff]
      %v1931 = vld [vmem:[%s9 + $0x68] sm:$0xff]
      %v1932 = vld [vmem:[%s9 + $0x70] sm:$0xff]
      %v1933 = vld [vmem:[%s9 + $0x78] sm:$0xff]
      %v1934 = vsel %vm1895, %v1553, 0
      %1936 = vmatpush.msra.mxu0 0.0
      %1937 = vmatpush.msra.mxu0 0.0
      %1938 = vmatpush.msra.mxu0 0.0
      %1939 = vmatpush.msra.mxu0 0.0
      %1940 = vmatpush.msra.mxu0 0.0
      %1941 = vmatpush.msra.mxu0 0.0
      %1942 = vmatpush.msra.mxu0 0.0
      %1943 = vmatpush.msra.mxu0 0.0
      %1944 = vmatpush.msra.mxu0 0.0
      %1945 = vmatpush.msra.mxu0 0.0
      %1946 = vmatpush.msra.mxu0 0.0
      %1947 = vmatpush.msra.mxu0 0.0
      %1948 = vmatpush.msra.mxu0 0.0
      %1949 = vmatpush.msra.mxu0 0.0
      %1950 = vmatpush.msra.mxu0 0.0
      %1951 = vmatpush.msra.mxu0 %v1894
      %1952 = vmatmul.f32.gmra.mxu0 %v1934
      %v1953 = vpop.f32.mrf.mxu0
      %v1954 = vadd.f32 0.0, %v1953
      %1955 = vdwg.mxu0
      %s1956 = scalar_lea.vmem %s9, 128
      %v1957 = vld [vmem:[%s1956] sm:$0xff]
      %v1958 = vld [vmem:[%s1956 + $0x8] sm:$0xff]
      %v1959 = vld [vmem:[%s1956 + $0x10] sm:$0xff]
      %v1960 = vld [vmem:[%s1956 + $0x18] sm:$0xff]
      %v1961 = vld [vmem:[%s1956 + $0x20] sm:$0xff]
      %v1962 = vld [vmem:[%s1956 + $0x28] sm:$0xff]
      %v1963 = vld [vmem:[%s1956 + $0x30] sm:$0xff]
      %v1964 = vld [vmem:[%s1956 + $0x38] sm:$0xff]
      %v1965 = vld [vmem:[%s1956 + $0x40] sm:$0xff]
      %v1966 = vld [vmem:[%s1956 + $0x48] sm:$0xff]
      %v1967 = vld [vmem:[%s1956 + $0x50] sm:$0xff]
      %v1968 = vld [vmem:[%s1956 + $0x58] sm:$0xff]
      %v1969 = vld [vmem:[%s1956 + $0x60] sm:$0xff]
      %v1970 = vld [vmem:[%s1956 + $0x68] sm:$0xff]
      %v1971 = vld [vmem:[%s1956 + $0x70] sm:$0xff]
      %v1972 = vld [vmem:[%s1956 + $0x78] sm:$0xff]
      %1973 = vmatpush.msra.mxu0 %v1972
      %1974 = vmatpush.msra.mxu0 %v1971
      %1975 = vmatpush.msra.mxu0 %v1970
      %1976 = vmatpush.msra.mxu0 %v1969
      %1977 = vmatpush.msra.mxu0 %v1968
      %1978 = vmatpush.msra.mxu0 %v1967
      %1979 = vmatpush.msra.mxu0 %v1966
      %1980 = vmatpush.msra.mxu0 %v1965
      %1981 = vmatpush.msra.mxu0 %v1964
      %1982 = vmatpush.msra.mxu0 %v1963
      %1983 = vmatpush.msra.mxu0 %v1962
      %1984 = vmatpush.msra.mxu0 %v1961
      %1985 = vmatpush.msra.mxu0 %v1960
      %1986 = vmatpush.msra.mxu0 %v1959
      %1987 = vmatpush.msra.mxu0 %v1958
      %1988 = vmatpush.msra.mxu0 %v1957
      %1989 = vmatmul.f32.gmra.mxu0 %v1954
      %v1990 = vpop.f32.mrf.mxu0
      %v1991 = vadd.f32 0.0, %v1990
      %1992 = vdwg.mxu0
      %1993 = vmatpush.msra.mxu0 %v1933
      %1994 = vmatpush.msra.mxu0 %v1932
      %1995 = vmatpush.msra.mxu0 %v1931
      %1996 = vmatpush.msra.mxu0 %v1930
      %1997 = vmatpush.msra.mxu0 %v1929
      %1998 = vmatpush.msra.mxu0 %v1928
      %1999 = vmatpush.msra.mxu0 %v1927
      %2000 = vmatpush.msra.mxu0 %v1926
      %2001 = vmatpush.msra.mxu0 %v1925
      %2002 = vmatpush.msra.mxu0 %v1924
      %2003 = vmatpush.msra.mxu0 %v1923
      %2004 = vmatpush.msra.mxu0 %v1922
      %2005 = vmatpush.msra.mxu0 %v1921
      %2006 = vmatpush.msra.mxu0 %v1920
      %2007 = vmatpush.msra.mxu0 %v1919
      %2008 = vmatpush.msra.mxu0 %v1918
      %2009 = vmatmul.f32.gmra.mxu0 %v1916
      %v2010 = vpop.f32.mrf.mxu0
      %v2011 = vadd.f32 %v1991, %v2010
      %2012 = vdwg.mxu0
      %v2013 = vsel %vm1895, %v1713, 0
      %2015 = vmatpush.msra.mxu0 0.0
      %2016 = vmatpush.msra.mxu0 0.0
      %2017 = vmatpush.msra.mxu0 0.0
      %2018 = vmatpush.msra.mxu0 0.0
      %2019 = vmatpush.msra.mxu0 0.0
      %2020 = vmatpush.msra.mxu0 0.0
      %2021 = vmatpush.msra.mxu0 0.0
      %2022 = vmatpush.msra.mxu0 0.0
      %2023 = vmatpush.msra.mxu0 0.0
      %2024 = vmatpush.msra.mxu0 0.0
      %2025 = vmatpush.msra.mxu0 0.0
      %2026 = vmatpush.msra.mxu0 0.0
      %2027 = vmatpush.msra.mxu0 0.0
      %2028 = vmatpush.msra.mxu0 0.0
      %2029 = vmatpush.msra.mxu0 0.0
      %2030 = vmatpush.msra.mxu0 %v1894
      %2031 = vmatmul.f32.gmra.mxu0 %v2013
      %v2032 = vpop.f32.mrf.mxu0
      %v2033 = vadd.f32 0.0, %v2032
      %2034 = vdwg.mxu0
      %s2035 = scalar_lea.vmem %s9, 256
      %v2036 = vld [vmem:[%s2035] sm:$0xff]
      %v2037 = vld [vmem:[%s2035 + $0x8] sm:$0xff]
      %v2038 = vld [vmem:[%s2035 + $0x10] sm:$0xff]
      %v2039 = vld [vmem:[%s2035 + $0x18] sm:$0xff]
      %v2040 = vld [vmem:[%s2035 + $0x20] sm:$0xff]
      %v2041 = vld [vmem:[%s2035 + $0x28] sm:$0xff]
      %v2042 = vld [vmem:[%s2035 + $0x30] sm:$0xff]
      %v2043 = vld [vmem:[%s2035 + $0x38] sm:$0xff]
      %v2044 = vld [vmem:[%s2035 + $0x40] sm:$0xff]
      %v2045 = vld [vmem:[%s2035 + $0x48] sm:$0xff]
      %v2046 = vld [vmem:[%s2035 + $0x50] sm:$0xff]
      %v2047 = vld [vmem:[%s2035 + $0x58] sm:$0xff]
      %v2048 = vld [vmem:[%s2035 + $0x60] sm:$0xff]
      %v2049 = vld [vmem:[%s2035 + $0x68] sm:$0xff]
      %v2050 = vld [vmem:[%s2035 + $0x70] sm:$0xff]
      %v2051 = vld [vmem:[%s2035 + $0x78] sm:$0xff]
      %2052 = vmatpush.msra.mxu0 %v2051
      %2053 = vmatpush.msra.mxu0 %v2050
      %2054 = vmatpush.msra.mxu0 %v2049
      %2055 = vmatpush.msra.mxu0 %v2048
      %2056 = vmatpush.msra.mxu0 %v2047
      %2057 = vmatpush.msra.mxu0 %v2046
      %2058 = vmatpush.msra.mxu0 %v2045
      %2059 = vmatpush.msra.mxu0 %v2044
      %2060 = vmatpush.msra.mxu0 %v2043
      %2061 = vmatpush.msra.mxu0 %v2042
      %2062 = vmatpush.msra.mxu0 %v2041
      %2063 = vmatpush.msra.mxu0 %v2040
      %2064 = vmatpush.msra.mxu0 %v2039
      %2065 = vmatpush.msra.mxu0 %v2038
      %2066 = vmatpush.msra.mxu0 %v2037
      %2067 = vmatpush.msra.mxu0 %v2036
      %2068 = vmatmul.f32.gmra.mxu0 %v2033
      %v2069 = vpop.f32.mrf.mxu0
      %v2070 = vadd.f32 0.0, %v2069
      %2071 = vdwg.mxu0
      %v2072 = vadd.f32 %v2011, %v2070
      %v2073 = vld [vmem:[%s10] sm:$0x1]
      %v2074 = vperm.slane %v2073, 0
      %v2075 = vadd.f32 %v2072, %v2074
      %vm2076 = vcmask 519168
      %v2077 = vsel %vm2076, %v2075, 0.0
      %2078 = vadd.xlane.f32.xlu0 %v2077
      %v2079 = vpop.xlane.xlu0 %2078
      %v2080 = vrot.slane %v2079, 4
      %v2081 = vadd.f32 %v2079, %v2080
      %v2082 = vrot.slane %v2081, 2
      %v2083 = vadd.f32 %v2081, %v2082
      %v2084 = vrot.slane %v2083, 1
      %v2085 = vadd.f32 %v2083, %v2084
      %s2086 = vtos %v2085
      %v2087 = vrcp.pop 256.0
      %v2088 = vmul.f32 256.0, %v2087
      %v2089 = vsub.f32 1.0, %v2088
      %v2090 = vmul.f32 %v2087, %v2089
      %v2091 = vadd.f32 %v2087, %v2090
      %vm2092 = vweird.f32 %v2087
      %v2093 = vsel %vm2092, %v2087, %v2091
      %s2094 = vtos %v2093
      %s2095 = smul.f32 %s2086, %s2094
      %v2096 = vstv %s2095
      %v2097 = vsub.f32 %v2075, %v2096
      %v2098 = vmul.f32 %v2097, %v2097
      %v2099 = vsel %vm2076, %v2098, 0.0
      %2100 = vadd.xlane.f32.xlu0 %v2099
      %v2101 = vpop.xlane.xlu0 %2100
      %v2102 = vrot.slane %v2101, 4
      %v2103 = vadd.f32 %v2101, %v2102
      %v2104 = vrot.slane %v2103, 2
      %v2105 = vadd.f32 %v2103, %v2104
      %v2106 = vrot.slane %v2105, 1
      %v2107 = vadd.f32 %v2105, %v2106
      %s2108 = vtos %v2107
      %v2109 = vrcp.pop 256.0
      %v2110 = vmul.f32 256.0, %v2109
      %v2111 = vsub.f32 1.0, %v2110
      %v2112 = vmul.f32 %v2109, %v2111
      %v2113 = vadd.f32 %v2109, %v2112
      %vm2114 = vweird.f32 %v2109
      %v2115 = vsel %vm2114, %v2109, %v2113
      %s2116 = vtos %v2115
      %s2117 = smul.f32 %s2108, %s2116
      %s2118 = sadd.f32 %s2117, 1e-05
      %v2119 = vstv %s2118
      %v2120 = vrsqrt.pop %v2119
      %v2121 = vmul.f32 %v2120, %v2119
      %v2122 = vmul.f32 %v2121, %v2120
      %v2123 = vmul.f32 0.5, %v2122
      %v2124 = vsub.f32 1.5, %v2123
      %v2125 = vmul.f32 %v2120, %v2124
      %vm2126 = vweird.f32 %v2119
      %vm2127 = vweird.f32 %v2120
      %vm2128 = vmor %vm2126, %vm2127
      %v2129 = vsel %vm2128, %v2120, %v2125
      %s2130 = vtos %v2129
      %v2131 = vstv %s2130
      %v2132 = vmul.f32 %v2097, %v2131
      %v2133 = vld [vmem:[%s10 + $0x1] sm:$0x1]
      %v2134 = vperm.slane %v2133, 0
      %v2135 = vmul.f32 %v2132, %v2134
      %v2136 = vld [vmem:[%s10 + $0x2] sm:$0x1]
      %v2137 = vperm.slane %v2136, 0
      %v2138 = vadd.f32 %v2135, %v2137
      %v2139 = vmax.f32 %v2138, 0.0
      %v2140 = vld [vmem:[%s11] sm:$0xff]
      %v2141 = vld [vmem:[%s11 + $0x8] sm:$0xff]
      %v2143 = vsel %vm1895, %v2140, 0
      %v2146 = vsel %vm1895, %v2141, 0
      %2148 = vmatpush.msra.mxu0 0.0
      %2149 = vmatpush.msra.mxu0 0.0
      %2150 = vmatpush.msra.mxu0 0.0
      %2151 = vmatpush.msra.mxu0 0.0
      %2152 = vmatpush.msra.mxu0 0.0
      %2153 = vmatpush.msra.mxu0 0.0
      %2154 = vmatpush.msra.mxu0 0.0
      %2155 = vmatpush.msra.mxu0 0.0
      %2156 = vmatpush.msra.mxu0 0.0
      %2157 = vmatpush.msra.mxu0 0.0
      %2158 = vmatpush.msra.mxu0 0.0
      %2159 = vmatpush.msra.mxu0 0.0
      %2160 = vmatpush.msra.mxu0 0.0
      %2161 = vmatpush.msra.mxu0 0.0
      %2162 = vmatpush.msra.mxu0 0.0
      %2163 = vmatpush.msra.mxu0 %v1894
      %2164 = vmatmul.f32.gmra.mxu0 %v2143
      %v2165 = vpop.f32.mrf.mxu0
      %v2166 = vadd.f32 0.0, %v2165
      %2167 = vmatmul.f32.gmra.mxu0 %v2146
      %v2168 = vpop.f32.mrf.mxu0
      %v2169 = vadd.f32 0.0, %v2168
      %2170 = vdwg.mxu0
      %v2171 = vld [vmem:[%s12] sm:$0xff]
      %v2172 = vld [vmem:[%s12 + $0x8] sm:$0xff]
      %v2173 = vld [vmem:[%s12 + $0x10] sm:$0xff]
      %v2174 = vld [vmem:[%s12 + $0x18] sm:$0xff]
      %v2175 = vld [vmem:[%s12 + $0x20] sm:$0xff]
      %v2176 = vld [vmem:[%s12 + $0x28] sm:$0xff]
      %v2177 = vld [vmem:[%s12 + $0x30] sm:$0xff]
      %v2178 = vld [vmem:[%s12 + $0x38] sm:$0xff]
      %v2179 = vld [vmem:[%s12 + $0x40] sm:$0xff]
      %v2180 = vld [vmem:[%s12 + $0x48] sm:$0xff]
      %v2181 = vld [vmem:[%s12 + $0x50] sm:$0xff]
      %v2182 = vld [vmem:[%s12 + $0x58] sm:$0xff]
      %v2183 = vld [vmem:[%s12 + $0x60] sm:$0xff]
      %v2184 = vld [vmem:[%s12 + $0x68] sm:$0xff]
      %v2185 = vld [vmem:[%s12 + $0x70] sm:$0xff]
      %v2186 = vld [vmem:[%s12 + $0x78] sm:$0xff]
      %v2187 = vld [vmem:[%s12 + $0x80] sm:$0xff]
      %v2188 = vld [vmem:[%s12 + $0x88] sm:$0xff]
      %v2189 = vld [vmem:[%s12 + $0x90] sm:$0xff]
      %v2190 = vld [vmem:[%s12 + $0x98] sm:$0xff]
      %v2191 = vld [vmem:[%s12 + $0xa0] sm:$0xff]
      %v2192 = vld [vmem:[%s12 + $0xa8] sm:$0xff]
      %v2193 = vld [vmem:[%s12 + $0xb0] sm:$0xff]
      %v2194 = vld [vmem:[%s12 + $0xb8] sm:$0xff]
      %v2195 = vld [vmem:[%s12 + $0xc0] sm:$0xff]
      %v2196 = vld [vmem:[%s12 + $0xc8] sm:$0xff]
      %v2197 = vld [vmem:[%s12 + $0xd0] sm:$0xff]
      %v2198 = vld [vmem:[%s12 + $0xd8] sm:$0xff]
      %v2199 = vld [vmem:[%s12 + $0xe0] sm:$0xff]
      %v2200 = vld [vmem:[%s12 + $0xe8] sm:$0xff]
      %v2201 = vld [vmem:[%s12 + $0xf0] sm:$0xff]
      %v2202 = vld [vmem:[%s12 + $0xf8] sm:$0xff]
      %2203 = vmatpush.msra.mxu0 %v2201
      %2204 = vmatpush.msra.mxu0 %v2199
      %2205 = vmatpush.msra.mxu0 %v2197
      %2206 = vmatpush.msra.mxu0 %v2195
      %2207 = vmatpush.msra.mxu0 %v2193
      %2208 = vmatpush.msra.mxu0 %v2191
      %2209 = vmatpush.msra.mxu0 %v2189
      %2210 = vmatpush.msra.mxu0 %v2187
      %2211 = vmatpush.msra.mxu0 %v2185
      %2212 = vmatpush.msra.mxu0 %v2183
      %2213 = vmatpush.msra.mxu0 %v2181
      %2214 = vmatpush.msra.mxu0 %v2179
      %2215 = vmatpush.msra.mxu0 %v2177
      %2216 = vmatpush.msra.mxu0 %v2175
      %2217 = vmatpush.msra.mxu0 %v2173
      %2218 = vmatpush.msra.mxu0 %v2171
      %2219 = vmatmul.f32.gmra.mxu0 %v2166
      %v2220 = vpop.f32.mrf.mxu0
      %v2221 = vadd.f32 0.0, %v2220
      %2222 = vmatmul.f32.gmra.mxu0 %v2169
      %v2223 = vpop.f32.mrf.mxu0
      %v2224 = vadd.f32 0.0, %v2223
      %2225 = vdwg.mxu0
      %2226 = vmatpush.msra.mxu0 %v2202
      %2227 = vmatpush.msra.mxu0 %v2200
      %2228 = vmatpush.msra.mxu0 %v2198
      %2229 = vmatpush.msra.mxu0 %v2196
      %2230 = vmatpush.msra.mxu0 %v2194
      %2231 = vmatpush.msra.mxu0 %v2192
      %2232 = vmatpush.msra.mxu0 %v2190
      %2233 = vmatpush.msra.mxu0 %v2188
      %2234 = vmatpush.msra.mxu0 %v2186
      %2235 = vmatpush.msra.mxu0 %v2184
      %2236 = vmatpush.msra.mxu0 %v2182
      %2237 = vmatpush.msra.mxu0 %v2180
      %2238 = vmatpush.msra.mxu0 %v2178
      %2239 = vmatpush.msra.mxu0 %v2176
      %2240 = vmatpush.msra.mxu0 %v2174
      %2241 = vmatpush.msra.mxu0 %v2172
      %2242 = vmatmul.f32.gmra.mxu0 %v2166
      %v2243 = vpop.f32.mrf.mxu0
      %v2244 = vadd.f32 0.0, %v2243
      %2245 = vmatmul.f32.gmra.mxu0 %v2169
      %v2246 = vpop.f32.mrf.mxu0
      %v2247 = vadd.f32 0.0, %v2246
      %2248 = vdwg.mxu0
      %v2249 = vld [vmem:[%s13] sm:$0xff]
      %v2250 = vld [vmem:[%s13 + $0x8] sm:$0xff]
      %vm2251 = vcmask 31744
      %v2253 = vsel %vm2251, %v2249, 0
      %v2256 = vsel %vm2251, %v2250, 0
      %vm2258 = vcmask 1043456
      %v2260 = vsel %vm2258, %v2139, 0
      %2262 = vmatpush.msra.mxu0 0.0
      %2263 = vmatpush.msra.mxu0 0.0
      %2264 = vmatpush.msra.mxu0 0.0
      %2265 = vmatpush.msra.mxu0 0.0
      %2266 = vmatpush.msra.mxu0 0.0
      %2267 = vmatpush.msra.mxu0 0.0
      %2268 = vmatpush.msra.mxu0 0.0
      %2269 = vmatpush.msra.mxu0 0.0
      %2270 = vmatpush.msra.mxu0 0.0
      %2271 = vmatpush.msra.mxu0 0.0
      %2272 = vmatpush.msra.mxu0 0.0
      %2273 = vmatpush.msra.mxu0 0.0
      %2274 = vmatpush.msra.mxu0 0.0
      %2275 = vmatpush.msra.mxu0 0.0
      %2276 = vmatpush.msra.mxu0 0.0
      %2277 = vmatpush.msra.mxu0 %v2260
      %2278 = vmatmul.f32.gmra.mxu0 %v2253
      %v2279 = vpop.f32.mrf.mxu0
      %v2280 = vadd.f32 0.0, %v2279
      %2281 = vmatmul.f32.gmra.mxu0 %v2256
      %v2282 = vpop.f32.mrf.mxu0
      %v2283 = vadd.f32 0.0, %v2282
      %2284 = vdwg.mxu0
      %v2285 = vld [vmem:[%s14] sm:$0xff]
      %v2286 = vld [vmem:[%s14 + $0x8] sm:$0xff]
      %v2287 = vld [vmem:[%s14 + $0x10] sm:$0xff]
      %v2288 = vld [vmem:[%s14 + $0x18] sm:$0xff]
      %v2289 = vld [vmem:[%s14 + $0x20] sm:$0xff]
      %v2290 = vld [vmem:[%s14 + $0x28] sm:$0xff]
      %v2291 = vld [vmem:[%s14 + $0x30] sm:$0xff]
      %v2292 = vld [vmem:[%s14 + $0x38] sm:$0xff]
      %v2293 = vld [vmem:[%s14 + $0x40] sm:$0xff]
      %v2294 = vld [vmem:[%s14 + $0x48] sm:$0xff]
      %v2295 = vld [vmem:[%s14 + $0x50] sm:$0xff]
      %v2296 = vld [vmem:[%s14 + $0x58] sm:$0xff]
      %v2297 = vld [vmem:[%s14 + $0x60] sm:$0xff]
      %v2298 = vld [vmem:[%s14 + $0x68] sm:$0xff]
      %v2299 = vld [vmem:[%s14 + $0x70] sm:$0xff]
      %v2300 = vld [vmem:[%s14 + $0x78] sm:$0xff]
      %v2302 = vsel %vm726, %v2280, 0
      %v2305 = vsel %vm726, %v2283, 0
      %2307 = vmatpush.msra.mxu0 0.0
      %2308 = vmatpush.msra.mxu0 0.0
      %2309 = vmatpush.msra.mxu0 0.0
      %2310 = vmatpush.msra.mxu0 0.0
      %2311 = vmatpush.msra.mxu0 0.0
      %2312 = vmatpush.msra.mxu0 0.0
      %2313 = vmatpush.msra.mxu0 0.0
      %2314 = vmatpush.msra.mxu0 0.0
      %2315 = vmatpush.msra.mxu0 %v2299
      %2316 = vmatpush.msra.mxu0 %v2297
      %2317 = vmatpush.msra.mxu0 %v2295
      %2318 = vmatpush.msra.mxu0 %v2293
      %2319 = vmatpush.msra.mxu0 %v2291
      %2320 = vmatpush.msra.mxu0 %v2289
      %2321 = vmatpush.msra.mxu0 %v2287
      %2322 = vmatpush.msra.mxu0 %v2285
      %2323 = vmatmul.f32.gmra.mxu0 %v2302
      %v2324 = vpop.f32.mrf.mxu0
      %v2325 = vadd.f32 0.0, %v2324
      %2326 = vmatmul.f32.gmra.mxu0 %v2305
      %v2327 = vpop.f32.mrf.mxu0
      %v2328 = vadd.f32 0.0, %v2327
      %2329 = vdwg.mxu0
      %2330 = vmatpush.msra.mxu0 0.0
      %2331 = vmatpush.msra.mxu0 0.0
      %2332 = vmatpush.msra.mxu0 0.0
      %2333 = vmatpush.msra.mxu0 0.0
      %2334 = vmatpush.msra.mxu0 0.0
      %2335 = vmatpush.msra.mxu0 0.0
      %2336 = vmatpush.msra.mxu0 0.0
      %2337 = vmatpush.msra.mxu0 0.0
      %2338 = vmatpush.msra.mxu0 %v2300
      %2339 = vmatpush.msra.mxu0 %v2298
      %2340 = vmatpush.msra.mxu0 %v2296
      %2341 = vmatpush.msra.mxu0 %v2294
      %2342 = vmatpush.msra.mxu0 %v2292
      %2343 = vmatpush.msra.mxu0 %v2290
      %2344 = vmatpush.msra.mxu0 %v2288
      %2345 = vmatpush.msra.mxu0 %v2286
      %2346 = vmatmul.f32.gmra.mxu0 %v2302
      %v2347 = vpop.f32.mrf.mxu0
      %v2348 = vadd.f32 0.0, %v2347
      %2349 = vmatmul.f32.gmra.mxu0 %v2305
      %v2350 = vpop.f32.mrf.mxu0
      %v2351 = vadd.f32 0.0, %v2350
      %2352 = vdwg.mxu0
      %v2353 = vadd.f32 %v1467, %v2221
      %v2354 = vadd.f32 %v1468, %v2244
      %v2355 = vadd.f32 %v1469, %v2224
      %v2356 = vadd.f32 %v1470, %v2247
      %v2357 = vadd.f32 %v2353, %v2325
      %v2358 = vadd.f32 %v2354, %v2348
      %v2359 = vadd.f32 %v2355, %v2328
      %v2360 = vadd.f32 %v2356, %v2351
      %2361 = vst [vmem:[%s494] sm:$0xff] %v2357
      %2362 = vst [vmem:[%s494 + $0x8] sm:$0xff] %v2358
      %2363 = vst [vmem:[%s494 + $0x10] sm:$0xff] %v2359
      %2364 = vst [vmem:[%s494 + $0x18] sm:$0xff] %v2360
      %p2365 = scmp.lt.s32.totalorder %s26, 1
      %s2366 = scalar_select %p2365, %s26, 1
      %s2367 = smul.addr %s2366, 4
      %s2368 = smul.addr %s2367, 8
      %s2369 = scalar_lea.vmem %s15, %s2368
      // Predicated region
      $region81: #{custom_model_forward.1} parent=79 // pred_check
        %p2370 = pneg %p364
      $region82: #{custom_model_forward.1} parent=79 // pred_check_branch
        %2372 = sbr.rel (%p2370) target = $region84
      $region83: #{custom_model_forward.1} parent=79 // pred_region
        _
      $region84: #{custom_model_forward.1} parent=79 // pred_fallthru
        _
    $region80: #{custom_model_forward.1} parent=5 // pred_fallthru
      _
    %p2373 = scmp.le.s32.totalorder 2, %s21
    // Predicated region
    $region85: #{custom_model_forward.1} parent=5 // pred_check
      %p2374 = pneg %p2373
    $region86: #{custom_model_forward.1} parent=5 // pred_check_branch
      %2376 = sbr.rel (%p2374) target = $region88
    $region87: #{custom_model_forward.1} parent=5 // pred_region
      %s2377 = ssub.s32 %s21, 2
      // Predicated region
      $region89: #{custom_model_forward.1} parent=87 // pred_check
        %p2378 = pneg %p370
      $region90: #{custom_model_forward.1} parent=87 // pred_check_branch
        %2380 = sbr.rel (%p2378) target = $region92
      $region91: #{custom_model_forward.1} parent=87 // pred_region
        %p2381 = scmp.lt.s32.totalorder %s27, 1
        %s2382 = scalar_select %p2381, %s27, 1
        %s2383 = smul.addr %s2382, 4
        %s2384 = smul.addr %s2383, 8
        %s2385 = scalar_lea.vmem %s15, %s2384
      $region92: #{custom_model_forward.1} parent=87 // pred_fallthru
        _
    $region88: #{custom_model_forward.1} parent=5 // pred_fallthru
      _
  $region6: #{custom_model_forward.1} parent=0 // loop_footer
    %s25 = sadd.s32 1, %s21
  $region7: #{custom_model_forward.1} parent=0 // loop_footer_branch
    %20 = sbr.rel target = $region3
  $region8: #{custom_model_forward.1} parent=0 // loop_exit
    _

</llo_original>
